<compile_context>
chip_gen: v5e
topology: v5e:2x2
jax: 0.10.0
libtpu: 0.0.40
codegen_flags: <defaults>
</compile_context>

<pallas_src>
import jax
import jax.numpy as jnp
from jax.experimental import pallas as pl
from jax.experimental.pallas import tpu as pltpu

INPUT_SIZE = 28 * 28      # 784
LATENT_SIZE = 20
NUM_CLASSES = 10
HIDDEN_UNITS = 400

MULV_PAD = 128            # lane-dense padded width of the fused [mu | logvar] slab
WC_PAD = 1024             # fused class-projection width: [w1c | 0 | w3c | 0]
WC_FC3_OFF = 512          # lane-aligned start of the fc3 class projection


def _round_up(n, m):
    return (n + m - 1) // m * m


def cvae_kernel(x_ref, c_ref, eps_ref,
                w1x_ref, wc_ref, b1_ref,
                w_mulv_ref, b_mulv_ref,
                w3z_ref, b3_ref,
                w4_ref, b4_ref,
                xhat_ref, mulv_ref):
    # In-kernel cast keeps the wrapper free of an extra HBM->HBM convert op.
    x = x_ref[...].astype(jnp.bfloat16)   # (TB, 784)
    c = c_ref[...]                         # (TB, 10)   f32 one-hot
    eps = eps_ref[...]                     # (TB, 20)   f32

    # One fused matmul gives the class contribution for both fc1 and fc3.
    c_proj = jnp.dot(c, wc_ref[...], preferred_element_type=jnp.float32)   # (TB, 1024)
    c1 = c_proj[:, :HIDDEN_UNITS]
    c3 = c_proj[:, WC_FC3_OFF:WC_FC3_OFF + HIDDEN_UNITS]

    # recognition_model: h1 = relu(fc1(cat([x, c], 1)))
    h1 = jnp.dot(x, w1x_ref[...], preferred_element_type=jnp.float32) + c1 + b1_ref[...]
    h1 = jnp.maximum(h1, 0.0).astype(jnp.bfloat16)

    # fused fc21|fc22 projection, lane-dense padded to 128 columns
    mulv = jnp.dot(h1, w_mulv_ref[...], preferred_element_type=jnp.float32) + b_mulv_ref[...]
    mulv_ref[...] = mulv                                  # lane-dense store

    mu = mulv[:, :LATENT_SIZE]
    logvar = mulv[:, LATENT_SIZE:2 * LATENT_SIZE]

    # reparametrize: z = eps * exp(0.5 * logvar) + mu   (f32 elementwise, exp on EUP)
    z = eps * jnp.exp(0.5 * logvar) + mu

    # generation_model: x_hat = sigmoid(fc4(relu(fc3(cat([z, c], 1)))))
    h3 = jnp.dot(z, w3z_ref[...], preferred_element_type=jnp.float32) + c3 + b3_ref[...]
    h3 = jnp.maximum(h3, 0.0).astype(jnp.bfloat16)

    logits = jnp.dot(h3, w4_ref[...], preferred_element_type=jnp.float32) + b4_ref[...]
    # sigmoid via EUP exp + approx reciprocal (keeps the divide off the VALU)
    xhat_ref[...] = pl.reciprocal(1.0 + jnp.exp(-logits), approx=True)


def cvae_forward(x, c, eps, kparams, *, block_b=256):
    """Runs the CVAE forward pass with one gridded Pallas call.

    Returns (x_hat, mu, logvar) with shapes (B, 784), (B, 20), (B, 20).
    """
    B = x.shape[0]
    TB = min(block_b, _round_up(B, 8))      # batch tile (multiple of 8)
    Bp = _round_up(B, TB)

    xf = x.astype(jnp.float32)
    cf = c.astype(jnp.float32)
    ef = eps.astype(jnp.float32)
    if Bp != B:
        pad = Bp - B
        xf = jnp.pad(xf, ((0, pad), (0, 0)))
        cf = jnp.pad(cf, ((0, pad), (0, 0)))
        ef = jnp.pad(ef, ((0, pad), (0, 0)))

    weights = (kparams["w1x"], kparams["wc"], kparams["b1"],
               kparams["w_mulv"], kparams["b_mulv"],
               kparams["w3z"], kparams["b3"],
               kparams["w4"], kparams["b4"])

    def batch_spec(feat):
        return pl.BlockSpec((TB, feat), lambda i: (i, 0))

    def resident_spec(arr):
        # Same block every grid step -> weight stays resident in VMEM.
        return pl.BlockSpec(arr.shape, lambda i: (0, 0))

    in_specs = ([batch_spec(INPUT_SIZE), batch_spec(NUM_CLASSES), batch_spec(LATENT_SIZE)]
                + [resident_spec(w) for w in weights])
    out_specs = (batch_spec(INPUT_SIZE), batch_spec(MULV_PAD))
    out_shape = (jax.ShapeDtypeStruct((Bp, INPUT_SIZE), jnp.float32),
                 jax.ShapeDtypeStruct((Bp, MULV_PAD), jnp.float32))

    flops = 2 * Bp * (NUM_CLASSES * WC_PAD
                      + INPUT_SIZE * HIDDEN_UNITS
                      + HIDDEN_UNITS * MULV_PAD
                      + LATENT_SIZE * HIDDEN_UNITS
                      + HIDDEN_UNITS * INPUT_SIZE)
    weight_bytes = sum(int(w.size) * w.dtype.itemsize for w in weights)
    io_bytes = (int(xf.size) * 4 + int(cf.size) * 4 + int(ef.size) * 4
                + Bp * INPUT_SIZE * 4 + Bp * MULV_PAD * 4)
    cost = pl.CostEstimate(flops=flops,
                           transcendentals=Bp * (LATENT_SIZE + 2 * INPUT_SIZE),
                           bytes_accessed=weight_bytes + io_bytes)

    xhat_p, mulv_p = pl.pallas_call(
        cvae_kernel,
        grid=(Bp // TB,),
        in_specs=in_specs,
        out_specs=out_specs,
        out_shape=out_shape,
        compiler_params=pltpu.CompilerParams(
            dimension_semantics=("parallel",),
            vmem_limit_bytes=16 * 1024 * 1024),
        cost_estimate=cost,
    )(xf, cf, ef, *weights)

    x_hat = xhat_p[:B]
    mu = mulv_p[:B, :LATENT_SIZE]
    logvar = mulv_p[:B, LATENT_SIZE:2 * LATENT_SIZE]
    return x_hat, mu, logvar


def _linear_init(key, fan_in, fan_out):
    """PyTorch nn.Linear default init, W stored as (fan_in, fan_out)."""
    kw, kb = jax.random.split(key)
    bound = 1.0 / jnp.sqrt(float(fan_in))
    w = jax.random.uniform(kw, (fan_in, fan_out), jnp.float32, -bound, bound)
    b = jax.random.uniform(kb, (1, fan_out), jnp.float32, -bound, bound)
    return w, b


def init_params(key):
    """f32 'logical' parameters (transposed vs PyTorch so kernel does x @ W + b)."""
    k1, k21, k22, k3, k4 = jax.random.split(key, 5)
    w1, b1 = _linear_init(k1, INPUT_SIZE + NUM_CLASSES, HIDDEN_UNITS)
    w21, b21 = _linear_init(k21, HIDDEN_UNITS, LATENT_SIZE)
    w22, b22 = _linear_init(k22, HIDDEN_UNITS, LATENT_SIZE)
    w3, b3 = _linear_init(k3, LATENT_SIZE + NUM_CLASSES, HIDDEN_UNITS)
    w4, b4 = _linear_init(k4, HIDDEN_UNITS, INPUT_SIZE)
    return {
        "w1x": w1[:INPUT_SIZE], "w1c": w1[INPUT_SIZE:], "b1": b1,
        "w21": w21, "b21": b21, "w22": w22, "b22": b22,
        "w3z": w3[:LATENT_SIZE], "w3c": w3[LATENT_SIZE:], "b3": b3,
        "w4": w4, "b4": b4,
    }


def pack_params(p):
    """Kernel operand layout: bf16 large matmul weights, fused/padded small ones."""
    bf = jnp.bfloat16

    wc = jnp.zeros((NUM_CLASSES, WC_PAD), jnp.float32)
    wc = wc.at[:, :HIDDEN_UNITS].set(p["w1c"])
    wc = wc.at[:, WC_FC3_OFF:WC_FC3_OFF + HIDDEN_UNITS].set(p["w3c"])

    w_mulv = jnp.zeros((HIDDEN_UNITS, MULV_PAD), jnp.float32)
    w_mulv = w_mulv.at[:, :LATENT_SIZE].set(p["w21"])
    w_mulv = w_mulv.at[:, LATENT_SIZE:2 * LATENT_SIZE].set(p["w22"])
    b_mulv = jnp.zeros((1, MULV_PAD), jnp.float32)
    b_mulv = b_mulv.at[:, :LATENT_SIZE].set(p["b21"])
    b_mulv = b_mulv.at[:, LATENT_SIZE:2 * LATENT_SIZE].set(p["b22"])

    return {
        "w1x": p["w1x"].astype(bf),       # (784, 400) bf16
        "wc": wc,                         # (10, 1024) f32 (tiny; one-hot matmul)
        "b1": p["b1"],                    # (1, 400) f32
        "w_mulv": w_mulv.astype(bf),      # (400, 128) bf16, cols 0:20 mu, 20:40 logvar
        "b_mulv": b_mulv,                 # (1, 128) f32
        "w3z": p["w3z"],                  # (20, 400) f32 (tiny K)
        "b3": p["b3"],                    # (1, 400) f32
        "w4": p["w4"].astype(bf),         # (400, 784) bf16
        "b4": p["b4"],                    # (1, 784) f32
    }


def cvae_reference(x, c, eps, p):
    """Pure-JAX reference mimicking the kernel's mixed precision."""
    bf = jnp.bfloat16

    def mm_bf16(a, w):
        return jnp.dot(a.astype(bf), w.astype(bf), preferred_element_type=jnp.float32)

    h1 = jnp.maximum(mm_bf16(x, p["w1x"]) + c @ p["w1c"] + p["b1"], 0.0)
    mu = mm_bf16(h1, p["w21"]) + p["b21"]
    logvar = mm_bf16(h1, p["w22"]) + p["b22"]
    z = eps * jnp.exp(0.5 * logvar) + mu
    h3 = jnp.maximum(z @ p["w3z"] + c @ p["w3c"] + p["b3"], 0.0)
    x_hat = jax.nn.sigmoid(mm_bf16(h3, p["w4"]) + p["b4"])
    return x_hat, mu, logvar


if __name__ == "__main__":
    key = jax.random.PRNGKey(0)
    kp, kx, kc, keps = jax.random.split(key, 4)

    batch = 8
    params = init_params(kp)
    kparams = pack_params(params)

    x = jax.random.uniform(kx, (batch, INPUT_SIZE), jnp.float32)       # MNIST-like pixels
    labels = jax.random.randint(kc, (batch,), 0, NUM_CLASSES)
    c = jax.nn.one_hot(labels, NUM_CLASSES, dtype=jnp.float32)         # (batch, 10)
    # TODO(synk): PyTorch samples eps inside reparametrize; we pass it explicitly for determinism.
    eps = jax.random.normal(keps, (batch, LATENT_SIZE), jnp.float32)

    x_hat, mu, logvar = cvae_forward(x, c, eps, kparams)
    jax.block_until_ready((x_hat, mu, logvar))

    r_xhat, r_mu, r_logvar = cvae_reference(x, c, eps, params)
    assert x_hat.shape == (batch, INPUT_SIZE)
    assert mu.shape == (batch, LATENT_SIZE)
    assert logvar.shape == (batch, LATENT_SIZE)
    assert jnp.allclose(mu, r_mu, atol=2e-2, rtol=2e-2)
    assert jnp.allclose(logvar, r_logvar, atol=2e-2, rtol=2e-2)
    assert jnp.allclose(x_hat, r_xhat, atol=2e-2, rtol=2e-2)

    print("KERNEL_OK")
</pallas_src>

<mosaic_0001>
module attributes {stable_mosaic.version = 11 : i64} {
  func.func @cvae_kernel(%arg0: i32, %arg1: memref<8x784xf32, #tpu.memory_space<vmem>>, %arg2: memref<8x10xf32, #tpu.memory_space<vmem>>, %arg3: memref<8x20xf32, #tpu.memory_space<vmem>>, %arg4: memref<784x400xbf16, #tpu.memory_space<vmem>>, %arg5: memref<10x1024xf32, #tpu.memory_space<vmem>>, %arg6: memref<1x400xf32, #tpu.memory_space<vmem>>, %arg7: memref<400x128xbf16, #tpu.memory_space<vmem>>, %arg8: memref<1x128xf32, #tpu.memory_space<vmem>>, %arg9: memref<20x400xf32, #tpu.memory_space<vmem>>, %arg10: memref<1x400xf32, #tpu.memory_space<vmem>>, %arg11: memref<400x784xbf16, #tpu.memory_space<vmem>>, %arg12: memref<1x784xf32, #tpu.memory_space<vmem>>, %arg13: memref<8x784xf32, #tpu.memory_space<vmem>>, %arg14: memref<8x128xf32, #tpu.memory_space<vmem>>) attributes {dimension_semantics = [#tpu.dimension_semantics<parallel>], iteration_bounds = array<i64: 1>, scalar_prefetch = 0 : i64, scratch_operands = 0 : i64, tpu.core_type = #tpu.core_type<tc>, window_params = [{transform_indices = @transform_0, window_bounds = array<i64: 8, 784>}, {transform_indices = @transform_1, window_bounds = array<i64: 8, 10>}, {transform_indices = @transform_2, window_bounds = array<i64: 8, 20>}, {pipeline_mode = #tpu.pipeline_mode<synchronous>, transform_indices = @transform_3, window_bounds = array<i64: 784, 400>}, {pipeline_mode = #tpu.pipeline_mode<synchronous>, transform_indices = @transform_4, window_bounds = array<i64: 10, 1024>}, {pipeline_mode = #tpu.pipeline_mode<synchronous>, transform_indices = @transform_5, window_bounds = array<i64: 1, 400>}, {pipeline_mode = #tpu.pipeline_mode<synchronous>, transform_indices = @transform_6, window_bounds = array<i64: 400, 128>}, {pipeline_mode = #tpu.pipeline_mode<synchronous>, transform_indices = @transform_7, window_bounds = array<i64: 1, 128>}, {pipeline_mode = #tpu.pipeline_mode<synchronous>, transform_indices = @transform_8, window_bounds = array<i64: 20, 400>}, {pipeline_mode = #tpu.pipeline_mode<synchronous>, transform_indices = @transform_9, window_bounds = array<i64: 1, 400>}, {pipeline_mode = #tpu.pipeline_mode<synchronous>, transform_indices = @transform_10, window_bounds = array<i64: 400, 784>}, {pipeline_mode = #tpu.pipeline_mode<synchronous>, transform_indices = @transform_11, window_bounds = array<i64: 1, 784>}, {transform_indices = @transform_12, window_bounds = array<i64: 8, 784>}, {transform_indices = @transform_13, window_bounds = array<i64: 8, 128>}]} {
    %c0 = arith.constant 0 : index
    %c0_0 = arith.constant 0 : index
    %0 = vector.load %arg1[%c0, %c0_0] : memref<8x784xf32, #tpu.memory_space<vmem>>, vector<8x784xf32>
    %1 = arith.truncf %0 : vector<8x784xf32> to vector<8x784xbf16>
    %c0_1 = arith.constant 0 : index
    %c0_2 = arith.constant 0 : index
    %2 = vector.load %arg2[%c0_1, %c0_2] : memref<8x10xf32, #tpu.memory_space<vmem>>, vector<8x10xf32>
    %c0_3 = arith.constant 0 : index
    %c0_4 = arith.constant 0 : index
    %3 = vector.load %arg3[%c0_3, %c0_4] : memref<8x20xf32, #tpu.memory_space<vmem>>, vector<8x20xf32>
    %c0_5 = arith.constant 0 : index
    %c0_6 = arith.constant 0 : index
    %4 = vector.load %arg5[%c0_5, %c0_6] : memref<10x1024xf32, #tpu.memory_space<vmem>>, vector<10x1024xf32>
    %cst = arith.constant dense<0.000000e+00> : vector<8x1024xf32>
    %5 = tpu.matmul %2, %4, %cst {dimension_numbers = #tpu.dot_dimension_numbers<[1], [0], [0], [1], [0, 0, 1, 1], [], []>} : vector<8x10xf32>, vector<10x1024xf32>, vector<8x1024xf32> -> vector<8x1024xf32>
    %6 = vector.extract_strided_slice %5 {offsets = [0, 0], sizes = [8, 400], strides = [1, 1]} : vector<8x1024xf32> to vector<8x400xf32>
    %7 = vector.extract_strided_slice %5 {offsets = [0, 512], sizes = [8, 400], strides = [1, 1]} : vector<8x1024xf32> to vector<8x400xf32>
    %c0_7 = arith.constant 0 : index
    %c0_8 = arith.constant 0 : index
    %8 = vector.load %arg4[%c0_7, %c0_8] : memref<784x400xbf16, #tpu.memory_space<vmem>>, vector<784x400xbf16>
    %cst_9 = arith.constant dense<0.000000e+00> : vector<8x400xf32>
    %9 = tpu.matmul %1, %8, %cst_9 {dimension_numbers = #tpu.dot_dimension_numbers<[1], [0], [0], [1], [0, 0, 1, 1], [], []>} : vector<8x784xbf16>, vector<784x400xbf16>, vector<8x400xf32> -> vector<8x400xf32>
    %10 = arith.addf %9, %6 : vector<8x400xf32>
    %c0_10 = arith.constant 0 : index
    %c0_11 = arith.constant 0 : index
    %11 = vector.load %arg6[%c0_10, %c0_11] : memref<1x400xf32, #tpu.memory_space<vmem>>, vector<1x400xf32>
    %12 = vector.broadcast %11 : vector<1x400xf32> to vector<8x400xf32>
    %13 = arith.addf %10, %12 : vector<8x400xf32>
    %cst_12 = arith.constant 0.000000e+00 : f32
    %14 = vector.broadcast %cst_12 : f32 to vector<8x400xf32>
    %15 = arith.maximumf %13, %14 : vector<8x400xf32>
    %16 = arith.truncf %15 : vector<8x400xf32> to vector<8x400xbf16>
    %c0_13 = arith.constant 0 : index
    %c0_14 = arith.constant 0 : index
    %17 = vector.load %arg7[%c0_13, %c0_14] : memref<400x128xbf16, #tpu.memory_space<vmem>>, vector<400x128xbf16>
    %cst_15 = arith.constant dense<0.000000e+00> : vector<8x128xf32>
    %18 = tpu.matmul %16, %17, %cst_15 {dimension_numbers = #tpu.dot_dimension_numbers<[1], [0], [0], [1], [0, 0, 1, 1], [], []>} : vector<8x400xbf16>, vector<400x128xbf16>, vector<8x128xf32> -> vector<8x128xf32>
    %c0_16 = arith.constant 0 : index
    %c0_17 = arith.constant 0 : index
    %19 = vector.load %arg8[%c0_16, %c0_17] : memref<1x128xf32, #tpu.memory_space<vmem>>, vector<1x128xf32>
    %20 = vector.broadcast %19 : vector<1x128xf32> to vector<8x128xf32>
    %21 = arith.addf %18, %20 : vector<8x128xf32>
    %c0_18 = arith.constant 0 : index
    %c0_19 = arith.constant 0 : index
    %22 = vector.load %arg14[%c0_18, %c0_19] : memref<8x128xf32, #tpu.memory_space<vmem>>, vector<8x128xf32>
    tpu.vector_store %arg14[%c0_18, %c0_19], %21 {strides = array<i32>} : memref<8x128xf32, #tpu.memory_space<vmem>>, vector<8x128xf32>,
    %23 = vector.extract_strided_slice %21 {offsets = [0, 0], sizes = [8, 20], strides = [1, 1]} : vector<8x128xf32> to vector<8x20xf32>
    %24 = vector.extract_strided_slice %21 {offsets = [0, 20], sizes = [8, 20], strides = [1, 1]} : vector<8x128xf32> to vector<8x20xf32>
    %cst_20 = arith.constant 5.000000e-01 : f32
    %25 = vector.broadcast %cst_20 : f32 to vector<8x20xf32>
    %26 = arith.mulf %25, %24 : vector<8x20xf32>
    %27 = math.exp %26 : vector<8x20xf32>
    %28 = arith.mulf %3, %27 : vector<8x20xf32>
    %29 = arith.addf %28, %23 : vector<8x20xf32>
    %c0_21 = arith.constant 0 : index
    %c0_22 = arith.constant 0 : index
    %30 = vector.load %arg9[%c0_21, %c0_22] : memref<20x400xf32, #tpu.memory_space<vmem>>, vector<20x400xf32>
    %cst_23 = arith.constant dense<0.000000e+00> : vector<8x400xf32>
    %31 = tpu.matmul %29, %30, %cst_23 {dimension_numbers = #tpu.dot_dimension_numbers<[1], [0], [0], [1], [0, 0, 1, 1], [], []>} : vector<8x20xf32>, vector<20x400xf32>, vector<8x400xf32> -> vector<8x400xf32>
    %32 = arith.addf %31, %7 : vector<8x400xf32>
    %c0_24 = arith.constant 0 : index
    %c0_25 = arith.constant 0 : index
    %33 = vector.load %arg10[%c0_24, %c0_25] : memref<1x400xf32, #tpu.memory_space<vmem>>, vector<1x400xf32>
    %34 = vector.broadcast %33 : vector<1x400xf32> to vector<8x400xf32>
    %35 = arith.addf %32, %34 : vector<8x400xf32>
    %cst_26 = arith.constant 0.000000e+00 : f32
    %36 = vector.broadcast %cst_26 : f32 to vector<8x400xf32>
    %37 = arith.maximumf %35, %36 : vector<8x400xf32>
    %38 = arith.truncf %37 : vector<8x400xf32> to vector<8x400xbf16>
    %c0_27 = arith.constant 0 : index
    %c0_28 = arith.constant 0 : index
    %39 = vector.load %arg11[%c0_27, %c0_28] : memref<400x784xbf16, #tpu.memory_space<vmem>>, vector<400x784xbf16>
    %cst_29 = arith.constant dense<0.000000e+00> : vector<8x784xf32>
    %40 = tpu.matmul %38, %39, %cst_29 {dimension_numbers = #tpu.dot_dimension_numbers<[1], [0], [0], [1], [0, 0, 1, 1], [], []>} : vector<8x400xbf16>, vector<400x784xbf16>, vector<8x784xf32> -> vector<8x784xf32>
    %c0_30 = arith.constant 0 : index
    %c0_31 = arith.constant 0 : index
    %41 = vector.load %arg12[%c0_30, %c0_31] : memref<1x784xf32, #tpu.memory_space<vmem>>, vector<1x784xf32>
    %42 = vector.broadcast %41 : vector<1x784xf32> to vector<8x784xf32>
    %43 = arith.addf %40, %42 : vector<8x784xf32>
    %cst_32 = arith.constant 0.000000e+00 : f32
    %44 = vector.broadcast %cst_32 : f32 to vector<8x784xf32>
    %45 = arith.subf %44, %43 : vector<8x784xf32>
    %46 = math.exp %45 : vector<8x784xf32>
    %cst_33 = arith.constant 1.000000e+00 : f32
    %47 = vector.broadcast %cst_33 : f32 to vector<8x784xf32>
    %48 = arith.addf %47, %46 : vector<8x784xf32>
    %49 = tpu.reciprocal %48 {approx = true} : vector<8x784xf32> -> vector<8x784xf32>
    %c0_34 = arith.constant 0 : index
    %c0_35 = arith.constant 0 : index
    %50 = vector.load %arg13[%c0_34, %c0_35] : memref<8x784xf32, #tpu.memory_space<vmem>>, vector<8x784xf32>
    tpu.vector_store %arg13[%c0_34, %c0_35], %49 {strides = array<i32>} : memref<8x784xf32, #tpu.memory_space<vmem>>, vector<8x784xf32>,
    return
  }
  func.func @transform_0(%arg0: i32) -> (i32, i32) {
    %c0_i32 = arith.constant 0 : i32
    %c0_i32_0 = arith.constant 0 : i32
    return %arg0, %c0_i32 : i32, i32
  }
  func.func @transform_1(%arg0: i32) -> (i32, i32) {
    %c0_i32 = arith.constant 0 : i32
    %c0_i32_0 = arith.constant 0 : i32
    return %arg0, %c0_i32 : i32, i32
  }
  func.func @transform_2(%arg0: i32) -> (i32, i32) {
    %c0_i32 = arith.constant 0 : i32
    %c0_i32_0 = arith.constant 0 : i32
    return %arg0, %c0_i32 : i32, i32
  }
  func.func @transform_3(%arg0: i32) -> (i32, i32) {
    %c0_i32 = arith.constant 0 : i32
    %c0_i32_0 = arith.constant 0 : i32
    %c0_i32_1 = arith.constant 0 : i32
    return %c0_i32, %c0_i32_0 : i32, i32
  }
  func.func @transform_4(%arg0: i32) -> (i32, i32) {
    %c0_i32 = arith.constant 0 : i32
    %c0_i32_0 = arith.constant 0 : i32
    %c0_i32_1 = arith.constant 0 : i32
    return %c0_i32, %c0_i32_0 : i32, i32
  }
  func.func @transform_5(%arg0: i32) -> (i32, i32) {
    %c0_i32 = arith.constant 0 : i32
    %c0_i32_0 = arith.constant 0 : i32
    %c0_i32_1 = arith.constant 0 : i32
    return %c0_i32, %c0_i32_0 : i32, i32
  }
  func.func @transform_6(%arg0: i32) -> (i32, i32) {
    %c0_i32 = arith.constant 0 : i32
    %c0_i32_0 = arith.constant 0 : i32
    %c0_i32_1 = arith.constant 0 : i32
    return %c0_i32, %c0_i32_0 : i32, i32
  }
  func.func @transform_7(%arg0: i32) -> (i32, i32) {
    %c0_i32 = arith.constant 0 : i32
    %c0_i32_0 = arith.constant 0 : i32
    %c0_i32_1 = arith.constant 0 : i32
    return %c0_i32, %c0_i32_0 : i32, i32
  }
  func.func @transform_8(%arg0: i32) -> (i32, i32) {
    %c0_i32 = arith.constant 0 : i32
    %c0_i32_0 = arith.constant 0 : i32
    %c0_i32_1 = arith.constant 0 : i32
    return %c0_i32, %c0_i32_0 : i32, i32
  }
  func.func @transform_9(%arg0: i32) -> (i32, i32) {
    %c0_i32 = arith.constant 0 : i32
    %c0_i32_0 = arith.constant 0 : i32
    %c0_i32_1 = arith.constant 0 : i32
    return %c0_i32, %c0_i32_0 : i32, i32
  }
  func.func @transform_10(%arg0: i32) -> (i32, i32) {
    %c0_i32 = arith.constant 0 : i32
    %c0_i32_0 = arith.constant 0 : i32
    %c0_i32_1 = arith.constant 0 : i32
    return %c0_i32, %c0_i32_0 : i32, i32
  }
  func.func @transform_11(%arg0: i32) -> (i32, i32) {
    %c0_i32 = arith.constant 0 : i32
    %c0_i32_0 = arith.constant 0 : i32
    %c0_i32_1 = arith.constant 0 : i32
    return %c0_i32, %c0_i32_0 : i32, i32
  }
  func.func @transform_12(%arg0: i32) -> (i32, i32) {
    %c0_i32 = arith.constant 0 : i32
    %c0_i32_0 = arith.constant 0 : i32
    return %arg0, %c0_i32 : i32, i32
  }
  func.func @transform_13(%arg0: i32) -> (i32, i32) {
    %c0_i32 = arith.constant 0 : i32
    %c0_i32_0 = arith.constant 0 : i32
    return %arg0, %c0_i32 : i32, i32
  }
}

</mosaic_0001>

<llo_original>
// kernel: tpu_custom_call.1
$region0: #{tpu_custom_call.1}
  #allocation0 [shape = 'u32[]', space=smem, size = 0x4, offset = 0x4, fixed_abs, tag = 'smem constant byte address 0x4 - core index']
  #allocation1 [shape = 'u32[72,128]{1,0:T(1,128)}', space=vmem, size = 0x9000, scoped, tag = 'internal scratch']
  %s0 = inlined_call_operand.vmem [shape: f32[8,784], index: 0, kind: input, shape index: {}]
  %s1 = inlined_call_operand.vmem [shape: f32[8,10], index: 1, kind: input, shape index: {}]
  %s2 = inlined_call_operand.vmem [shape: f32[8,20], index: 2, kind: input, shape index: {}]
  %s3 = inlined_call_operand.vmem [shape: bf16[784,400], index: 3, kind: input, shape index: {}]
  %s4 = inlined_call_operand.vmem [shape: f32[10,1024], index: 4, kind: input, shape index: {}]
  %s5 = inlined_call_operand.vmem [shape: f32[1,400], index: 5, kind: input, shape index: {}]
  %s6 = inlined_call_operand.vmem [shape: bf16[400,128], index: 6, kind: input, shape index: {}]
  %s7 = inlined_call_operand.vmem [shape: f32[1,128], index: 7, kind: input, shape index: {}]
  %s8 = inlined_call_operand.vmem [shape: f32[20,400], index: 8, kind: input, shape index: {}]
  %s9 = inlined_call_operand.vmem [shape: f32[1,400], index: 9, kind: input, shape index: {}]
  %s10 = inlined_call_operand.vmem [shape: bf16[400,784], index: 10, kind: input, shape index: {}]
  %s11 = inlined_call_operand.vmem [shape: f32[1,784], index: 11, kind: input, shape index: {}]
  %s12 = inlined_call_operand.hbm [shape: f32[8,784], index: 12, kind: output, shape index: {0}]
  %s13 = inlined_call_operand.hbm [shape: f32[8,128], index: 13, kind: output, shape index: {1}]
  %14 = xla_tuple %s12, %s13
  %s15 = sld [smem:[#allocation0]]
  $region66: #{tpu_custom_call.1} parent=0
    _
  %s17 = ssub.s32 1, %s15
  %s18 = scalar_select 0, %s17, %s15
  $region1: #{tpu_custom_call.1} parent=0
    #allocation2 [shape = 'u8[28672]{0}', space=vmem, size = 0x7000, scoped, tag = 'output window, operand 0, single buffered']
    #allocation3 [shape = 's32[1]{0}', space=sflag, size = 0x4, scoped, tag = 'scoped memory for tpu_custom_call.1']
    #allocation4 [shape = 'u8[4096]{0}', space=vmem, size = 0x1000, scoped, tag = 'output window, operand 1, single buffered']
    #allocation5 [shape = 's32[1]{0}', space=sflag, size = 0x4, scoped, tag = 'scoped memory for tpu_custom_call.1']
    %19 = vsyncpa [#allocation3], 0
    %20 = vsyncpa [#allocation5], 0
    // Predicated region
    $region2: #{tpu_custom_call.1} parent=1 // pred_check
      _
    $region3: #{tpu_custom_call.1} parent=1 // pred_check_branch
      %22 = sbr.rel (0) target = $region5
    $region4: #{tpu_custom_call.1} parent=1 // pred_region
      _
    $region5: #{tpu_custom_call.1} parent=1 // pred_fallthru
      _
    // Predicated region
    $region6: #{tpu_custom_call.1} parent=1 // pred_check
      _
    $region7: #{tpu_custom_call.1} parent=1 // pred_check_branch
      %24 = sbr.rel (0) target = $region9
    $region8: #{tpu_custom_call.1} parent=1 // pred_region
      _
    $region9: #{tpu_custom_call.1} parent=1 // pred_fallthru
      _
    // Predicated region
    $region10: #{tpu_custom_call.1} parent=1 // pred_check
      _
    $region11: #{tpu_custom_call.1} parent=1 // pred_check_branch
      %26 = sbr.rel (0) target = $region13
    $region12: #{tpu_custom_call.1} parent=1 // pred_region
      _
    $region13: #{tpu_custom_call.1} parent=1 // pred_fallthru
      _
    // Predicated region
    $region14: #{tpu_custom_call.1} parent=1 // pred_check
      _
    $region15: #{tpu_custom_call.1} parent=1 // pred_check_branch
      %28 = sbr.rel (0) target = $region17
    $region16: #{tpu_custom_call.1} parent=1 // pred_region
      _
    $region17: #{tpu_custom_call.1} parent=1 // pred_fallthru
      _
    // Predicated region
    $region18: #{tpu_custom_call.1} parent=1 // pred_check
      _
    $region19: #{tpu_custom_call.1} parent=1 // pred_check_branch
      %30 = sbr.rel (0) target = $region21
    $region20: #{tpu_custom_call.1} parent=1 // pred_region
      _
    $region21: #{tpu_custom_call.1} parent=1 // pred_fallthru
      _
    // Predicated region
    $region22: #{tpu_custom_call.1} parent=1 // pred_check
      _
    $region23: #{tpu_custom_call.1} parent=1 // pred_check_branch
      %32 = sbr.rel (0) target = $region25
    $region24: #{tpu_custom_call.1} parent=1 // pred_region
      _
    $region25: #{tpu_custom_call.1} parent=1 // pred_fallthru
      _
    // Predicated region
    $region26: #{tpu_custom_call.1} parent=1 // pred_check
      _
    $region27: #{tpu_custom_call.1} parent=1 // pred_check_branch
      %34 = sbr.rel (0) target = $region29
    $region28: #{tpu_custom_call.1} parent=1 // pred_region
      _
    $region29: #{tpu_custom_call.1} parent=1 // pred_fallthru
      _
    // Predicated region
    $region30: #{tpu_custom_call.1} parent=1 // pred_check
      _
    $region31: #{tpu_custom_call.1} parent=1 // pred_check_branch
      %36 = sbr.rel (0) target = $region33
    $region32: #{tpu_custom_call.1} parent=1 // pred_region
      _
    $region33: #{tpu_custom_call.1} parent=1 // pred_fallthru
      _
    // Predicated region
    $region34: #{tpu_custom_call.1} parent=1 // pred_check
      _
    $region35: #{tpu_custom_call.1} parent=1 // pred_check_branch
      %38 = sbr.rel (0) target = $region37
    $region36: #{tpu_custom_call.1} parent=1 // pred_region
      _
    $region37: #{tpu_custom_call.1} parent=1 // pred_fallthru
      _
    // Predicated region
    $region38: #{tpu_custom_call.1} parent=1 // pred_check
      _
    $region39: #{tpu_custom_call.1} parent=1 // pred_check_branch
      %40 = sbr.rel (0) target = $region41
    $region40: #{tpu_custom_call.1} parent=1 // pred_region
      _
    $region41: #{tpu_custom_call.1} parent=1 // pred_fallthru
      _
    // Predicated region
    $region42: #{tpu_custom_call.1} parent=1 // pred_check
      _
    $region43: #{tpu_custom_call.1} parent=1 // pred_check_branch
      %42 = sbr.rel (0) target = $region45
    $region44: #{tpu_custom_call.1} parent=1 // pred_region
      _
    $region45: #{tpu_custom_call.1} parent=1 // pred_fallthru
      _
    // Predicated region
    $region46: #{tpu_custom_call.1} parent=1 // pred_check
      _
    $region47: #{tpu_custom_call.1} parent=1 // pred_check_branch
      %44 = sbr.rel (0) target = $region49
    $region48: #{tpu_custom_call.1} parent=1 // pred_region
      _
    $region49: #{tpu_custom_call.1} parent=1 // pred_fallthru
      _
    %v46 = vld [vmem:[%s0] sm:$0xff]
    %v47 = vld [vmem:[%s0 + $0x8] sm:$0xff]
    %v48 = vld [vmem:[%s0 + $0x10] sm:$0xff]
    %v49 = vld [vmem:[%s0 + $0x18] sm:$0xff]
    %v50 = vld [vmem:[%s0 + $0x20] sm:$0xff]
    %v51 = vld [vmem:[%s0 + $0x28] sm:$0xff]
    %v52 = vld [vmem:[%s0 + $0x30] sm:$0xff]
    %v53 = vpack.c.bf16 %v46, %v46
    %v54 = vpack.c.bf16 %v47, %v47
    %v55 = vpack.c.bf16 %v48, %v48
    %v56 = vpack.c.bf16 %v49, %v49
    %v57 = vpack.c.bf16 %v50, %v50
    %v58 = vpack.c.bf16 %v51, %v51
    %v59 = vpack.c.bf16 %v52, %v52
    %v60 = vld [vmem:[%s1] sm:$0xff]
    %v61 = vld [vmem:[%s2] sm:$0xff]
    %v62 = vld [vmem:[%s4] sm:$0xff]
    %v63 = vld [vmem:[%s4 + $0x8] sm:$0xff]
    %v64 = vld [vmem:[%s4 + $0x10] sm:$0xff]
    %v65 = vld [vmem:[%s4 + $0x18] sm:$0xff]
    %v66 = vld [vmem:[%s4 + $0x20] sm:$0xff]
    %v67 = vld [vmem:[%s4 + $0x28] sm:$0xff]
    %v68 = vld [vmem:[%s4 + $0x30] sm:$0xff]
    %v69 = vld [vmem:[%s4 + $0x38] sm:$0xff]
    %v70 = vld [vmem:[%s4 + $0x40] sm:$0x3]
    %v71 = vld [vmem:[%s4 + $0x48] sm:$0x3]
    %v72 = vld [vmem:[%s4 + $0x50] sm:$0x3]
    %v73 = vld [vmem:[%s4 + $0x58] sm:$0x3]
    %v74 = vld [vmem:[%s4 + $0x60] sm:$0x3]
    %v75 = vld [vmem:[%s4 + $0x68] sm:$0x3]
    %v76 = vld [vmem:[%s4 + $0x70] sm:$0x3]
    %v77 = vld [vmem:[%s4 + $0x78] sm:$0x3]
    %vm78 = vcmask 80896
    %v80 = vsel %vm78, %v60, 0
    %vm82 = vcmask 1041408
    %v84 = vsel %vm82, %v70, 0
    %v87 = vsel %vm82, %v71, 0
    %v90 = vsel %vm82, %v72, 0
    %v93 = vsel %vm82, %v73, 0
    %v96 = vsel %vm82, %v74, 0
    %v99 = vsel %vm82, %v75, 0
    %v102 = vsel %vm82, %v76, 0
    %v105 = vsel %vm82, %v77, 0
    %107 = vmatpush.msra.mxu0 0.0
    %108 = vmatpush.msra.mxu0 0.0
    %109 = vmatpush.msra.mxu0 0.0
    %110 = vmatpush.msra.mxu0 0.0
    %111 = vmatpush.msra.mxu0 0.0
    %112 = vmatpush.msra.mxu0 0.0
    %113 = vmatpush.msra.mxu0 0.0
    %114 = vmatpush.msra.mxu0 0.0
    %115 = vmatpush.msra.mxu0 0.0
    %116 = vmatpush.msra.mxu0 0.0
    %117 = vmatpush.msra.mxu0 0.0
    %118 = vmatpush.msra.mxu0 0.0
    %119 = vmatpush.msra.mxu0 0.0
    %120 = vmatpush.msra.mxu0 0.0
    %121 = vmatpush.msra.mxu0 %v84
    %122 = vmatpush.msra.mxu0 %v62
    %123 = vmatmul.f32.gmra.mxu0 %v80
    %v124 = vpop.f32.mrf.mxu0
    %v125 = vadd.f32 0.0, %v124
    %126 = vdwg.mxu0
    %127 = vmatpush.msra.mxu0 0.0
    %128 = vmatpush.msra.mxu0 0.0
    %129 = vmatpush.msra.mxu0 0.0
    %130 = vmatpush.msra.mxu0 0.0
    %131 = vmatpush.msra.mxu0 0.0
    %132 = vmatpush.msra.mxu0 0.0
    %133 = vmatpush.msra.mxu0 0.0
    %134 = vmatpush.msra.mxu0 0.0
    %135 = vmatpush.msra.mxu0 0.0
    %136 = vmatpush.msra.mxu0 0.0
    %137 = vmatpush.msra.mxu0 0.0
    %138 = vmatpush.msra.mxu0 0.0
    %139 = vmatpush.msra.mxu0 0.0
    %140 = vmatpush.msra.mxu0 0.0
    %141 = vmatpush.msra.mxu0 %v87
    %142 = vmatpush.msra.mxu0 %v63
    %143 = vmatmul.f32.gmra.mxu0 %v80
    %v144 = vpop.f32.mrf.mxu0
    %v145 = vadd.f32 0.0, %v144
    %146 = vdwg.mxu0
    %147 = vmatpush.msra.mxu0 0.0
    %148 = vmatpush.msra.mxu0 0.0
    %149 = vmatpush.msra.mxu0 0.0
    %150 = vmatpush.msra.mxu0 0.0
    %151 = vmatpush.msra.mxu0 0.0
    %152 = vmatpush.msra.mxu0 0.0
    %153 = vmatpush.msra.mxu0 0.0
    %154 = vmatpush.msra.mxu0 0.0
    %155 = vmatpush.msra.mxu0 0.0
    %156 = vmatpush.msra.mxu0 0.0
    %157 = vmatpush.msra.mxu0 0.0
    %158 = vmatpush.msra.mxu0 0.0
    %159 = vmatpush.msra.mxu0 0.0
    %160 = vmatpush.msra.mxu0 0.0
    %161 = vmatpush.msra.mxu0 %v90
    %162 = vmatpush.msra.mxu0 %v64
    %163 = vmatmul.f32.gmra.mxu0 %v80
    %v164 = vpop.f32.mrf.mxu0
    %v165 = vadd.f32 0.0, %v164
    %166 = vdwg.mxu0
    %167 = vmatpush.msra.mxu0 0.0
    %168 = vmatpush.msra.mxu0 0.0
    %169 = vmatpush.msra.mxu0 0.0
    %170 = vmatpush.msra.mxu0 0.0
    %171 = vmatpush.msra.mxu0 0.0
    %172 = vmatpush.msra.mxu0 0.0
    %173 = vmatpush.msra.mxu0 0.0
    %174 = vmatpush.msra.mxu0 0.0
    %175 = vmatpush.msra.mxu0 0.0
    %176 = vmatpush.msra.mxu0 0.0
    %177 = vmatpush.msra.mxu0 0.0
    %178 = vmatpush.msra.mxu0 0.0
    %179 = vmatpush.msra.mxu0 0.0
    %180 = vmatpush.msra.mxu0 0.0
    %181 = vmatpush.msra.mxu0 %v93
    %182 = vmatpush.msra.mxu0 %v65
    %183 = vmatmul.f32.gmra.mxu0 %v80
    %v184 = vpop.f32.mrf.mxu0
    %v185 = vadd.f32 0.0, %v184
    %186 = vdwg.mxu0
    %187 = vmatpush.msra.mxu0 0.0
    %188 = vmatpush.msra.mxu0 0.0
    %189 = vmatpush.msra.mxu0 0.0
    %190 = vmatpush.msra.mxu0 0.0
    %191 = vmatpush.msra.mxu0 0.0
    %192 = vmatpush.msra.mxu0 0.0
    %193 = vmatpush.msra.mxu0 0.0
    %194 = vmatpush.msra.mxu0 0.0
    %195 = vmatpush.msra.mxu0 0.0
    %196 = vmatpush.msra.mxu0 0.0
    %197 = vmatpush.msra.mxu0 0.0
    %198 = vmatpush.msra.mxu0 0.0
    %199 = vmatpush.msra.mxu0 0.0
    %200 = vmatpush.msra.mxu0 0.0
    %201 = vmatpush.msra.mxu0 %v96
    %202 = vmatpush.msra.mxu0 %v66
    %203 = vmatmul.f32.gmra.mxu0 %v80
    %v204 = vpop.f32.mrf.mxu0
    %v205 = vadd.f32 0.0, %v204
    %206 = vdwg.mxu0
    %207 = vmatpush.msra.mxu0 0.0
    %208 = vmatpush.msra.mxu0 0.0
    %209 = vmatpush.msra.mxu0 0.0
    %210 = vmatpush.msra.mxu0 0.0
    %211 = vmatpush.msra.mxu0 0.0
    %212 = vmatpush.msra.mxu0 0.0
    %213 = vmatpush.msra.mxu0 0.0
    %214 = vmatpush.msra.mxu0 0.0
    %215 = vmatpush.msra.mxu0 0.0
    %216 = vmatpush.msra.mxu0 0.0
    %217 = vmatpush.msra.mxu0 0.0
    %218 = vmatpush.msra.mxu0 0.0
    %219 = vmatpush.msra.mxu0 0.0
    %220 = vmatpush.msra.mxu0 0.0
    %221 = vmatpush.msra.mxu0 %v99
    %222 = vmatpush.msra.mxu0 %v67
    %223 = vmatmul.f32.gmra.mxu0 %v80
    %v224 = vpop.f32.mrf.mxu0
    %v225 = vadd.f32 0.0, %v224
    %226 = vdwg.mxu0
    %227 = vmatpush.msra.mxu0 0.0
    %228 = vmatpush.msra.mxu0 0.0
    %229 = vmatpush.msra.mxu0 0.0
    %230 = vmatpush.msra.mxu0 0.0
    %231 = vmatpush.msra.mxu0 0.0
    %232 = vmatpush.msra.mxu0 0.0
    %233 = vmatpush.msra.mxu0 0.0
    %234 = vmatpush.msra.mxu0 0.0
    %235 = vmatpush.msra.mxu0 0.0
    %236 = vmatpush.msra.mxu0 0.0
    %237 = vmatpush.msra.mxu0 0.0
    %238 = vmatpush.msra.mxu0 0.0
    %239 = vmatpush.msra.mxu0 0.0
    %240 = vmatpush.msra.mxu0 0.0
    %241 = vmatpush.msra.mxu0 %v102
    %242 = vmatpush.msra.mxu0 %v68
    %243 = vmatmul.f32.gmra.mxu0 %v80
    %v244 = vpop.f32.mrf.mxu0
    %v245 = vadd.f32 0.0, %v244
    %246 = vdwg.mxu0
    %247 = vmatpush.msra.mxu0 0.0
    %248 = vmatpush.msra.mxu0 0.0
    %249 = vmatpush.msra.mxu0 0.0
    %250 = vmatpush.msra.mxu0 0.0
    %251 = vmatpush.msra.mxu0 0.0
    %252 = vmatpush.msra.mxu0 0.0
    %253 = vmatpush.msra.mxu0 0.0
    %254 = vmatpush.msra.mxu0 0.0
    %255 = vmatpush.msra.mxu0 0.0
    %256 = vmatpush.msra.mxu0 0.0
    %257 = vmatpush.msra.mxu0 0.0
    %258 = vmatpush.msra.mxu0 0.0
    %259 = vmatpush.msra.mxu0 0.0
    %260 = vmatpush.msra.mxu0 0.0
    %261 = vmatpush.msra.mxu0 %v105
    %262 = vmatpush.msra.mxu0 %v69
    %263 = vmatmul.f32.gmra.mxu0 %v80
    %v264 = vpop.f32.mrf.mxu0
    %v265 = vadd.f32 0.0, %v264
    %266 = vdwg.mxu0
    %v267 = vld [vmem:[%s3] sm:$0xff]
    %v268 = vld [vmem:[%s3 + $0x8] sm:$0xff]
    %v269 = vld [vmem:[%s3 + $0x10] sm:$0xff]
    %v270 = vld [vmem:[%s3 + $0x18] sm:$0xff]
    %v271 = vld [vmem:[%s3 + $0x20] sm:$0xff]
    %v272 = vld [vmem:[%s3 + $0x28] sm:$0xff]
    %v273 = vld [vmem:[%s3 + $0x30] sm:$0xff]
    %v274 = vld [vmem:[%s3 + $0x38] sm:$0xff]
    %v275 = vld [vmem:[%s3 + $0x40] sm:$0xff]
    %v276 = vld [vmem:[%s3 + $0x48] sm:$0xff]
    %v277 = vld [vmem:[%s3 + $0x50] sm:$0xff]
    %v278 = vld [vmem:[%s3 + $0x58] sm:$0xff]
    %v279 = vld [vmem:[%s3 + $0x60] sm:$0xff]
    %v280 = vld [vmem:[%s3 + $0x68] sm:$0xff]
    %v281 = vld [vmem:[%s3 + $0x70] sm:$0xff]
    %v282 = vld [vmem:[%s3 + $0x78] sm:$0xff]
    %v283 = vld [vmem:[%s3 + $0x80] sm:$0xff]
    %v284 = vld [vmem:[%s3 + $0x88] sm:$0xff]
    %v285 = vld [vmem:[%s3 + $0x90] sm:$0xff]
    %v286 = vld [vmem:[%s3 + $0x98] sm:$0xff]
    %v287 = vld [vmem:[%s3 + $0xa0] sm:$0xff]
    %v288 = vld [vmem:[%s3 + $0xa8] sm:$0xff]
    %v289 = vld [vmem:[%s3 + $0xb0] sm:$0xff]
    %v290 = vld [vmem:[%s3 + $0xb8] sm:$0xff]
    %v291 = vld [vmem:[%s3 + $0xc0] sm:$0xff]
    %v292 = vld [vmem:[%s3 + $0xc8] sm:$0xff]
    %v293 = vld [vmem:[%s3 + $0xd0] sm:$0xff]
    %v294 = vld [vmem:[%s3 + $0xd8] sm:$0xff]
    %v295 = vld [vmem:[%s3 + $0xe0] sm:$0xff]
    %v296 = vld [vmem:[%s3 + $0xe8] sm:$0xff]
    %v297 = vld [vmem:[%s3 + $0xf0] sm:$0xff]
    %v298 = vld [vmem:[%s3 + $0xf8] sm:$0xff]
    %v299 = vld [vmem:[%s3 + $0x100] sm:$0xff]
    %v300 = vld [vmem:[%s3 + $0x108] sm:$0xff]
    %v301 = vld [vmem:[%s3 + $0x110] sm:$0xff]
    %v302 = vld [vmem:[%s3 + $0x118] sm:$0xff]
    %v303 = vld [vmem:[%s3 + $0x120] sm:$0xff]
    %v304 = vld [vmem:[%s3 + $0x128] sm:$0xff]
    %v305 = vld [vmem:[%s3 + $0x130] sm:$0xff]
    %v306 = vld [vmem:[%s3 + $0x138] sm:$0xff]
    %v307 = vld [vmem:[%s3 + $0x140] sm:$0xff]
    %v308 = vld [vmem:[%s3 + $0x148] sm:$0xff]
    %v309 = vld [vmem:[%s3 + $0x150] sm:$0xff]
    %v310 = vld [vmem:[%s3 + $0x158] sm:$0xff]
    %v311 = vld [vmem:[%s3 + $0x160] sm:$0xff]
    %v312 = vld [vmem:[%s3 + $0x168] sm:$0xff]
    %v313 = vld [vmem:[%s3 + $0x170] sm:$0xff]
    %v314 = vld [vmem:[%s3 + $0x178] sm:$0xff]
    %v315 = vld [vmem:[%s3 + $0x180] sm:$0xff]
    %v316 = vld [vmem:[%s3 + $0x188] sm:$0xff]
    %v317 = vld [vmem:[%s3 + $0x190] sm:$0xff]
    %v318 = vld [vmem:[%s3 + $0x198] sm:$0xff]
    %v319 = vld [vmem:[%s3 + $0x1a0] sm:$0xff]
    %v320 = vld [vmem:[%s3 + $0x1a8] sm:$0xff]
    %v321 = vld [vmem:[%s3 + $0x1b0] sm:$0xff]
    %v322 = vld [vmem:[%s3 + $0x1b8] sm:$0xff]
    %v323 = vld [vmem:[%s3 + $0x1c0] sm:$0xff]
    %v324 = vld [vmem:[%s3 + $0x1c8] sm:$0xff]
    %v325 = vld [vmem:[%s3 + $0x1d0] sm:$0xff]
    %v326 = vld [vmem:[%s3 + $0x1d8] sm:$0xff]
    %v327 = vld [vmem:[%s3 + $0x1e0] sm:$0xff]
    %v328 = vld [vmem:[%s3 + $0x1e8] sm:$0xff]
    %v329 = vld [vmem:[%s3 + $0x1f0] sm:$0xff]
    %v330 = vld [vmem:[%s3 + $0x1f8] sm:$0xff]
    %v331 = vld [vmem:[%s3 + $0x200] sm:$0xff]
    %v332 = vld [vmem:[%s3 + $0x208] sm:$0xff]
    %v333 = vld [vmem:[%s3 + $0x210] sm:$0xff]
    %v334 = vld [vmem:[%s3 + $0x218] sm:$0xff]
    %v335 = vld [vmem:[%s3 + $0x220] sm:$0xff]
    %v336 = vld [vmem:[%s3 + $0x228] sm:$0xff]
    %v337 = vld [vmem:[%s3 + $0x230] sm:$0xff]
    %v338 = vld [vmem:[%s3 + $0x238] sm:$0xff]
    %v339 = vld [vmem:[%s3 + $0x240] sm:$0xff]
    %v340 = vld [vmem:[%s3 + $0x248] sm:$0xff]
    %v341 = vld [vmem:[%s3 + $0x250] sm:$0xff]
    %v342 = vld [vmem:[%s3 + $0x258] sm:$0xff]
    %v343 = vld [vmem:[%s3 + $0x260] sm:$0xff]
    %v344 = vld [vmem:[%s3 + $0x268] sm:$0xff]
    %v345 = vld [vmem:[%s3 + $0x270] sm:$0xff]
    %v346 = vld [vmem:[%s3 + $0x278] sm:$0xff]
    %v347 = vld [vmem:[%s3 + $0x280] sm:$0xff]
    %v348 = vld [vmem:[%s3 + $0x288] sm:$0xff]
    %v349 = vld [vmem:[%s3 + $0x290] sm:$0xff]
    %v350 = vld [vmem:[%s3 + $0x298] sm:$0xff]
    %v351 = vld [vmem:[%s3 + $0x2a0] sm:$0xff]
    %v352 = vld [vmem:[%s3 + $0x2a8] sm:$0xff]
    %v353 = vld [vmem:[%s3 + $0x2b0] sm:$0xff]
    %v354 = vld [vmem:[%s3 + $0x2b8] sm:$0xff]
    %v355 = vld [vmem:[%s3 + $0x2c0] sm:$0xff]
    %v356 = vld [vmem:[%s3 + $0x2c8] sm:$0xff]
    %v357 = vld [vmem:[%s3 + $0x2d0] sm:$0xff]
    %v358 = vld [vmem:[%s3 + $0x2d8] sm:$0xff]
    %v359 = vld [vmem:[%s3 + $0x2e0] sm:$0xff]
    %v360 = vld [vmem:[%s3 + $0x2e8] sm:$0xff]
    %v361 = vld [vmem:[%s3 + $0x2f0] sm:$0xff]
    %v362 = vld [vmem:[%s3 + $0x2f8] sm:$0xff]
    %v363 = vld [vmem:[%s3 + $0x300] sm:$0xff]
    %v364 = vld [vmem:[%s3 + $0x308] sm:$0xff]
    %v365 = vld [vmem:[%s3 + $0x310] sm:$0xff]
    %v366 = vld [vmem:[%s3 + $0x318] sm:$0xff]
    %v367 = vld [vmem:[%s3 + $0x320] sm:$0xff]
    %v368 = vld [vmem:[%s3 + $0x328] sm:$0xff]
    %v369 = vld [vmem:[%s3 + $0x330] sm:$0xff]
    %v370 = vld [vmem:[%s3 + $0x338] sm:$0xff]
    %v371 = vld [vmem:[%s3 + $0x340] sm:$0xff]
    %v372 = vld [vmem:[%s3 + $0x348] sm:$0xff]
    %v373 = vld [vmem:[%s3 + $0x350] sm:$0xff]
    %v374 = vld [vmem:[%s3 + $0x358] sm:$0xff]
    %v375 = vld [vmem:[%s3 + $0x360] sm:$0xff]
    %v376 = vld [vmem:[%s3 + $0x368] sm:$0xff]
    %v377 = vld [vmem:[%s3 + $0x370] sm:$0xff]
    %v378 = vld [vmem:[%s3 + $0x378] sm:$0xff]
    %v379 = vld [vmem:[%s3 + $0x380] sm:$0xff]
    %v380 = vld [vmem:[%s3 + $0x388] sm:$0xff]
    %v381 = vld [vmem:[%s3 + $0x390] sm:$0xff]
    %v382 = vld [vmem:[%s3 + $0x398] sm:$0xff]
    %v383 = vld [vmem:[%s3 + $0x3a0] sm:$0xff]
    %v384 = vld [vmem:[%s3 + $0x3a8] sm:$0xff]
    %v385 = vld [vmem:[%s3 + $0x3b0] sm:$0xff]
    %v386 = vld [vmem:[%s3 + $0x3b8] sm:$0xff]
    %v387 = vld [vmem:[%s3 + $0x3c0] sm:$0xff]
    %v388 = vld [vmem:[%s3 + $0x3c8] sm:$0xff]
    %v389 = vld [vmem:[%s3 + $0x3d0] sm:$0xff]
    %v390 = vld [vmem:[%s3 + $0x3d8] sm:$0xff]
    %v391 = vld [vmem:[%s3 + $0x3e0] sm:$0xff]
    %v392 = vld [vmem:[%s3 + $0x3e8] sm:$0xff]
    %v393 = vld [vmem:[%s3 + $0x3f0] sm:$0xff]
    %v394 = vld [vmem:[%s3 + $0x3f8] sm:$0xff]
    %v395 = vld [vmem:[%s3 + $0x400] sm:$0xff]
    %v396 = vld [vmem:[%s3 + $0x408] sm:$0xff]
    %v397 = vld [vmem:[%s3 + $0x410] sm:$0xff]
    %v398 = vld [vmem:[%s3 + $0x418] sm:$0xff]
    %v399 = vld [vmem:[%s3 + $0x420] sm:$0xff]
    %v400 = vld [vmem:[%s3 + $0x428] sm:$0xff]
    %v401 = vld [vmem:[%s3 + $0x430] sm:$0xff]
    %v402 = vld [vmem:[%s3 + $0x438] sm:$0xff]
    %v403 = vld [vmem:[%s3 + $0x440] sm:$0xff]
    %v404 = vld [vmem:[%s3 + $0x448] sm:$0xff]
    %v405 = vld [vmem:[%s3 + $0x450] sm:$0xff]
    %v406 = vld [vmem:[%s3 + $0x458] sm:$0xff]
    %v407 = vld [vmem:[%s3 + $0x460] sm:$0xff]
    %v408 = vld [vmem:[%s3 + $0x468] sm:$0xff]
    %v409 = vld [vmem:[%s3 + $0x470] sm:$0xff]
    %v410 = vld [vmem:[%s3 + $0x478] sm:$0xff]
    %v411 = vld [vmem:[%s3 + $0x480] sm:$0xff]
    %v412 = vld [vmem:[%s3 + $0x488] sm:$0xff]
    %v413 = vld [vmem:[%s3 + $0x490] sm:$0xff]
    %v414 = vld [vmem:[%s3 + $0x498] sm:$0xff]
    %v415 = vld [vmem:[%s3 + $0x4a0] sm:$0xff]
    %v416 = vld [vmem:[%s3 + $0x4a8] sm:$0xff]
    %v417 = vld [vmem:[%s3 + $0x4b0] sm:$0xff]
    %v418 = vld [vmem:[%s3 + $0x4b8] sm:$0xff]
    %v419 = vld [vmem:[%s3 + $0x4c0] sm:$0xff]
    %v420 = vld [vmem:[%s3 + $0x4c8] sm:$0xff]
    %v421 = vld [vmem:[%s3 + $0x4d0] sm:$0xff]
    %v422 = vld [vmem:[%s3 + $0x4d8] sm:$0xff]
    %v423 = vld [vmem:[%s3 + $0x4e0] sm:$0xff]
    %v424 = vld [vmem:[%s3 + $0x4e8] sm:$0xff]
    %v425 = vld [vmem:[%s3 + $0x4f0] sm:$0xff]
    %v426 = vld [vmem:[%s3 + $0x4f8] sm:$0xff]
    %v427 = vld [vmem:[%s3 + $0x500] sm:$0xff]
    %v428 = vld [vmem:[%s3 + $0x508] sm:$0xff]
    %v429 = vld [vmem:[%s3 + $0x510] sm:$0xff]
    %v430 = vld [vmem:[%s3 + $0x518] sm:$0xff]
    %v431 = vld [vmem:[%s3 + $0x520] sm:$0xff]
    %v432 = vld [vmem:[%s3 + $0x528] sm:$0xff]
    %v433 = vld [vmem:[%s3 + $0x530] sm:$0xff]
    %v434 = vld [vmem:[%s3 + $0x538] sm:$0xff]
    %v435 = vld [vmem:[%s3 + $0x540] sm:$0xff]
    %v436 = vld [vmem:[%s3 + $0x548] sm:$0xff]
    %v437 = vld [vmem:[%s3 + $0x550] sm:$0xff]
    %v438 = vld [vmem:[%s3 + $0x558] sm:$0xff]
    %v439 = vld [vmem:[%s3 + $0x560] sm:$0xff]
    %v440 = vld [vmem:[%s3 + $0x568] sm:$0xff]
    %v441 = vld [vmem:[%s3 + $0x570] sm:$0xff]
    %v442 = vld [vmem:[%s3 + $0x578] sm:$0xff]
    %v443 = vld [vmem:[%s3 + $0x580] sm:$0xff]
    %v444 = vld [vmem:[%s3 + $0x588] sm:$0xff]
    %v445 = vld [vmem:[%s3 + $0x590] sm:$0xff]
    %v446 = vld [vmem:[%s3 + $0x598] sm:$0xff]
    %v447 = vld [vmem:[%s3 + $0x5a0] sm:$0xff]
    %v448 = vld [vmem:[%s3 + $0x5a8] sm:$0xff]
    %v449 = vld [vmem:[%s3 + $0x5b0] sm:$0xff]
    %v450 = vld [vmem:[%s3 + $0x5b8] sm:$0xff]
    %v451 = vld [vmem:[%s3 + $0x5c0] sm:$0xff]
    %v452 = vld [vmem:[%s3 + $0x5c8] sm:$0xff]
    %v453 = vld [vmem:[%s3 + $0x5d0] sm:$0xff]
    %v454 = vld [vmem:[%s3 + $0x5d8] sm:$0xff]
    %v455 = vld [vmem:[%s3 + $0x5e0] sm:$0xff]
    %v456 = vld [vmem:[%s3 + $0x5e8] sm:$0xff]
    %v457 = vld [vmem:[%s3 + $0x5f0] sm:$0xff]
    %v458 = vld [vmem:[%s3 + $0x5f8] sm:$0xff]
    %v459 = vld [vmem:[%s3 + $0x600] sm:$0xff]
    %v460 = vld [vmem:[%s3 + $0x608] sm:$0xff]
    %v461 = vld [vmem:[%s3 + $0x610] sm:$0xff]
    %v462 = vld [vmem:[%s3 + $0x618] sm:$0xff]
    %v659 = vunpack.c.l.b16 %v267
    %v660 = vunpack.c.h.b16 %v267
    %v661 = vunpack.c.l.b16 %v268
    %v662 = vunpack.c.h.b16 %v268
    %v663 = vunpack.c.l.b16 %v269
    %v664 = vunpack.c.h.b16 %v269
    %v665 = vunpack.c.l.b16 %v270
    %v666 = vunpack.c.h.b16 %v270
    %v667 = vunpack.c.l.b16 %v271
    %v668 = vunpack.c.h.b16 %v271
    %v669 = vunpack.c.l.b16 %v272
    %v670 = vunpack.c.h.b16 %v272
    %v671 = vunpack.c.l.b16 %v273
    %v672 = vunpack.c.h.b16 %v273
    %v673 = vunpack.c.l.b16 %v274
    %v674 = vunpack.c.h.b16 %v274
    %v675 = vunpack.c.l.b16 %v275
    %v676 = vunpack.c.h.b16 %v275
    %v677 = vunpack.c.l.b16 %v276
    %v678 = vunpack.c.h.b16 %v276
    %v679 = vunpack.c.l.b16 %v277
    %v680 = vunpack.c.h.b16 %v277
    %v681 = vunpack.c.l.b16 %v278
    %v682 = vunpack.c.h.b16 %v278
    %v683 = vunpack.c.l.b16 %v279
    %v684 = vunpack.c.h.b16 %v279
    %v685 = vunpack.c.l.b16 %v280
    %v686 = vunpack.c.h.b16 %v280
    %v687 = vunpack.c.l.b16 %v281
    %v688 = vunpack.c.h.b16 %v281
    %v689 = vunpack.c.l.b16 %v282
    %v690 = vunpack.c.h.b16 %v282
    %v691 = vunpack.c.l.b16 %v283
    %v692 = vunpack.c.h.b16 %v283
    %v693 = vunpack.c.l.b16 %v284
    %v694 = vunpack.c.h.b16 %v284
    %v695 = vunpack.c.l.b16 %v285
    %v696 = vunpack.c.h.b16 %v285
    %v697 = vunpack.c.l.b16 %v286
    %v698 = vunpack.c.h.b16 %v286
    %v699 = vunpack.c.l.b16 %v287
    %v700 = vunpack.c.h.b16 %v287
    %v701 = vunpack.c.l.b16 %v288
    %v702 = vunpack.c.h.b16 %v288
    %v703 = vunpack.c.l.b16 %v289
    %v704 = vunpack.c.h.b16 %v289
    %v705 = vunpack.c.l.b16 %v290
    %v706 = vunpack.c.h.b16 %v290
    %v707 = vunpack.c.l.b16 %v291
    %v708 = vunpack.c.h.b16 %v291
    %v709 = vunpack.c.l.b16 %v292
    %v710 = vunpack.c.h.b16 %v292
    %v711 = vunpack.c.l.b16 %v293
    %v712 = vunpack.c.h.b16 %v293
    %v713 = vunpack.c.l.b16 %v294
    %v714 = vunpack.c.h.b16 %v294
    %v715 = vunpack.c.l.b16 %v295
    %v716 = vunpack.c.h.b16 %v295
    %v717 = vunpack.c.l.b16 %v296
    %v718 = vunpack.c.h.b16 %v296
    %v719 = vunpack.c.l.b16 %v297
    %v720 = vunpack.c.h.b16 %v297
    %v721 = vunpack.c.l.b16 %v298
    %v722 = vunpack.c.h.b16 %v298
    %v723 = vunpack.c.l.b16 %v299
    %v724 = vunpack.c.h.b16 %v299
    %v725 = vunpack.c.l.b16 %v300
    %v726 = vunpack.c.h.b16 %v300
    %v727 = vunpack.c.l.b16 %v301
    %v728 = vunpack.c.h.b16 %v301
    %v729 = vunpack.c.l.b16 %v302
    %v730 = vunpack.c.h.b16 %v302
    %v731 = vunpack.c.l.b16 %v303
    %v732 = vunpack.c.h.b16 %v303
    %v733 = vunpack.c.l.b16 %v304
    %v734 = vunpack.c.h.b16 %v304
    %v735 = vunpack.c.l.b16 %v305
    %v736 = vunpack.c.h.b16 %v305
    %v737 = vunpack.c.l.b16 %v306
    %v738 = vunpack.c.h.b16 %v306
    %v739 = vunpack.c.l.b16 %v307
    %v740 = vunpack.c.h.b16 %v307
    %v741 = vunpack.c.l.b16 %v308
    %v742 = vunpack.c.h.b16 %v308
    %v743 = vunpack.c.l.b16 %v309
    %v744 = vunpack.c.h.b16 %v309
    %v745 = vunpack.c.l.b16 %v310
    %v746 = vunpack.c.h.b16 %v310
    %v747 = vunpack.c.l.b16 %v311
    %v748 = vunpack.c.h.b16 %v311
    %v749 = vunpack.c.l.b16 %v312
    %v750 = vunpack.c.h.b16 %v312
    %v751 = vunpack.c.l.b16 %v313
    %v752 = vunpack.c.h.b16 %v313
    %v753 = vunpack.c.l.b16 %v314
    %v754 = vunpack.c.h.b16 %v314
    %v755 = vunpack.c.l.b16 %v315
    %v756 = vunpack.c.h.b16 %v315
    %v757 = vunpack.c.l.b16 %v316
    %v758 = vunpack.c.h.b16 %v316
    %v759 = vunpack.c.l.b16 %v317
    %v760 = vunpack.c.h.b16 %v317
    %v761 = vunpack.c.l.b16 %v318
    %v762 = vunpack.c.h.b16 %v318
    %v763 = vunpack.c.l.b16 %v319
    %v764 = vunpack.c.h.b16 %v319
    %v765 = vunpack.c.l.b16 %v320
    %v766 = vunpack.c.h.b16 %v320
    %v767 = vunpack.c.l.b16 %v321
    %v768 = vunpack.c.h.b16 %v321
    %v769 = vunpack.c.l.b16 %v322
    %v770 = vunpack.c.h.b16 %v322
    %v771 = vunpack.c.l.b16 %v323
    %v772 = vunpack.c.h.b16 %v323
    %v773 = vunpack.c.l.b16 %v324
    %v774 = vunpack.c.h.b16 %v324
    %v775 = vunpack.c.l.b16 %v325
    %v776 = vunpack.c.h.b16 %v325
    %v777 = vunpack.c.l.b16 %v326
    %v778 = vunpack.c.h.b16 %v326
    %v779 = vunpack.c.l.b16 %v327
    %v780 = vunpack.c.h.b16 %v327
    %v781 = vunpack.c.l.b16 %v328
    %v782 = vunpack.c.h.b16 %v328
    %v783 = vunpack.c.l.b16 %v329
    %v784 = vunpack.c.h.b16 %v329
    %v785 = vunpack.c.l.b16 %v330
    %v786 = vunpack.c.h.b16 %v330
    %v787 = vunpack.c.l.b16 %v331
    %v788 = vunpack.c.h.b16 %v331
    %v789 = vunpack.c.l.b16 %v332
    %v790 = vunpack.c.h.b16 %v332
    %v791 = vunpack.c.l.b16 %v333
    %v792 = vunpack.c.h.b16 %v333
    %v793 = vunpack.c.l.b16 %v334
    %v794 = vunpack.c.h.b16 %v334
    %v795 = vunpack.c.l.b16 %v335
    %v796 = vunpack.c.h.b16 %v335
    %v797 = vunpack.c.l.b16 %v336
    %v798 = vunpack.c.h.b16 %v336
    %v799 = vunpack.c.l.b16 %v337
    %v800 = vunpack.c.h.b16 %v337
    %v801 = vunpack.c.l.b16 %v338
    %v802 = vunpack.c.h.b16 %v338
    %v803 = vunpack.c.l.b16 %v339
    %v804 = vunpack.c.h.b16 %v339
    %v805 = vunpack.c.l.b16 %v340
    %v806 = vunpack.c.h.b16 %v340
    %v807 = vunpack.c.l.b16 %v341
    %v808 = vunpack.c.h.b16 %v341
    %v809 = vunpack.c.l.b16 %v342
    %v810 = vunpack.c.h.b16 %v342
    %v811 = vunpack.c.l.b16 %v343
    %v812 = vunpack.c.h.b16 %v343
    %v813 = vunpack.c.l.b16 %v344
    %v814 = vunpack.c.h.b16 %v344
    %v815 = vunpack.c.l.b16 %v345
    %v816 = vunpack.c.h.b16 %v345
    %v817 = vunpack.c.l.b16 %v346
    %v818 = vunpack.c.h.b16 %v346
    %v819 = vunpack.c.l.b16 %v347
    %v820 = vunpack.c.h.b16 %v347
    %v821 = vunpack.c.l.b16 %v348
    %v822 = vunpack.c.h.b16 %v348
    %v823 = vunpack.c.l.b16 %v349
    %v824 = vunpack.c.h.b16 %v349
    %v825 = vunpack.c.l.b16 %v350
    %v826 = vunpack.c.h.b16 %v350
    %v827 = vunpack.c.l.b16 %v351
    %v828 = vunpack.c.h.b16 %v351
    %v829 = vunpack.c.l.b16 %v352
    %v830 = vunpack.c.h.b16 %v352
    %v831 = vunpack.c.l.b16 %v353
    %v832 = vunpack.c.h.b16 %v353
    %v833 = vunpack.c.l.b16 %v354
    %v834 = vunpack.c.h.b16 %v354
    %v835 = vunpack.c.l.b16 %v355
    %v836 = vunpack.c.h.b16 %v355
    %v837 = vunpack.c.l.b16 %v356
    %v838 = vunpack.c.h.b16 %v356
    %v839 = vunpack.c.l.b16 %v357
    %v840 = vunpack.c.h.b16 %v357
    %v841 = vunpack.c.l.b16 %v358
    %v842 = vunpack.c.h.b16 %v358
    %v843 = vunpack.c.l.b16 %v359
    %v844 = vunpack.c.h.b16 %v359
    %v845 = vunpack.c.l.b16 %v360
    %v846 = vunpack.c.h.b16 %v360
    %v847 = vunpack.c.l.b16 %v361
    %v848 = vunpack.c.h.b16 %v361
    %v849 = vunpack.c.l.b16 %v362
    %v850 = vunpack.c.h.b16 %v362
    %v851 = vunpack.c.l.b16 %v363
    %v852 = vunpack.c.h.b16 %v363
    %v853 = vunpack.c.l.b16 %v364
    %v854 = vunpack.c.h.b16 %v364
    %v855 = vunpack.c.l.b16 %v365
    %v856 = vunpack.c.h.b16 %v365
    %v857 = vunpack.c.l.b16 %v366
    %v858 = vunpack.c.h.b16 %v366
    %v859 = vunpack.c.l.b16 %v367
    %v860 = vunpack.c.h.b16 %v367
    %v861 = vunpack.c.l.b16 %v368
    %v862 = vunpack.c.h.b16 %v368
    %v863 = vunpack.c.l.b16 %v369
    %v864 = vunpack.c.h.b16 %v369
    %v865 = vunpack.c.l.b16 %v370
    %v866 = vunpack.c.h.b16 %v370
    %v867 = vunpack.c.l.b16 %v371
    %v868 = vunpack.c.h.b16 %v371
    %v869 = vunpack.c.l.b16 %v372
    %v870 = vunpack.c.h.b16 %v372
    %v871 = vunpack.c.l.b16 %v373
    %v872 = vunpack.c.h.b16 %v373
    %v873 = vunpack.c.l.b16 %v374
    %v874 = vunpack.c.h.b16 %v374
    %v875 = vunpack.c.l.b16 %v375
    %v876 = vunpack.c.h.b16 %v375
    %v877 = vunpack.c.l.b16 %v376
    %v878 = vunpack.c.h.b16 %v376
    %v879 = vunpack.c.l.b16 %v377
    %v880 = vunpack.c.h.b16 %v377
    %v881 = vunpack.c.l.b16 %v378
    %v882 = vunpack.c.h.b16 %v378
    %v883 = vunpack.c.l.b16 %v379
    %v884 = vunpack.c.h.b16 %v379
    %v885 = vunpack.c.l.b16 %v380
    %v886 = vunpack.c.h.b16 %v380
    %v887 = vunpack.c.l.b16 %v381
    %v888 = vunpack.c.h.b16 %v381
    %v889 = vunpack.c.l.b16 %v382
    %v890 = vunpack.c.h.b16 %v382
    %v891 = vunpack.c.l.b16 %v383
    %v892 = vunpack.c.h.b16 %v383
    %v893 = vunpack.c.l.b16 %v384
    %v894 = vunpack.c.h.b16 %v384
    %v895 = vunpack.c.l.b16 %v385
    %v896 = vunpack.c.h.b16 %v385
    %v897 = vunpack.c.l.b16 %v386
    %v898 = vunpack.c.h.b16 %v386
    %v899 = vunpack.c.l.b16 %v387
    %v900 = vunpack.c.h.b16 %v387
    %v901 = vunpack.c.l.b16 %v388
    %v902 = vunpack.c.h.b16 %v388
    %v903 = vunpack.c.l.b16 %v389
    %v904 = vunpack.c.h.b16 %v389
    %v905 = vunpack.c.l.b16 %v390
    %v906 = vunpack.c.h.b16 %v390
    %v907 = vunpack.c.l.b16 %v391
    %v908 = vunpack.c.h.b16 %v391
    %v909 = vunpack.c.l.b16 %v392
    %v910 = vunpack.c.h.b16 %v392
    %v911 = vunpack.c.l.b16 %v393
    %v912 = vunpack.c.h.b16 %v393
    %v913 = vunpack.c.l.b16 %v394
    %v914 = vunpack.c.h.b16 %v394
    %v915 = vunpack.c.l.b16 %v395
    %v916 = vunpack.c.h.b16 %v395
    %v917 = vunpack.c.l.b16 %v396
    %v918 = vunpack.c.h.b16 %v396
    %v919 = vunpack.c.l.b16 %v397
    %v920 = vunpack.c.h.b16 %v397
    %v921 = vunpack.c.l.b16 %v398
    %v922 = vunpack.c.h.b16 %v398
    %v923 = vunpack.c.l.b16 %v399
    %v924 = vunpack.c.h.b16 %v399
    %v925 = vunpack.c.l.b16 %v400
    %v926 = vunpack.c.h.b16 %v400
    %v927 = vunpack.c.l.b16 %v401
    %v928 = vunpack.c.h.b16 %v401
    %v929 = vunpack.c.l.b16 %v402
    %v930 = vunpack.c.h.b16 %v402
    %v931 = vunpack.c.l.b16 %v403
    %v932 = vunpack.c.h.b16 %v403
    %v933 = vunpack.c.l.b16 %v404
    %v934 = vunpack.c.h.b16 %v404
    %v935 = vunpack.c.l.b16 %v405
    %v936 = vunpack.c.h.b16 %v405
    %v937 = vunpack.c.l.b16 %v406
    %v938 = vunpack.c.h.b16 %v406
    %v939 = vunpack.c.l.b16 %v407
    %v940 = vunpack.c.h.b16 %v407
    %v941 = vunpack.c.l.b16 %v408
    %v942 = vunpack.c.h.b16 %v408
    %v943 = vunpack.c.l.b16 %v409
    %v944 = vunpack.c.h.b16 %v409
    %v945 = vunpack.c.l.b16 %v410
    %v946 = vunpack.c.h.b16 %v410
    %v947 = vunpack.c.l.b16 %v411
    %v948 = vunpack.c.h.b16 %v411
    %v949 = vunpack.c.l.b16 %v412
    %v950 = vunpack.c.h.b16 %v412
    %v951 = vunpack.c.l.b16 %v413
    %v952 = vunpack.c.h.b16 %v413
    %v953 = vunpack.c.l.b16 %v414
    %v954 = vunpack.c.h.b16 %v414
    %v955 = vunpack.c.l.b16 %v415
    %v956 = vunpack.c.h.b16 %v415
    %v957 = vunpack.c.l.b16 %v416
    %v958 = vunpack.c.h.b16 %v416
    %v959 = vunpack.c.l.b16 %v417
    %v960 = vunpack.c.h.b16 %v417
    %v961 = vunpack.c.l.b16 %v418
    %v962 = vunpack.c.h.b16 %v418
    %v963 = vunpack.c.l.b16 %v419
    %v964 = vunpack.c.h.b16 %v419
    %v965 = vunpack.c.l.b16 %v420
    %v966 = vunpack.c.h.b16 %v420
    %v967 = vunpack.c.l.b16 %v421
    %v968 = vunpack.c.h.b16 %v421
    %v969 = vunpack.c.l.b16 %v422
    %v970 = vunpack.c.h.b16 %v422
    %v971 = vunpack.c.l.b16 %v423
    %v972 = vunpack.c.h.b16 %v423
    %v973 = vunpack.c.l.b16 %v424
    %v974 = vunpack.c.h.b16 %v424
    %v975 = vunpack.c.l.b16 %v425
    %v976 = vunpack.c.h.b16 %v425
    %v977 = vunpack.c.l.b16 %v426
    %v978 = vunpack.c.h.b16 %v426
    %v979 = vunpack.c.l.b16 %v427
    %v980 = vunpack.c.h.b16 %v427
    %v981 = vunpack.c.l.b16 %v428
    %v982 = vunpack.c.h.b16 %v428
    %v983 = vunpack.c.l.b16 %v429
    %v984 = vunpack.c.h.b16 %v429
    %v985 = vunpack.c.l.b16 %v430
    %v986 = vunpack.c.h.b16 %v430
    %v987 = vunpack.c.l.b16 %v431
    %v988 = vunpack.c.h.b16 %v431
    %v989 = vunpack.c.l.b16 %v432
    %v990 = vunpack.c.h.b16 %v432
    %v991 = vunpack.c.l.b16 %v433
    %v992 = vunpack.c.h.b16 %v433
    %v993 = vunpack.c.l.b16 %v434
    %v994 = vunpack.c.h.b16 %v434
    %v995 = vunpack.c.l.b16 %v435
    %v996 = vunpack.c.h.b16 %v435
    %v997 = vunpack.c.l.b16 %v436
    %v998 = vunpack.c.h.b16 %v436
    %v999 = vunpack.c.l.b16 %v437
    %v1000 = vunpack.c.h.b16 %v437
    %v1001 = vunpack.c.l.b16 %v438
    %v1002 = vunpack.c.h.b16 %v438
    %v1003 = vunpack.c.l.b16 %v439
    %v1004 = vunpack.c.h.b16 %v439
    %v1005 = vunpack.c.l.b16 %v440
    %v1006 = vunpack.c.h.b16 %v440
    %v1007 = vunpack.c.l.b16 %v441
    %v1008 = vunpack.c.h.b16 %v441
    %v1009 = vunpack.c.l.b16 %v442
    %v1010 = vunpack.c.h.b16 %v442
    %v1011 = vunpack.c.l.b16 %v443
    %v1012 = vunpack.c.h.b16 %v443
    %v1013 = vunpack.c.l.b16 %v444
    %v1014 = vunpack.c.h.b16 %v444
    %v1015 = vunpack.c.l.b16 %v445
    %v1016 = vunpack.c.h.b16 %v445
    %v1017 = vunpack.c.l.b16 %v446
    %v1018 = vunpack.c.h.b16 %v446
    %v1019 = vunpack.c.l.b16 %v447
    %v1020 = vunpack.c.h.b16 %v447
    %v1021 = vunpack.c.l.b16 %v448
    %v1022 = vunpack.c.h.b16 %v448
    %v1023 = vunpack.c.l.b16 %v449
    %v1024 = vunpack.c.h.b16 %v449
    %v1025 = vunpack.c.l.b16 %v450
    %v1026 = vunpack.c.h.b16 %v450
    %v1027 = vunpack.c.l.b16 %v451
    %v1028 = vunpack.c.h.b16 %v451
    %v1029 = vunpack.c.l.b16 %v452
    %v1030 = vunpack.c.h.b16 %v452
    %v1031 = vunpack.c.l.b16 %v453
    %v1032 = vunpack.c.h.b16 %v453
    %v1033 = vunpack.c.l.b16 %v454
    %v1034 = vunpack.c.h.b16 %v454
    %v1035 = vunpack.c.l.b16 %v455
    %v1036 = vunpack.c.h.b16 %v455
    %v1037 = vunpack.c.l.b16 %v456
    %v1038 = vunpack.c.h.b16 %v456
    %v1039 = vunpack.c.l.b16 %v457
    %v1040 = vunpack.c.h.b16 %v457
    %v1041 = vunpack.c.l.b16 %v458
    %v1042 = vunpack.c.h.b16 %v458
    %v1043 = vunpack.c.l.b16 %v459
    %v1044 = vunpack.c.h.b16 %v459
    %v1045 = vunpack.c.l.b16 %v460
    %v1046 = vunpack.c.h.b16 %v460
    %v1047 = vunpack.c.l.b16 %v461
    %v1048 = vunpack.c.h.b16 %v461
    %v1049 = vunpack.c.l.b16 %v462
    %v1050 = vunpack.c.h.b16 %v462
    %v1051 = vpack.c.b16 %v663, %v659
    %v1052 = vpack.c.b16 %v664, %v660
    %v1053 = vpack.c.b16 %v665, %v661
    %v1054 = vpack.c.b16 %v666, %v662
    %v1055 = vpack.c.b16 %v671, %v667
    %v1056 = vpack.c.b16 %v672, %v668
    %v1057 = vpack.c.b16 %v673, %v669
    %v1058 = vpack.c.b16 %v674, %v670
    %v1059 = vpack.c.b16 %v679, %v675
    %v1060 = vpack.c.b16 %v680, %v676
    %v1061 = vpack.c.b16 %v681, %v677
    %v1062 = vpack.c.b16 %v682, %v678
    %v1063 = vpack.c.b16 %v687, %v683
    %v1064 = vpack.c.b16 %v688, %v684
    %v1065 = vpack.c.b16 %v689, %v685
    %v1066 = vpack.c.b16 %v690, %v686
    %v1067 = vpack.c.b16 %v695, %v691
    %v1068 = vpack.c.b16 %v696, %v692
    %v1069 = vpack.c.b16 %v697, %v693
    %v1070 = vpack.c.b16 %v698, %v694
    %v1071 = vpack.c.b16 %v703, %v699
    %v1072 = vpack.c.b16 %v704, %v700
    %v1073 = vpack.c.b16 %v705, %v701
    %v1074 = vpack.c.b16 %v706, %v702
    %v1075 = vpack.c.b16 %v711, %v707
    %v1076 = vpack.c.b16 %v712, %v708
    %v1077 = vpack.c.b16 %v713, %v709
    %v1078 = vpack.c.b16 %v714, %v710
    %v1079 = vpack.c.b16 %v719, %v715
    %v1080 = vpack.c.b16 %v720, %v716
    %v1081 = vpack.c.b16 %v721, %v717
    %v1082 = vpack.c.b16 %v722, %v718
    %v1083 = vpack.c.b16 %v727, %v723
    %v1084 = vpack.c.b16 %v728, %v724
    %v1085 = vpack.c.b16 %v729, %v725
    %v1086 = vpack.c.b16 %v730, %v726
    %v1087 = vpack.c.b16 %v735, %v731
    %v1088 = vpack.c.b16 %v736, %v732
    %v1089 = vpack.c.b16 %v737, %v733
    %v1090 = vpack.c.b16 %v738, %v734
    %v1091 = vpack.c.b16 %v743, %v739
    %v1092 = vpack.c.b16 %v744, %v740
    %v1093 = vpack.c.b16 %v745, %v741
    %v1094 = vpack.c.b16 %v746, %v742
    %v1095 = vpack.c.b16 %v751, %v747
    %v1096 = vpack.c.b16 %v752, %v748
    %v1097 = vpack.c.b16 %v753, %v749
    %v1098 = vpack.c.b16 %v754, %v750
    %v1099 = vpack.c.b16 %v759, %v755
    %v1100 = vpack.c.b16 %v760, %v756
    %v1101 = vpack.c.b16 %v761, %v757
    %v1102 = vpack.c.b16 %v762, %v758
    %v1103 = vpack.c.b16 %v767, %v763
    %v1104 = vpack.c.b16 %v768, %v764
    %v1105 = vpack.c.b16 %v769, %v765
    %v1106 = vpack.c.b16 %v770, %v766
    %v1107 = vpack.c.b16 %v775, %v771
    %v1108 = vpack.c.b16 %v776, %v772
    %v1109 = vpack.c.b16 %v777, %v773
    %v1110 = vpack.c.b16 %v778, %v774
    %v1111 = vpack.c.b16 %v783, %v779
    %v1112 = vpack.c.b16 %v784, %v780
    %v1113 = vpack.c.b16 %v785, %v781
    %v1114 = vpack.c.b16 %v786, %v782
    %v1115 = vpack.c.b16 %v791, %v787
    %v1116 = vpack.c.b16 %v792, %v788
    %v1117 = vpack.c.b16 %v793, %v789
    %v1118 = vpack.c.b16 %v794, %v790
    %v1119 = vpack.c.b16 %v799, %v795
    %v1120 = vpack.c.b16 %v800, %v796
    %v1121 = vpack.c.b16 %v801, %v797
    %v1122 = vpack.c.b16 %v802, %v798
    %v1123 = vpack.c.b16 %v807, %v803
    %v1124 = vpack.c.b16 %v808, %v804
    %v1125 = vpack.c.b16 %v809, %v805
    %v1126 = vpack.c.b16 %v810, %v806
    %v1127 = vpack.c.b16 %v815, %v811
    %v1128 = vpack.c.b16 %v816, %v812
    %v1129 = vpack.c.b16 %v817, %v813
    %v1130 = vpack.c.b16 %v818, %v814
    %v1131 = vpack.c.b16 %v823, %v819
    %v1132 = vpack.c.b16 %v824, %v820
    %v1133 = vpack.c.b16 %v825, %v821
    %v1134 = vpack.c.b16 %v826, %v822
    %v1135 = vpack.c.b16 %v831, %v827
    %v1136 = vpack.c.b16 %v832, %v828
    %v1137 = vpack.c.b16 %v833, %v829
    %v1138 = vpack.c.b16 %v834, %v830
    %v1139 = vpack.c.b16 %v839, %v835
    %v1140 = vpack.c.b16 %v840, %v836
    %v1141 = vpack.c.b16 %v841, %v837
    %v1142 = vpack.c.b16 %v842, %v838
    %v1143 = vpack.c.b16 %v847, %v843
    %v1144 = vpack.c.b16 %v848, %v844
    %v1145 = vpack.c.b16 %v849, %v845
    %v1146 = vpack.c.b16 %v850, %v846
    %v1147 = vpack.c.b16 %v855, %v851
    %v1148 = vpack.c.b16 %v856, %v852
    %v1149 = vpack.c.b16 %v857, %v853
    %v1150 = vpack.c.b16 %v858, %v854
    %v1151 = vpack.c.b16 %v863, %v859
    %v1152 = vpack.c.b16 %v864, %v860
    %v1153 = vpack.c.b16 %v865, %v861
    %v1154 = vpack.c.b16 %v866, %v862
    %v1155 = vpack.c.b16 %v871, %v867
    %v1156 = vpack.c.b16 %v872, %v868
    %v1157 = vpack.c.b16 %v873, %v869
    %v1158 = vpack.c.b16 %v874, %v870
    %v1159 = vpack.c.b16 %v879, %v875
    %v1160 = vpack.c.b16 %v880, %v876
    %v1161 = vpack.c.b16 %v881, %v877
    %v1162 = vpack.c.b16 %v882, %v878
    %v1163 = vpack.c.b16 %v887, %v883
    %v1164 = vpack.c.b16 %v888, %v884
    %v1165 = vpack.c.b16 %v889, %v885
    %v1166 = vpack.c.b16 %v890, %v886
    %v1167 = vpack.c.b16 %v895, %v891
    %v1168 = vpack.c.b16 %v896, %v892
    %v1169 = vpack.c.b16 %v897, %v893
    %v1170 = vpack.c.b16 %v898, %v894
    %v1171 = vpack.c.b16 %v903, %v899
    %v1172 = vpack.c.b16 %v904, %v900
    %v1173 = vpack.c.b16 %v905, %v901
    %v1174 = vpack.c.b16 %v906, %v902
    %v1175 = vpack.c.b16 %v911, %v907
    %v1176 = vpack.c.b16 %v912, %v908
    %v1177 = vpack.c.b16 %v913, %v909
    %v1178 = vpack.c.b16 %v914, %v910
    %v1179 = vpack.c.b16 %v919, %v915
    %v1180 = vpack.c.b16 %v920, %v916
    %v1181 = vpack.c.b16 %v921, %v917
    %v1182 = vpack.c.b16 %v922, %v918
    %v1183 = vpack.c.b16 %v927, %v923
    %v1184 = vpack.c.b16 %v928, %v924
    %v1185 = vpack.c.b16 %v929, %v925
    %v1186 = vpack.c.b16 %v930, %v926
    %v1187 = vpack.c.b16 %v935, %v931
    %v1188 = vpack.c.b16 %v936, %v932
    %v1189 = vpack.c.b16 %v937, %v933
    %v1190 = vpack.c.b16 %v938, %v934
    %v1191 = vpack.c.b16 %v943, %v939
    %v1192 = vpack.c.b16 %v944, %v940
    %v1193 = vpack.c.b16 %v945, %v941
    %v1194 = vpack.c.b16 %v946, %v942
    %v1195 = vpack.c.b16 %v951, %v947
    %v1196 = vpack.c.b16 %v952, %v948
    %v1197 = vpack.c.b16 %v953, %v949
    %v1198 = vpack.c.b16 %v954, %v950
    %v1199 = vpack.c.b16 %v959, %v955
    %v1200 = vpack.c.b16 %v960, %v956
    %v1201 = vpack.c.b16 %v961, %v957
    %v1202 = vpack.c.b16 %v962, %v958
    %v1203 = vpack.c.b16 %v967, %v963
    %v1204 = vpack.c.b16 %v968, %v964
    %v1205 = vpack.c.b16 %v969, %v965
    %v1206 = vpack.c.b16 %v970, %v966
    %v1207 = vpack.c.b16 %v975, %v971
    %v1208 = vpack.c.b16 %v976, %v972
    %v1209 = vpack.c.b16 %v977, %v973
    %v1210 = vpack.c.b16 %v978, %v974
    %v1211 = vpack.c.b16 %v983, %v979
    %v1212 = vpack.c.b16 %v984, %v980
    %v1213 = vpack.c.b16 %v985, %v981
    %v1214 = vpack.c.b16 %v986, %v982
    %v1215 = vpack.c.b16 %v991, %v987
    %v1216 = vpack.c.b16 %v992, %v988
    %v1217 = vpack.c.b16 %v993, %v989
    %v1218 = vpack.c.b16 %v994, %v990
    %v1219 = vpack.c.b16 %v999, %v995
    %v1220 = vpack.c.b16 %v1000, %v996
    %v1221 = vpack.c.b16 %v1001, %v997
    %v1222 = vpack.c.b16 %v1002, %v998
    %v1223 = vpack.c.b16 %v1007, %v1003
    %v1224 = vpack.c.b16 %v1008, %v1004
    %v1225 = vpack.c.b16 %v1009, %v1005
    %v1226 = vpack.c.b16 %v1010, %v1006
    %v1227 = vpack.c.b16 %v1015, %v1011
    %v1228 = vpack.c.b16 %v1016, %v1012
    %v1229 = vpack.c.b16 %v1017, %v1013
    %v1230 = vpack.c.b16 %v1018, %v1014
    %v1231 = vpack.c.b16 %v1023, %v1019
    %v1232 = vpack.c.b16 %v1024, %v1020
    %v1233 = vpack.c.b16 %v1025, %v1021
    %v1234 = vpack.c.b16 %v1026, %v1022
    %v1235 = vpack.c.b16 %v1031, %v1027
    %v1236 = vpack.c.b16 %v1032, %v1028
    %v1237 = vpack.c.b16 %v1033, %v1029
    %v1238 = vpack.c.b16 %v1034, %v1030
    %v1239 = vpack.c.b16 %v1039, %v1035
    %v1240 = vpack.c.b16 %v1040, %v1036
    %v1241 = vpack.c.b16 %v1041, %v1037
    %v1242 = vpack.c.b16 %v1042, %v1038
    %v1243 = vpack.c.b16 %v1047, %v1043
    %v1244 = vpack.c.b16 %v1048, %v1044
    %v1245 = vpack.c.b16 %v1049, %v1045
    %v1246 = vpack.c.b16 %v1050, %v1046
    %vm1443 = vcmask 130048
    %v1445 = vsel %vm1443, %v59, 0
    %1447 = vmatpush.bf16.msra.mxu0 %v1079
    %1448 = vmatpush.bf16.msra.mxu0 %v1075
    %1449 = vmatpush.bf16.msra.mxu0 %v1071
    %1450 = vmatpush.bf16.msra.mxu0 %v1067
    %1451 = vmatpush.bf16.msra.mxu0 %v1063
    %1452 = vmatpush.bf16.msra.mxu0 %v1059
    %1453 = vmatpush.bf16.msra.mxu0 %v1055
    %1454 = vmatpush.bf16.msra.mxu0 %v1051
    %1455 = vmatmul.bf16.gmra.mxu0 %v53
    %v1456 = vpop.f32.mrf.mxu0
    %v1457 = vadd.f32 %v125, %v1456
    %v1458 = vpop.f32.mrf.mxu0
    %1459 = vdwg.mxu0
    %1460 = vmatpush.bf16.msra.mxu0 %v1111
    %1461 = vmatpush.bf16.msra.mxu0 %v1107
    %1462 = vmatpush.bf16.msra.mxu0 %v1103
    %1463 = vmatpush.bf16.msra.mxu0 %v1099
    %1464 = vmatpush.bf16.msra.mxu0 %v1095
    %1465 = vmatpush.bf16.msra.mxu0 %v1091
    %1466 = vmatpush.bf16.msra.mxu0 %v1087
    %1467 = vmatpush.bf16.msra.mxu0 %v1083
    %1468 = vmatmul.bf16.gmra.mxu0 %v54
    %v1469 = vpop.f32.mrf.mxu0
    %v1470 = vadd.f32 %v1457, %v1469
    %v1471 = vpop.f32.mrf.mxu0
    %1472 = vdwg.mxu0
    %1473 = vmatpush.bf16.msra.mxu0 %v1143
    %1474 = vmatpush.bf16.msra.mxu0 %v1139
    %1475 = vmatpush.bf16.msra.mxu0 %v1135
    %1476 = vmatpush.bf16.msra.mxu0 %v1131
    %1477 = vmatpush.bf16.msra.mxu0 %v1127
    %1478 = vmatpush.bf16.msra.mxu0 %v1123
    %1479 = vmatpush.bf16.msra.mxu0 %v1119
    %1480 = vmatpush.bf16.msra.mxu0 %v1115
    %1481 = vmatmul.bf16.gmra.mxu0 %v55
    %v1482 = vpop.f32.mrf.mxu0
    %v1483 = vadd.f32 %v1470, %v1482
    %v1484 = vpop.f32.mrf.mxu0
    %1485 = vdwg.mxu0
    %1486 = vmatpush.bf16.msra.mxu0 %v1175
    %1487 = vmatpush.bf16.msra.mxu0 %v1171
    %1488 = vmatpush.bf16.msra.mxu0 %v1167
    %1489 = vmatpush.bf16.msra.mxu0 %v1163
    %1490 = vmatpush.bf16.msra.mxu0 %v1159
    %1491 = vmatpush.bf16.msra.mxu0 %v1155
    %1492 = vmatpush.bf16.msra.mxu0 %v1151
    %1493 = vmatpush.bf16.msra.mxu0 %v1147
    %1494 = vmatmul.bf16.gmra.mxu0 %v56
    %v1495 = vpop.f32.mrf.mxu0
    %v1496 = vadd.f32 %v1483, %v1495
    %v1497 = vpop.f32.mrf.mxu0
    %1498 = vdwg.mxu0
    %1499 = vmatpush.bf16.msra.mxu0 %v1207
    %1500 = vmatpush.bf16.msra.mxu0 %v1203
    %1501 = vmatpush.bf16.msra.mxu0 %v1199
    %1502 = vmatpush.bf16.msra.mxu0 %v1195
    %1503 = vmatpush.bf16.msra.mxu0 %v1191
    %1504 = vmatpush.bf16.msra.mxu0 %v1187
    %1505 = vmatpush.bf16.msra.mxu0 %v1183
    %1506 = vmatpush.bf16.msra.mxu0 %v1179
    %1507 = vmatmul.bf16.gmra.mxu0 %v57
    %v1508 = vpop.f32.mrf.mxu0
    %v1509 = vadd.f32 %v1496, %v1508
    %v1510 = vpop.f32.mrf.mxu0
    %1511 = vdwg.mxu0
    %1512 = vmatpush.bf16.msra.mxu0 %v1239
    %1513 = vmatpush.bf16.msra.mxu0 %v1235
    %1514 = vmatpush.bf16.msra.mxu0 %v1231
    %1515 = vmatpush.bf16.msra.mxu0 %v1227
    %1516 = vmatpush.bf16.msra.mxu0 %v1223
    %1517 = vmatpush.bf16.msra.mxu0 %v1219
    %1518 = vmatpush.bf16.msra.mxu0 %v1215
    %1519 = vmatpush.bf16.msra.mxu0 %v1211
    %1520 = vmatmul.bf16.gmra.mxu0 %v58
    %v1521 = vpop.f32.mrf.mxu0
    %v1522 = vadd.f32 %v1509, %v1521
    %v1523 = vpop.f32.mrf.mxu0
    %1524 = vdwg.mxu0
    %1525 = vmatpush.bf16.msra.mxu0 0
    %1526 = vmatpush.bf16.msra.mxu0 0
    %1527 = vmatpush.bf16.msra.mxu0 0
    %1528 = vmatpush.bf16.msra.mxu0 0
    %1529 = vmatpush.bf16.msra.mxu0 0
    %1530 = vmatpush.bf16.msra.mxu0 0
    %1531 = vmatpush.bf16.msra.mxu0 0
    %1532 = vmatpush.bf16.msra.mxu0 %v1243
    %1533 = vmatmul.bf16.gmra.mxu0 %v1445
    %v1534 = vpop.f32.mrf.mxu0
    %v1535 = vadd.f32 %v1522, %v1534
    %v1536 = vpop.f32.mrf.mxu0
    %1537 = vdwg.mxu0
    %1538 = vmatpush.bf16.msra.mxu0 %v1080
    %1539 = vmatpush.bf16.msra.mxu0 %v1076
    %1540 = vmatpush.bf16.msra.mxu0 %v1072
    %1541 = vmatpush.bf16.msra.mxu0 %v1068
    %1542 = vmatpush.bf16.msra.mxu0 %v1064
    %1543 = vmatpush.bf16.msra.mxu0 %v1060
    %1544 = vmatpush.bf16.msra.mxu0 %v1056
    %1545 = vmatpush.bf16.msra.mxu0 %v1052
    %1546 = vmatmul.bf16.gmra.mxu0 %v53
    %v1547 = vpop.f32.mrf.mxu0
    %v1548 = vadd.f32 %v145, %v1547
    %v1549 = vpop.f32.mrf.mxu0
    %1550 = vdwg.mxu0
    %1551 = vmatpush.bf16.msra.mxu0 %v1112
    %1552 = vmatpush.bf16.msra.mxu0 %v1108
    %1553 = vmatpush.bf16.msra.mxu0 %v1104
    %1554 = vmatpush.bf16.msra.mxu0 %v1100
    %1555 = vmatpush.bf16.msra.mxu0 %v1096
    %1556 = vmatpush.bf16.msra.mxu0 %v1092
    %1557 = vmatpush.bf16.msra.mxu0 %v1088
    %1558 = vmatpush.bf16.msra.mxu0 %v1084
    %1559 = vmatmul.bf16.gmra.mxu0 %v54
    %v1560 = vpop.f32.mrf.mxu0
    %v1561 = vadd.f32 %v1548, %v1560
    %v1562 = vpop.f32.mrf.mxu0
    %1563 = vdwg.mxu0
    %1564 = vmatpush.bf16.msra.mxu0 %v1144
    %1565 = vmatpush.bf16.msra.mxu0 %v1140
    %1566 = vmatpush.bf16.msra.mxu0 %v1136
    %1567 = vmatpush.bf16.msra.mxu0 %v1132
    %1568 = vmatpush.bf16.msra.mxu0 %v1128
    %1569 = vmatpush.bf16.msra.mxu0 %v1124
    %1570 = vmatpush.bf16.msra.mxu0 %v1120
    %1571 = vmatpush.bf16.msra.mxu0 %v1116
    %1572 = vmatmul.bf16.gmra.mxu0 %v55
    %v1573 = vpop.f32.mrf.mxu0
    %v1574 = vadd.f32 %v1561, %v1573
    %v1575 = vpop.f32.mrf.mxu0
    %1576 = vdwg.mxu0
    %1577 = vmatpush.bf16.msra.mxu0 %v1176
    %1578 = vmatpush.bf16.msra.mxu0 %v1172
    %1579 = vmatpush.bf16.msra.mxu0 %v1168
    %1580 = vmatpush.bf16.msra.mxu0 %v1164
    %1581 = vmatpush.bf16.msra.mxu0 %v1160
    %1582 = vmatpush.bf16.msra.mxu0 %v1156
    %1583 = vmatpush.bf16.msra.mxu0 %v1152
    %1584 = vmatpush.bf16.msra.mxu0 %v1148
    %1585 = vmatmul.bf16.gmra.mxu0 %v56
    %v1586 = vpop.f32.mrf.mxu0
    %v1587 = vadd.f32 %v1574, %v1586
    %v1588 = vpop.f32.mrf.mxu0
    %1589 = vdwg.mxu0
    %1590 = vmatpush.bf16.msra.mxu0 %v1208
    %1591 = vmatpush.bf16.msra.mxu0 %v1204
    %1592 = vmatpush.bf16.msra.mxu0 %v1200
    %1593 = vmatpush.bf16.msra.mxu0 %v1196
    %1594 = vmatpush.bf16.msra.mxu0 %v1192
    %1595 = vmatpush.bf16.msra.mxu0 %v1188
    %1596 = vmatpush.bf16.msra.mxu0 %v1184
    %1597 = vmatpush.bf16.msra.mxu0 %v1180
    %1598 = vmatmul.bf16.gmra.mxu0 %v57
    %v1599 = vpop.f32.mrf.mxu0
    %v1600 = vadd.f32 %v1587, %v1599
    %v1601 = vpop.f32.mrf.mxu0
    %1602 = vdwg.mxu0
    %1603 = vmatpush.bf16.msra.mxu0 %v1240
    %1604 = vmatpush.bf16.msra.mxu0 %v1236
    %1605 = vmatpush.bf16.msra.mxu0 %v1232
    %1606 = vmatpush.bf16.msra.mxu0 %v1228
    %1607 = vmatpush.bf16.msra.mxu0 %v1224
    %1608 = vmatpush.bf16.msra.mxu0 %v1220
    %1609 = vmatpush.bf16.msra.mxu0 %v1216
    %1610 = vmatpush.bf16.msra.mxu0 %v1212
    %1611 = vmatmul.bf16.gmra.mxu0 %v58
    %v1612 = vpop.f32.mrf.mxu0
    %v1613 = vadd.f32 %v1600, %v1612
    %v1614 = vpop.f32.mrf.mxu0
    %1615 = vdwg.mxu0
    %1616 = vmatpush.bf16.msra.mxu0 0
    %1617 = vmatpush.bf16.msra.mxu0 0
    %1618 = vmatpush.bf16.msra.mxu0 0
    %1619 = vmatpush.bf16.msra.mxu0 0
    %1620 = vmatpush.bf16.msra.mxu0 0
    %1621 = vmatpush.bf16.msra.mxu0 0
    %1622 = vmatpush.bf16.msra.mxu0 0
    %1623 = vmatpush.bf16.msra.mxu0 %v1244
    %1624 = vmatmul.bf16.gmra.mxu0 %v1445
    %v1625 = vpop.f32.mrf.mxu0
    %v1626 = vadd.f32 %v1613, %v1625
    %v1627 = vpop.f32.mrf.mxu0
    %1628 = vdwg.mxu0
    %1629 = vmatpush.bf16.msra.mxu0 %v1081
    %1630 = vmatpush.bf16.msra.mxu0 %v1077
    %1631 = vmatpush.bf16.msra.mxu0 %v1073
    %1632 = vmatpush.bf16.msra.mxu0 %v1069
    %1633 = vmatpush.bf16.msra.mxu0 %v1065
    %1634 = vmatpush.bf16.msra.mxu0 %v1061
    %1635 = vmatpush.bf16.msra.mxu0 %v1057
    %1636 = vmatpush.bf16.msra.mxu0 %v1053
    %1637 = vmatmul.bf16.gmra.mxu0 %v53
    %v1638 = vpop.f32.mrf.mxu0
    %v1639 = vadd.f32 %v165, %v1638
    %v1640 = vpop.f32.mrf.mxu0
    %1641 = vdwg.mxu0
    %1642 = vmatpush.bf16.msra.mxu0 %v1113
    %1643 = vmatpush.bf16.msra.mxu0 %v1109
    %1644 = vmatpush.bf16.msra.mxu0 %v1105
    %1645 = vmatpush.bf16.msra.mxu0 %v1101
    %1646 = vmatpush.bf16.msra.mxu0 %v1097
    %1647 = vmatpush.bf16.msra.mxu0 %v1093
    %1648 = vmatpush.bf16.msra.mxu0 %v1089
    %1649 = vmatpush.bf16.msra.mxu0 %v1085
    %1650 = vmatmul.bf16.gmra.mxu0 %v54
    %v1651 = vpop.f32.mrf.mxu0
    %v1652 = vadd.f32 %v1639, %v1651
    %v1653 = vpop.f32.mrf.mxu0
    %1654 = vdwg.mxu0
    %1655 = vmatpush.bf16.msra.mxu0 %v1145
    %1656 = vmatpush.bf16.msra.mxu0 %v1141
    %1657 = vmatpush.bf16.msra.mxu0 %v1137
    %1658 = vmatpush.bf16.msra.mxu0 %v1133
    %1659 = vmatpush.bf16.msra.mxu0 %v1129
    %1660 = vmatpush.bf16.msra.mxu0 %v1125
    %1661 = vmatpush.bf16.msra.mxu0 %v1121
    %1662 = vmatpush.bf16.msra.mxu0 %v1117
    %1663 = vmatmul.bf16.gmra.mxu0 %v55
    %v1664 = vpop.f32.mrf.mxu0
    %v1665 = vadd.f32 %v1652, %v1664
    %v1666 = vpop.f32.mrf.mxu0
    %1667 = vdwg.mxu0
    %1668 = vmatpush.bf16.msra.mxu0 %v1177
    %1669 = vmatpush.bf16.msra.mxu0 %v1173
    %1670 = vmatpush.bf16.msra.mxu0 %v1169
    %1671 = vmatpush.bf16.msra.mxu0 %v1165
    %1672 = vmatpush.bf16.msra.mxu0 %v1161
    %1673 = vmatpush.bf16.msra.mxu0 %v1157
    %1674 = vmatpush.bf16.msra.mxu0 %v1153
    %1675 = vmatpush.bf16.msra.mxu0 %v1149
    %1676 = vmatmul.bf16.gmra.mxu0 %v56
    %v1677 = vpop.f32.mrf.mxu0
    %v1678 = vadd.f32 %v1665, %v1677
    %v1679 = vpop.f32.mrf.mxu0
    %1680 = vdwg.mxu0
    %1681 = vmatpush.bf16.msra.mxu0 %v1209
    %1682 = vmatpush.bf16.msra.mxu0 %v1205
    %1683 = vmatpush.bf16.msra.mxu0 %v1201
    %1684 = vmatpush.bf16.msra.mxu0 %v1197
    %1685 = vmatpush.bf16.msra.mxu0 %v1193
    %1686 = vmatpush.bf16.msra.mxu0 %v1189
    %1687 = vmatpush.bf16.msra.mxu0 %v1185
    %1688 = vmatpush.bf16.msra.mxu0 %v1181
    %1689 = vmatmul.bf16.gmra.mxu0 %v57
    %v1690 = vpop.f32.mrf.mxu0
    %v1691 = vadd.f32 %v1678, %v1690
    %v1692 = vpop.f32.mrf.mxu0
    %1693 = vdwg.mxu0
    %1694 = vmatpush.bf16.msra.mxu0 %v1241
    %1695 = vmatpush.bf16.msra.mxu0 %v1237
    %1696 = vmatpush.bf16.msra.mxu0 %v1233
    %1697 = vmatpush.bf16.msra.mxu0 %v1229
    %1698 = vmatpush.bf16.msra.mxu0 %v1225
    %1699 = vmatpush.bf16.msra.mxu0 %v1221
    %1700 = vmatpush.bf16.msra.mxu0 %v1217
    %1701 = vmatpush.bf16.msra.mxu0 %v1213
    %1702 = vmatmul.bf16.gmra.mxu0 %v58
    %v1703 = vpop.f32.mrf.mxu0
    %v1704 = vadd.f32 %v1691, %v1703
    %v1705 = vpop.f32.mrf.mxu0
    %1706 = vdwg.mxu0
    %1707 = vmatpush.bf16.msra.mxu0 0
    %1708 = vmatpush.bf16.msra.mxu0 0
    %1709 = vmatpush.bf16.msra.mxu0 0
    %1710 = vmatpush.bf16.msra.mxu0 0
    %1711 = vmatpush.bf16.msra.mxu0 0
    %1712 = vmatpush.bf16.msra.mxu0 0
    %1713 = vmatpush.bf16.msra.mxu0 0
    %1714 = vmatpush.bf16.msra.mxu0 %v1245
    %1715 = vmatmul.bf16.gmra.mxu0 %v1445
    %v1716 = vpop.f32.mrf.mxu0
    %v1717 = vadd.f32 %v1704, %v1716
    %v1718 = vpop.f32.mrf.mxu0
    %1719 = vdwg.mxu0
    %1720 = vmatpush.bf16.msra.mxu0 %v1082
    %1721 = vmatpush.bf16.msra.mxu0 %v1078
    %1722 = vmatpush.bf16.msra.mxu0 %v1074
    %1723 = vmatpush.bf16.msra.mxu0 %v1070
    %1724 = vmatpush.bf16.msra.mxu0 %v1066
    %1725 = vmatpush.bf16.msra.mxu0 %v1062
    %1726 = vmatpush.bf16.msra.mxu0 %v1058
    %1727 = vmatpush.bf16.msra.mxu0 %v1054
    %1728 = vmatmul.bf16.gmra.mxu0 %v53
    %v1729 = vpop.f32.mrf.mxu0
    %v1730 = vadd.f32 %v185, %v1729
    %v1731 = vpop.f32.mrf.mxu0
    %1732 = vdwg.mxu0
    %1733 = vmatpush.bf16.msra.mxu0 %v1114
    %1734 = vmatpush.bf16.msra.mxu0 %v1110
    %1735 = vmatpush.bf16.msra.mxu0 %v1106
    %1736 = vmatpush.bf16.msra.mxu0 %v1102
    %1737 = vmatpush.bf16.msra.mxu0 %v1098
    %1738 = vmatpush.bf16.msra.mxu0 %v1094
    %1739 = vmatpush.bf16.msra.mxu0 %v1090
    %1740 = vmatpush.bf16.msra.mxu0 %v1086
    %1741 = vmatmul.bf16.gmra.mxu0 %v54
    %v1742 = vpop.f32.mrf.mxu0
    %v1743 = vadd.f32 %v1730, %v1742
    %v1744 = vpop.f32.mrf.mxu0
    %1745 = vdwg.mxu0
    %1746 = vmatpush.bf16.msra.mxu0 %v1146
    %1747 = vmatpush.bf16.msra.mxu0 %v1142
    %1748 = vmatpush.bf16.msra.mxu0 %v1138
    %1749 = vmatpush.bf16.msra.mxu0 %v1134
    %1750 = vmatpush.bf16.msra.mxu0 %v1130
    %1751 = vmatpush.bf16.msra.mxu0 %v1126
    %1752 = vmatpush.bf16.msra.mxu0 %v1122
    %1753 = vmatpush.bf16.msra.mxu0 %v1118
    %1754 = vmatmul.bf16.gmra.mxu0 %v55
    %v1755 = vpop.f32.mrf.mxu0
    %v1756 = vadd.f32 %v1743, %v1755
    %v1757 = vpop.f32.mrf.mxu0
    %1758 = vdwg.mxu0
    %1759 = vmatpush.bf16.msra.mxu0 %v1178
    %1760 = vmatpush.bf16.msra.mxu0 %v1174
    %1761 = vmatpush.bf16.msra.mxu0 %v1170
    %1762 = vmatpush.bf16.msra.mxu0 %v1166
    %1763 = vmatpush.bf16.msra.mxu0 %v1162
    %1764 = vmatpush.bf16.msra.mxu0 %v1158
    %1765 = vmatpush.bf16.msra.mxu0 %v1154
    %1766 = vmatpush.bf16.msra.mxu0 %v1150
    %1767 = vmatmul.bf16.gmra.mxu0 %v56
    %v1768 = vpop.f32.mrf.mxu0
    %v1769 = vadd.f32 %v1756, %v1768
    %v1770 = vpop.f32.mrf.mxu0
    %1771 = vdwg.mxu0
    %1772 = vmatpush.bf16.msra.mxu0 %v1210
    %1773 = vmatpush.bf16.msra.mxu0 %v1206
    %1774 = vmatpush.bf16.msra.mxu0 %v1202
    %1775 = vmatpush.bf16.msra.mxu0 %v1198
    %1776 = vmatpush.bf16.msra.mxu0 %v1194
    %1777 = vmatpush.bf16.msra.mxu0 %v1190
    %1778 = vmatpush.bf16.msra.mxu0 %v1186
    %1779 = vmatpush.bf16.msra.mxu0 %v1182
    %1780 = vmatmul.bf16.gmra.mxu0 %v57
    %v1781 = vpop.f32.mrf.mxu0
    %v1782 = vadd.f32 %v1769, %v1781
    %v1783 = vpop.f32.mrf.mxu0
    %1784 = vdwg.mxu0
    %1785 = vmatpush.bf16.msra.mxu0 %v1242
    %1786 = vmatpush.bf16.msra.mxu0 %v1238
    %1787 = vmatpush.bf16.msra.mxu0 %v1234
    %1788 = vmatpush.bf16.msra.mxu0 %v1230
    %1789 = vmatpush.bf16.msra.mxu0 %v1226
    %1790 = vmatpush.bf16.msra.mxu0 %v1222
    %1791 = vmatpush.bf16.msra.mxu0 %v1218
    %1792 = vmatpush.bf16.msra.mxu0 %v1214
    %1793 = vmatmul.bf16.gmra.mxu0 %v58
    %v1794 = vpop.f32.mrf.mxu0
    %v1795 = vadd.f32 %v1782, %v1794
    %v1796 = vpop.f32.mrf.mxu0
    %1797 = vdwg.mxu0
    %1798 = vmatpush.bf16.msra.mxu0 0
    %1799 = vmatpush.bf16.msra.mxu0 0
    %1800 = vmatpush.bf16.msra.mxu0 0
    %1801 = vmatpush.bf16.msra.mxu0 0
    %1802 = vmatpush.bf16.msra.mxu0 0
    %1803 = vmatpush.bf16.msra.mxu0 0
    %1804 = vmatpush.bf16.msra.mxu0 0
    %1805 = vmatpush.bf16.msra.mxu0 %v1246
    %1806 = vmatmul.bf16.gmra.mxu0 %v1445
    %v1807 = vpop.f32.mrf.mxu0
    %v1808 = vadd.f32 %v1795, %v1807
    %v1809 = vpop.f32.mrf.mxu0
    %1810 = vdwg.mxu0
    %v1811 = vld [vmem:[%s5] sm:$0xf]
    %v1813 = vperm.slane %v1811, 0
    %v1814 = vperm.slane %v1811, 1
    %v1815 = vperm.slane %v1811, 2
    %v1816 = vperm.slane %v1811, 3
    %v1821 = vadd.f32 %v1535, %v1813
    %v1822 = vadd.f32 %v1626, %v1814
    %v1823 = vadd.f32 %v1717, %v1815
    %v1824 = vadd.f32 %v1808, %v1816
    %v1825 = vmax.f32 %v1821, 0.0
    %v1826 = vmax.f32 %v1822, 0.0
    %v1827 = vmax.f32 %v1823, 0.0
    %v1828 = vmax.f32 %v1824, 0.0
    %v1829 = vpack.c.bf16 %v1825, %v1825
    %v1830 = vpack.c.bf16 %v1826, %v1826
    %v1831 = vpack.c.bf16 %v1827, %v1827
    %v1832 = vpack.c.bf16 %v1828, %v1828
    %v1833 = vld [vmem:[%s6] sm:$0xf]
    %v1834 = vld [vmem:[%s6 + $0x4] sm:$0xf]
    %v1835 = vld [vmem:[%s6 + $0x8] sm:$0xf]
    %v1836 = vld [vmem:[%s6 + $0xc] sm:$0xf]
    %v1837 = vld [vmem:[%s6 + $0x10] sm:$0xf]
    %v1838 = vld [vmem:[%s6 + $0x14] sm:$0xf]
    %v1839 = vld [vmem:[%s6 + $0x18] sm:$0xf]
    %v1840 = vld [vmem:[%s6 + $0x1c] sm:$0xf]
    %v1841 = vld [vmem:[%s6 + $0x20] sm:$0xf]
    %v1842 = vld [vmem:[%s6 + $0x24] sm:$0xf]
    %v1843 = vld [vmem:[%s6 + $0x28] sm:$0xf]
    %v1844 = vld [vmem:[%s6 + $0x2c] sm:$0xf]
    %v1845 = vld [vmem:[%s6 + $0x30] sm:$0xf]
    %v1846 = vld [vmem:[%s6 + $0x34] sm:$0xf]
    %v1847 = vld [vmem:[%s6 + $0x38] sm:$0xf]
    %v1848 = vld [vmem:[%s6 + $0x3c] sm:$0xf]
    %v1849 = vld [vmem:[%s6 + $0x40] sm:$0xf]
    %v1850 = vld [vmem:[%s6 + $0x44] sm:$0xf]
    %v1851 = vld [vmem:[%s6 + $0x48] sm:$0xf]
    %v1852 = vld [vmem:[%s6 + $0x4c] sm:$0xf]
    %v1853 = vld [vmem:[%s6 + $0x50] sm:$0xf]
    %v1854 = vld [vmem:[%s6 + $0x54] sm:$0xf]
    %v1855 = vld [vmem:[%s6 + $0x58] sm:$0xf]
    %v1856 = vld [vmem:[%s6 + $0x5c] sm:$0xf]
    %v1857 = vld [vmem:[%s6 + $0x60] sm:$0xf]
    %v1858 = vld [vmem:[%s6 + $0x64] sm:$0xf]
    %v1859 = vld [vmem:[%s6 + $0x68] sm:$0xf]
    %v1860 = vld [vmem:[%s6 + $0x6c] sm:$0xf]
    %v1861 = vld [vmem:[%s6 + $0x70] sm:$0xf]
    %v1862 = vld [vmem:[%s6 + $0x74] sm:$0xf]
    %v1863 = vld [vmem:[%s6 + $0x78] sm:$0xf]
    %v1864 = vld [vmem:[%s6 + $0x7c] sm:$0xf]
    %v1865 = vld [vmem:[%s6 + $0x80] sm:$0xf]
    %v1866 = vld [vmem:[%s6 + $0x84] sm:$0xf]
    %v1867 = vld [vmem:[%s6 + $0x88] sm:$0xf]
    %v1868 = vld [vmem:[%s6 + $0x8c] sm:$0xf]
    %v1869 = vld [vmem:[%s6 + $0x90] sm:$0xf]
    %v1870 = vld [vmem:[%s6 + $0x94] sm:$0xf]
    %v1871 = vld [vmem:[%s6 + $0x98] sm:$0xf]
    %v1872 = vld [vmem:[%s6 + $0x9c] sm:$0xf]
    %v1873 = vld [vmem:[%s6 + $0xa0] sm:$0xf]
    %v1874 = vld [vmem:[%s6 + $0xa4] sm:$0xf]
    %v1875 = vld [vmem:[%s6 + $0xa8] sm:$0xf]
    %v1876 = vld [vmem:[%s6 + $0xac] sm:$0xf]
    %v1877 = vld [vmem:[%s6 + $0xb0] sm:$0xf]
    %v1878 = vld [vmem:[%s6 + $0xb4] sm:$0xf]
    %v1879 = vld [vmem:[%s6 + $0xb8] sm:$0xf]
    %v1880 = vld [vmem:[%s6 + $0xbc] sm:$0xf]
    %v1881 = vld [vmem:[%s6 + $0xc0] sm:$0xf]
    %v1882 = vld [vmem:[%s6 + $0xc4] sm:$0xf]
    %v1883 = vld [vmem:[%s7] sm:$0x1]
    %v1885 = vperm.slane %v1883, 0
    %v1937 = vunpack.c.l.b16 %v1833
    %v1938 = vunpack.c.l.b16 %v1834
    %v1939 = vunpack.c.l.b16 %v1835
    %v1940 = vunpack.c.l.b16 %v1836
    %v1941 = vunpack.c.l.b16 %v1837
    %v1942 = vunpack.c.l.b16 %v1838
    %v1943 = vunpack.c.l.b16 %v1839
    %v1944 = vunpack.c.l.b16 %v1840
    %v1945 = vunpack.c.l.b16 %v1841
    %v1946 = vunpack.c.l.b16 %v1842
    %v1947 = vunpack.c.l.b16 %v1843
    %v1948 = vunpack.c.l.b16 %v1844
    %v1949 = vunpack.c.l.b16 %v1845
    %v1950 = vunpack.c.l.b16 %v1846
    %v1951 = vunpack.c.l.b16 %v1847
    %v1952 = vunpack.c.l.b16 %v1848
    %v1953 = vunpack.c.l.b16 %v1849
    %v1954 = vunpack.c.l.b16 %v1850
    %v1955 = vunpack.c.l.b16 %v1851
    %v1956 = vunpack.c.l.b16 %v1852
    %v1957 = vunpack.c.l.b16 %v1853
    %v1958 = vunpack.c.l.b16 %v1854
    %v1959 = vunpack.c.l.b16 %v1855
    %v1960 = vunpack.c.l.b16 %v1856
    %v1961 = vunpack.c.l.b16 %v1857
    %v1962 = vunpack.c.l.b16 %v1858
    %v1963 = vunpack.c.l.b16 %v1859
    %v1964 = vunpack.c.l.b16 %v1860
    %v1965 = vunpack.c.l.b16 %v1861
    %v1966 = vunpack.c.l.b16 %v1862
    %v1967 = vunpack.c.l.b16 %v1863
    %v1968 = vunpack.c.l.b16 %v1864
    %v1969 = vunpack.c.l.b16 %v1865
    %v1970 = vunpack.c.l.b16 %v1866
    %v1971 = vunpack.c.l.b16 %v1867
    %v1972 = vunpack.c.l.b16 %v1868
    %v1973 = vunpack.c.l.b16 %v1869
    %v1974 = vunpack.c.l.b16 %v1870
    %v1975 = vunpack.c.l.b16 %v1871
    %v1976 = vunpack.c.l.b16 %v1872
    %v1977 = vunpack.c.l.b16 %v1873
    %v1978 = vunpack.c.l.b16 %v1874
    %v1979 = vunpack.c.l.b16 %v1875
    %v1980 = vunpack.c.l.b16 %v1876
    %v1981 = vunpack.c.l.b16 %v1877
    %v1982 = vunpack.c.l.b16 %v1878
    %v1983 = vunpack.c.l.b16 %v1879
    %v1984 = vunpack.c.l.b16 %v1880
    %v1985 = vunpack.c.l.b16 %v1881
    %v1986 = vunpack.c.l.b16 %v1882
    %v1987 = vpack.c.b16 %v1938, %v1937
    %v1988 = vpack.c.b16 %v1940, %v1939
    %v1989 = vpack.c.b16 %v1942, %v1941
    %v1990 = vpack.c.b16 %v1944, %v1943
    %v1991 = vpack.c.b16 %v1946, %v1945
    %v1992 = vpack.c.b16 %v1948, %v1947
    %v1993 = vpack.c.b16 %v1950, %v1949
    %v1994 = vpack.c.b16 %v1952, %v1951
    %v1995 = vpack.c.b16 %v1954, %v1953
    %v1996 = vpack.c.b16 %v1956, %v1955
    %v1997 = vpack.c.b16 %v1958, %v1957
    %v1998 = vpack.c.b16 %v1960, %v1959
    %v1999 = vpack.c.b16 %v1962, %v1961
    %v2000 = vpack.c.b16 %v1964, %v1963
    %v2001 = vpack.c.b16 %v1966, %v1965
    %v2002 = vpack.c.b16 %v1968, %v1967
    %v2003 = vpack.c.b16 %v1970, %v1969
    %v2004 = vpack.c.b16 %v1972, %v1971
    %v2005 = vpack.c.b16 %v1974, %v1973
    %v2006 = vpack.c.b16 %v1976, %v1975
    %v2007 = vpack.c.b16 %v1978, %v1977
    %v2008 = vpack.c.b16 %v1980, %v1979
    %v2009 = vpack.c.b16 %v1982, %v1981
    %v2010 = vpack.c.b16 %v1984, %v1983
    %v2011 = vpack.c.b16 %v1986, %v1985
    %v2038 = vsel %vm1443, %v1832, 0
    %2040 = vmatpush.bf16.msra.mxu0 %v1994
    %2041 = vmatpush.bf16.msra.mxu0 %v1993
    %2042 = vmatpush.bf16.msra.mxu0 %v1992
    %2043 = vmatpush.bf16.msra.mxu0 %v1991
    %2044 = vmatpush.bf16.msra.mxu0 %v1990
    %2045 = vmatpush.bf16.msra.mxu0 %v1989
    %2046 = vmatpush.bf16.msra.mxu0 %v1988
    %2047 = vmatpush.bf16.msra.mxu0 %v1987
    %2048 = vmatmul.bf16.gmra.mxu0 %v1829
    %v2049 = vpop.f32.mrf.mxu0
    %v2050 = vadd.f32 %v1885, %v2049
    %v2051 = vpop.f32.mrf.mxu0
    %2052 = vdwg.mxu0
    %2053 = vmatpush.bf16.msra.mxu0 %v2002
    %2054 = vmatpush.bf16.msra.mxu0 %v2001
    %2055 = vmatpush.bf16.msra.mxu0 %v2000
    %2056 = vmatpush.bf16.msra.mxu0 %v1999
    %2057 = vmatpush.bf16.msra.mxu0 %v1998
    %2058 = vmatpush.bf16.msra.mxu0 %v1997
    %2059 = vmatpush.bf16.msra.mxu0 %v1996
    %2060 = vmatpush.bf16.msra.mxu0 %v1995
    %2061 = vmatmul.bf16.gmra.mxu0 %v1830
    %v2062 = vpop.f32.mrf.mxu0
    %v2063 = vadd.f32 %v2050, %v2062
    %v2064 = vpop.f32.mrf.mxu0
    %2065 = vdwg.mxu0
    %2066 = vmatpush.bf16.msra.mxu0 %v2010
    %2067 = vmatpush.bf16.msra.mxu0 %v2009
    %2068 = vmatpush.bf16.msra.mxu0 %v2008
    %2069 = vmatpush.bf16.msra.mxu0 %v2007
    %2070 = vmatpush.bf16.msra.mxu0 %v2006
    %2071 = vmatpush.bf16.msra.mxu0 %v2005
    %2072 = vmatpush.bf16.msra.mxu0 %v2004
    %2073 = vmatpush.bf16.msra.mxu0 %v2003
    %2074 = vmatmul.bf16.gmra.mxu0 %v1831
    %v2075 = vpop.f32.mrf.mxu0
    %v2076 = vadd.f32 %v2063, %v2075
    %v2077 = vpop.f32.mrf.mxu0
    %2078 = vdwg.mxu0
    %2079 = vmatpush.bf16.msra.mxu0 0
    %2080 = vmatpush.bf16.msra.mxu0 0
    %2081 = vmatpush.bf16.msra.mxu0 0
    %2082 = vmatpush.bf16.msra.mxu0 0
    %2083 = vmatpush.bf16.msra.mxu0 0
    %2084 = vmatpush.bf16.msra.mxu0 0
    %2085 = vmatpush.bf16.msra.mxu0 0
    %2086 = vmatpush.bf16.msra.mxu0 %v2011
    %2087 = vmatmul.bf16.gmra.mxu0 %v2038
    %v2088 = vpop.f32.mrf.mxu0
    %v2089 = vadd.f32 %v2076, %v2088
    %v2090 = vpop.f32.mrf.mxu0
    %2091 = vdwg.mxu0
    %2092 = vst [vmem:[#allocation4] sm:$0xff] %v2089
    %v2093 = vmul.f32 %v2089, 0.5
    %v2094 = vmul.f32 %v2093, 1.442695
    %v2095 = vpow.pop %v2094
    %2097 = vrot.lane.b32.xlu0 %v2095, 108
    %v2098 = vpop.permute.xlu0 %2097
    %v2100 = vmul.f32 %v61, %v2098
    %v2101 = vadd.f32 %v2100, %v2089
    %v2102 = vld [vmem:[%s8] sm:$0xff]
    %v2103 = vld [vmem:[%s8 + $0x8] sm:$0xff]
    %v2104 = vld [vmem:[%s8 + $0x10] sm:$0xff]
    %v2105 = vld [vmem:[%s8 + $0x18] sm:$0xff]
    %v2106 = vld [vmem:[%s8 + $0x20] sm:$0xff]
    %v2107 = vld [vmem:[%s8 + $0x28] sm:$0xff]
    %v2108 = vld [vmem:[%s8 + $0x30] sm:$0xff]
    %v2109 = vld [vmem:[%s8 + $0x38] sm:$0xff]
    %v2110 = vld [vmem:[%s8 + $0x40] sm:$0xf]
    %v2111 = vld [vmem:[%s8 + $0x48] sm:$0xf]
    %v2112 = vld [vmem:[%s8 + $0x50] sm:$0xf]
    %v2113 = vld [vmem:[%s8 + $0x58] sm:$0xf]
    %vm2114 = vcmask 162816
    %v2116 = vsel %vm2114, %v2101, 0
    %vm2118 = vcmask 1043456
    %v2120 = vsel %vm2118, %v2110, 0
    %v2123 = vsel %vm2118, %v2111, 0
    %v2126 = vsel %vm2118, %v2112, 0
    %v2129 = vsel %vm2118, %v2113, 0
    %2131 = vmatpush.msra.mxu0 0.0
    %2132 = vmatpush.msra.mxu0 0.0
    %2133 = vmatpush.msra.mxu0 0.0
    %2134 = vmatpush.msra.mxu0 0.0
    %2135 = vmatpush.msra.mxu0 0.0
    %2136 = vmatpush.msra.mxu0 0.0
    %2137 = vmatpush.msra.mxu0 0.0
    %2138 = vmatpush.msra.mxu0 0.0
    %2139 = vmatpush.msra.mxu0 0.0
    %2140 = vmatpush.msra.mxu0 0.0
    %2141 = vmatpush.msra.mxu0 0.0
    %2142 = vmatpush.msra.mxu0 0.0
    %2143 = vmatpush.msra.mxu0 0.0
    %2144 = vmatpush.msra.mxu0 %v2120
    %2145 = vmatpush.msra.mxu0 %v2106
    %2146 = vmatpush.msra.mxu0 %v2102
    %2147 = vmatmul.f32.gmra.mxu0 %v2116
    %v2148 = vpop.f32.mrf.mxu0
    %v2149 = vadd.f32 %v205, %v2148
    %2150 = vdwg.mxu0
    %2151 = vmatpush.msra.mxu0 0.0
    %2152 = vmatpush.msra.mxu0 0.0
    %2153 = vmatpush.msra.mxu0 0.0
    %2154 = vmatpush.msra.mxu0 0.0
    %2155 = vmatpush.msra.mxu0 0.0
    %2156 = vmatpush.msra.mxu0 0.0
    %2157 = vmatpush.msra.mxu0 0.0
    %2158 = vmatpush.msra.mxu0 0.0
    %2159 = vmatpush.msra.mxu0 0.0
    %2160 = vmatpush.msra.mxu0 0.0
    %2161 = vmatpush.msra.mxu0 0.0
    %2162 = vmatpush.msra.mxu0 0.0
    %2163 = vmatpush.msra.mxu0 0.0
    %2164 = vmatpush.msra.mxu0 %v2123
    %2165 = vmatpush.msra.mxu0 %v2107
    %2166 = vmatpush.msra.mxu0 %v2103
    %2167 = vmatmul.f32.gmra.mxu0 %v2116
    %v2168 = vpop.f32.mrf.mxu0
    %v2169 = vadd.f32 %v225, %v2168
    %2170 = vdwg.mxu0
    %2171 = vmatpush.msra.mxu0 0.0
    %2172 = vmatpush.msra.mxu0 0.0
    %2173 = vmatpush.msra.mxu0 0.0
    %2174 = vmatpush.msra.mxu0 0.0
    %2175 = vmatpush.msra.mxu0 0.0
    %2176 = vmatpush.msra.mxu0 0.0
    %2177 = vmatpush.msra.mxu0 0.0
    %2178 = vmatpush.msra.mxu0 0.0
    %2179 = vmatpush.msra.mxu0 0.0
    %2180 = vmatpush.msra.mxu0 0.0
    %2181 = vmatpush.msra.mxu0 0.0
    %2182 = vmatpush.msra.mxu0 0.0
    %2183 = vmatpush.msra.mxu0 0.0
    %2184 = vmatpush.msra.mxu0 %v2126
    %2185 = vmatpush.msra.mxu0 %v2108
    %2186 = vmatpush.msra.mxu0 %v2104
    %2187 = vmatmul.f32.gmra.mxu0 %v2116
    %v2188 = vpop.f32.mrf.mxu0
    %v2189 = vadd.f32 %v245, %v2188
    %2190 = vdwg.mxu0
    %2191 = vmatpush.msra.mxu0 0.0
    %2192 = vmatpush.msra.mxu0 0.0
    %2193 = vmatpush.msra.mxu0 0.0
    %2194 = vmatpush.msra.mxu0 0.0
    %2195 = vmatpush.msra.mxu0 0.0
    %2196 = vmatpush.msra.mxu0 0.0
    %2197 = vmatpush.msra.mxu0 0.0
    %2198 = vmatpush.msra.mxu0 0.0
    %2199 = vmatpush.msra.mxu0 0.0
    %2200 = vmatpush.msra.mxu0 0.0
    %2201 = vmatpush.msra.mxu0 0.0
    %2202 = vmatpush.msra.mxu0 0.0
    %2203 = vmatpush.msra.mxu0 0.0
    %2204 = vmatpush.msra.mxu0 %v2129
    %2205 = vmatpush.msra.mxu0 %v2109
    %2206 = vmatpush.msra.mxu0 %v2105
    %2207 = vmatmul.f32.gmra.mxu0 %v2116
    %v2208 = vpop.f32.mrf.mxu0
    %v2209 = vadd.f32 %v265, %v2208
    %2210 = vdwg.mxu0
    %v2211 = vld [vmem:[%s9] sm:$0xf]
    %v2213 = vperm.slane %v2211, 0
    %v2214 = vperm.slane %v2211, 1
    %v2215 = vperm.slane %v2211, 2
    %v2216 = vperm.slane %v2211, 3
    %v2221 = vadd.f32 %v2149, %v2213
    %v2222 = vadd.f32 %v2169, %v2214
    %v2223 = vadd.f32 %v2189, %v2215
    %v2224 = vadd.f32 %v2209, %v2216
    %v2225 = vmax.f32 %v2221, 0.0
    %v2226 = vmax.f32 %v2222, 0.0
    %v2227 = vmax.f32 %v2223, 0.0
    %v2228 = vmax.f32 %v2224, 0.0
    %v2229 = vpack.c.bf16 %v2225, %v2225
    %v2230 = vpack.c.bf16 %v2226, %v2226
    %v2231 = vpack.c.bf16 %v2227, %v2227
    %v2232 = vpack.c.bf16 %v2228, %v2228
    %v2233 = vld [vmem:[%s10] sm:$0xff]
    %v2234 = vld [vmem:[%s10 + $0x8] sm:$0xff]
    %v2235 = vld [vmem:[%s10 + $0x10] sm:$0xff]
    %v2236 = vld [vmem:[%s10 + $0x18] sm:$0xf]
    %v2237 = vld [vmem:[%s10 + $0x1c] sm:$0xff]
    %v2238 = vld [vmem:[%s10 + $0x24] sm:$0xff]
    %v2239 = vld [vmem:[%s10 + $0x2c] sm:$0xff]
    %v2240 = vld [vmem:[%s10 + $0x34] sm:$0xf]
    %v2241 = vld [vmem:[%s10 + $0x38] sm:$0xff]
    %v2242 = vld [vmem:[%s10 + $0x40] sm:$0xff]
    %v2243 = vld [vmem:[%s10 + $0x48] sm:$0xff]
    %v2244 = vld [vmem:[%s10 + $0x50] sm:$0xf]
    %v2245 = vld [vmem:[%s10 + $0x54] sm:$0xff]
    %v2246 = vld [vmem:[%s10 + $0x5c] sm:$0xff]
    %v2247 = vld [vmem:[%s10 + $0x64] sm:$0xff]
    %v2248 = vld [vmem:[%s10 + $0x6c] sm:$0xf]
    %v2249 = vld [vmem:[%s10 + $0x70] sm:$0xff]
    %v2250 = vld [vmem:[%s10 + $0x78] sm:$0xff]
    %v2251 = vld [vmem:[%s10 + $0x80] sm:$0xff]
    %v2252 = vld [vmem:[%s10 + $0x88] sm:$0xf]
    %v2253 = vld [vmem:[%s10 + $0x8c] sm:$0xff]
    %v2254 = vld [vmem:[%s10 + $0x94] sm:$0xff]
    %v2255 = vld [vmem:[%s10 + $0x9c] sm:$0xff]
    %v2256 = vld [vmem:[%s10 + $0xa4] sm:$0xf]
    %v2257 = vld [vmem:[%s10 + $0xa8] sm:$0xff]
    %v2258 = vld [vmem:[%s10 + $0xb0] sm:$0xff]
    %v2259 = vld [vmem:[%s10 + $0xb8] sm:$0xff]
    %v2260 = vld [vmem:[%s10 + $0xc0] sm:$0xf]
    %v2261 = vld [vmem:[%s10 + $0xc4] sm:$0xff]
    %v2262 = vld [vmem:[%s10 + $0xcc] sm:$0xff]
    %v2263 = vld [vmem:[%s10 + $0xd4] sm:$0xff]
    %v2264 = vld [vmem:[%s10 + $0xdc] sm:$0xf]
    %v2265 = vld [vmem:[%s10 + $0xe0] sm:$0xff]
    %v2266 = vld [vmem:[%s10 + $0xe8] sm:$0xff]
    %v2267 = vld [vmem:[%s10 + $0xf0] sm:$0xff]
    %v2268 = vld [vmem:[%s10 + $0xf8] sm:$0xf]
    %v2269 = vld [vmem:[%s10 + $0xfc] sm:$0xff]
    %v2270 = vld [vmem:[%s10 + $0x104] sm:$0xff]
    %v2271 = vld [vmem:[%s10 + $0x10c] sm:$0xff]
    %v2272 = vld [vmem:[%s10 + $0x114] sm:$0xf]
    %v2273 = vld [vmem:[%s10 + $0x118] sm:$0xff]
    %v2274 = vld [vmem:[%s10 + $0x120] sm:$0xff]
    %v2275 = vld [vmem:[%s10 + $0x128] sm:$0xff]
    %v2276 = vld [vmem:[%s10 + $0x130] sm:$0xf]
    %v2277 = vld [vmem:[%s10 + $0x134] sm:$0xff]
    %v2278 = vld [vmem:[%s10 + $0x13c] sm:$0xff]
    %v2279 = vld [vmem:[%s10 + $0x144] sm:$0xff]
    %v2280 = vld [vmem:[%s10 + $0x14c] sm:$0xf]
    %v2281 = vld [vmem:[%s10 + $0x150] sm:$0xff]
    %v2282 = vld [vmem:[%s10 + $0x158] sm:$0xff]
    %v2283 = vld [vmem:[%s10 + $0x160] sm:$0xff]
    %v2284 = vld [vmem:[%s10 + $0x168] sm:$0xf]
    %v2285 = vld [vmem:[%s10 + $0x16c] sm:$0xff]
    %v2286 = vld [vmem:[%s10 + $0x174] sm:$0xff]
    %v2287 = vld [vmem:[%s10 + $0x17c] sm:$0xff]
    %v2288 = vld [vmem:[%s10 + $0x184] sm:$0xf]
    %v2289 = vld [vmem:[%s10 + $0x188] sm:$0xff]
    %v2290 = vld [vmem:[%s10 + $0x190] sm:$0xff]
    %v2291 = vld [vmem:[%s10 + $0x198] sm:$0xff]
    %v2292 = vld [vmem:[%s10 + $0x1a0] sm:$0xf]
    %v2293 = vld [vmem:[%s10 + $0x1a4] sm:$0xff]
    %v2294 = vld [vmem:[%s10 + $0x1ac] sm:$0xff]
    %v2295 = vld [vmem:[%s10 + $0x1b4] sm:$0xff]
    %v2296 = vld [vmem:[%s10 + $0x1bc] sm:$0xf]
    %v2297 = vld [vmem:[%s10 + $0x1c0] sm:$0xff]
    %v2298 = vld [vmem:[%s10 + $0x1c8] sm:$0xff]
    %v2299 = vld [vmem:[%s10 + $0x1d0] sm:$0xff]
    %v2300 = vld [vmem:[%s10 + $0x1d8] sm:$0xf]
    %v2301 = vld [vmem:[%s10 + $0x1dc] sm:$0xff]
    %v2302 = vld [vmem:[%s10 + $0x1e4] sm:$0xff]
    %v2303 = vld [vmem:[%s10 + $0x1ec] sm:$0xff]
    %v2304 = vld [vmem:[%s10 + $0x1f4] sm:$0xf]
    %v2305 = vld [vmem:[%s10 + $0x1f8] sm:$0xff]
    %v2306 = vld [vmem:[%s10 + $0x200] sm:$0xff]
    %v2307 = vld [vmem:[%s10 + $0x208] sm:$0xff]
    %v2308 = vld [vmem:[%s10 + $0x210] sm:$0xf]
    %v2309 = vld [vmem:[%s10 + $0x214] sm:$0xff]
    %v2310 = vld [vmem:[%s10 + $0x21c] sm:$0xff]
    %v2311 = vld [vmem:[%s10 + $0x224] sm:$0xff]
    %v2312 = vld [vmem:[%s10 + $0x22c] sm:$0xf]
    %v2313 = vld [vmem:[%s10 + $0x230] sm:$0xff]
    %v2314 = vld [vmem:[%s10 + $0x238] sm:$0xff]
    %v2315 = vld [vmem:[%s10 + $0x240] sm:$0xff]
    %v2316 = vld [vmem:[%s10 + $0x248] sm:$0xf]
    %v2317 = vld [vmem:[%s10 + $0x24c] sm:$0xff]
    %v2318 = vld [vmem:[%s10 + $0x254] sm:$0xff]
    %v2319 = vld [vmem:[%s10 + $0x25c] sm:$0xff]
    %v2320 = vld [vmem:[%s10 + $0x264] sm:$0xf]
    %v2321 = vld [vmem:[%s10 + $0x268] sm:$0xff]
    %v2322 = vld [vmem:[%s10 + $0x270] sm:$0xff]
    %v2323 = vld [vmem:[%s10 + $0x278] sm:$0xff]
    %v2324 = vld [vmem:[%s10 + $0x280] sm:$0xf]
    %v2325 = vld [vmem:[%s10 + $0x284] sm:$0xff]
    %v2326 = vld [vmem:[%s10 + $0x28c] sm:$0xff]
    %v2327 = vld [vmem:[%s10 + $0x294] sm:$0xff]
    %v2328 = vld [vmem:[%s10 + $0x29c] sm:$0xf]
    %v2329 = vld [vmem:[%s10 + $0x2a0] sm:$0xff]
    %v2330 = vld [vmem:[%s10 + $0x2a8] sm:$0xff]
    %v2331 = vld [vmem:[%s10 + $0x2b0] sm:$0xff]
    %v2332 = vld [vmem:[%s10 + $0x2b8] sm:$0xf]
    %v2333 = vld [vmem:[%s10 + $0x2bc] sm:$0xff]
    %v2334 = vld [vmem:[%s10 + $0x2c4] sm:$0xff]
    %v2335 = vld [vmem:[%s10 + $0x2cc] sm:$0xff]
    %v2336 = vld [vmem:[%s10 + $0x2d4] sm:$0xf]
    %v2337 = vld [vmem:[%s10 + $0x2d8] sm:$0xff]
    %v2338 = vld [vmem:[%s10 + $0x2e0] sm:$0xff]
    %v2339 = vld [vmem:[%s10 + $0x2e8] sm:$0xff]
    %v2340 = vld [vmem:[%s10 + $0x2f0] sm:$0xf]
    %v2341 = vld [vmem:[%s10 + $0x2f4] sm:$0xff]
    %v2342 = vld [vmem:[%s10 + $0x2fc] sm:$0xff]
    %v2343 = vld [vmem:[%s10 + $0x304] sm:$0xff]
    %v2344 = vld [vmem:[%s10 + $0x30c] sm:$0xf]
    %v2345 = vld [vmem:[%s10 + $0x310] sm:$0xff]
    %v2346 = vld [vmem:[%s10 + $0x318] sm:$0xff]
    %v2347 = vld [vmem:[%s10 + $0x320] sm:$0xff]
    %v2348 = vld [vmem:[%s10 + $0x328] sm:$0xf]
    %v2349 = vld [vmem:[%s10 + $0x32c] sm:$0xff]
    %v2350 = vld [vmem:[%s10 + $0x334] sm:$0xff]
    %v2351 = vld [vmem:[%s10 + $0x33c] sm:$0xff]
    %v2352 = vld [vmem:[%s10 + $0x344] sm:$0xf]
    %v2353 = vld [vmem:[%s10 + $0x348] sm:$0xff]
    %v2354 = vld [vmem:[%s10 + $0x350] sm:$0xff]
    %v2355 = vld [vmem:[%s10 + $0x358] sm:$0xff]
    %v2356 = vld [vmem:[%s10 + $0x360] sm:$0xf]
    %v2357 = vld [vmem:[%s10 + $0x364] sm:$0xff]
    %v2358 = vld [vmem:[%s10 + $0x36c] sm:$0xff]
    %v2359 = vld [vmem:[%s10 + $0x374] sm:$0xff]
    %v2360 = vld [vmem:[%s10 + $0x37c] sm:$0xf]
    %v2361 = vld [vmem:[%s10 + $0x380] sm:$0xff]
    %v2362 = vld [vmem:[%s10 + $0x388] sm:$0xff]
    %v2363 = vld [vmem:[%s10 + $0x390] sm:$0xff]
    %v2364 = vld [vmem:[%s10 + $0x398] sm:$0xf]
    %v2365 = vld [vmem:[%s10 + $0x39c] sm:$0xff]
    %v2366 = vld [vmem:[%s10 + $0x3a4] sm:$0xff]
    %v2367 = vld [vmem:[%s10 + $0x3ac] sm:$0xff]
    %v2368 = vld [vmem:[%s10 + $0x3b4] sm:$0xf]
    %v2369 = vld [vmem:[%s10 + $0x3b8] sm:$0xff]
    %v2370 = vld [vmem:[%s10 + $0x3c0] sm:$0xff]
    %v2371 = vld [vmem:[%s10 + $0x3c8] sm:$0xff]
    %v2372 = vld [vmem:[%s10 + $0x3d0] sm:$0xf]
    %v2373 = vld [vmem:[%s10 + $0x3d4] sm:$0xff]
    %v2374 = vld [vmem:[%s10 + $0x3dc] sm:$0xff]
    %v2375 = vld [vmem:[%s10 + $0x3e4] sm:$0xff]
    %v2376 = vld [vmem:[%s10 + $0x3ec] sm:$0xf]
    %v2377 = vld [vmem:[%s10 + $0x3f0] sm:$0xff]
    %v2378 = vld [vmem:[%s10 + $0x3f8] sm:$0xff]
    %v2379 = vld [vmem:[%s10 + $0x400] sm:$0xff]
    %v2380 = vld [vmem:[%s10 + $0x408] sm:$0xf]
    %v2381 = vld [vmem:[%s10 + $0x40c] sm:$0xff]
    %v2382 = vld [vmem:[%s10 + $0x414] sm:$0xff]
    %v2383 = vld [vmem:[%s10 + $0x41c] sm:$0xff]
    %v2384 = vld [vmem:[%s10 + $0x424] sm:$0xf]
    %v2385 = vld [vmem:[%s10 + $0x428] sm:$0xff]
    %v2386 = vld [vmem:[%s10 + $0x430] sm:$0xff]
    %v2387 = vld [vmem:[%s10 + $0x438] sm:$0xff]
    %v2388 = vld [vmem:[%s10 + $0x440] sm:$0xf]
    %v2389 = vld [vmem:[%s10 + $0x444] sm:$0xff]
    %v2390 = vld [vmem:[%s10 + $0x44c] sm:$0xff]
    %v2391 = vld [vmem:[%s10 + $0x454] sm:$0xff]
    %v2392 = vld [vmem:[%s10 + $0x45c] sm:$0xf]
    %v2393 = vld [vmem:[%s10 + $0x460] sm:$0xff]
    %v2394 = vld [vmem:[%s10 + $0x468] sm:$0xff]
    %v2395 = vld [vmem:[%s10 + $0x470] sm:$0xff]
    %v2396 = vld [vmem:[%s10 + $0x478] sm:$0xf]
    %v2397 = vld [vmem:[%s10 + $0x47c] sm:$0xff]
    %v2398 = vld [vmem:[%s10 + $0x484] sm:$0xff]
    %v2399 = vld [vmem:[%s10 + $0x48c] sm:$0xff]
    %v2400 = vld [vmem:[%s10 + $0x494] sm:$0xf]
    %v2401 = vld [vmem:[%s10 + $0x498] sm:$0xff]
    %v2402 = vld [vmem:[%s10 + $0x4a0] sm:$0xff]
    %v2403 = vld [vmem:[%s10 + $0x4a8] sm:$0xff]
    %v2404 = vld [vmem:[%s10 + $0x4b0] sm:$0xf]
    %v2405 = vld [vmem:[%s10 + $0x4b4] sm:$0xff]
    %v2406 = vld [vmem:[%s10 + $0x4bc] sm:$0xff]
    %v2407 = vld [vmem:[%s10 + $0x4c4] sm:$0xff]
    %v2408 = vld [vmem:[%s10 + $0x4cc] sm:$0xf]
    %v2409 = vld [vmem:[%s10 + $0x4d0] sm:$0xff]
    %v2410 = vld [vmem:[%s10 + $0x4d8] sm:$0xff]
    %v2411 = vld [vmem:[%s10 + $0x4e0] sm:$0xff]
    %v2412 = vld [vmem:[%s10 + $0x4e8] sm:$0xf]
    %v2413 = vld [vmem:[%s10 + $0x4ec] sm:$0xff]
    %v2414 = vld [vmem:[%s10 + $0x4f4] sm:$0xff]
    %v2415 = vld [vmem:[%s10 + $0x4fc] sm:$0xff]
    %v2416 = vld [vmem:[%s10 + $0x504] sm:$0xf]
    %v2417 = vld [vmem:[%s10 + $0x508] sm:$0xff]
    %v2418 = vld [vmem:[%s10 + $0x510] sm:$0xff]
    %v2419 = vld [vmem:[%s10 + $0x518] sm:$0xff]
    %v2420 = vld [vmem:[%s10 + $0x520] sm:$0xf]
    %v2421 = vld [vmem:[%s10 + $0x524] sm:$0xff]
    %v2422 = vld [vmem:[%s10 + $0x52c] sm:$0xff]
    %v2423 = vld [vmem:[%s10 + $0x534] sm:$0xff]
    %v2424 = vld [vmem:[%s10 + $0x53c] sm:$0xf]
    %v2425 = vld [vmem:[%s10 + $0x540] sm:$0xff]
    %v2426 = vld [vmem:[%s10 + $0x548] sm:$0xff]
    %v2427 = vld [vmem:[%s10 + $0x550] sm:$0xff]
    %v2428 = vld [vmem:[%s10 + $0x558] sm:$0xf]
    %v2429 = vld [vmem:[%s10 + $0x55c] sm:$0xff]
    %v2430 = vld [vmem:[%s10 + $0x564] sm:$0xff]
    %v2431 = vld [vmem:[%s10 + $0x56c] sm:$0xff]
    %v2432 = vld [vmem:[%s10 + $0x574] sm:$0xf]
    %v2433 = vld [vmem:[%s11] sm:$0x7f]
    %v2435 = vperm.slane %v2433, 0
    %v2436 = vperm.slane %v2433, 1
    %v2437 = vperm.slane %v2433, 2
    %v2438 = vperm.slane %v2433, 3
    %v2439 = vperm.slane %v2433, 4
    %v2440 = vperm.slane %v2433, 5
    %v2441 = vperm.slane %v2433, 6
    %v2649 = vunpack.c.l.b16 %v2233
    %v2650 = vunpack.c.h.b16 %v2233
    %v2651 = vunpack.c.l.b16 %v2234
    %v2652 = vunpack.c.h.b16 %v2234
    %v2653 = vunpack.c.l.b16 %v2235
    %v2654 = vunpack.c.h.b16 %v2235
    %v2655 = vunpack.c.l.b16 %v2236
    %v2656 = vunpack.c.l.b16 %v2237
    %v2657 = vunpack.c.h.b16 %v2237
    %v2658 = vunpack.c.l.b16 %v2238
    %v2659 = vunpack.c.h.b16 %v2238
    %v2660 = vunpack.c.l.b16 %v2239
    %v2661 = vunpack.c.h.b16 %v2239
    %v2662 = vunpack.c.l.b16 %v2240
    %v2663 = vunpack.c.l.b16 %v2241
    %v2664 = vunpack.c.h.b16 %v2241
    %v2665 = vunpack.c.l.b16 %v2242
    %v2666 = vunpack.c.h.b16 %v2242
    %v2667 = vunpack.c.l.b16 %v2243
    %v2668 = vunpack.c.h.b16 %v2243
    %v2669 = vunpack.c.l.b16 %v2244
    %v2670 = vunpack.c.l.b16 %v2245
    %v2671 = vunpack.c.h.b16 %v2245
    %v2672 = vunpack.c.l.b16 %v2246
    %v2673 = vunpack.c.h.b16 %v2246
    %v2674 = vunpack.c.l.b16 %v2247
    %v2675 = vunpack.c.h.b16 %v2247
    %v2676 = vunpack.c.l.b16 %v2248
    %v2677 = vunpack.c.l.b16 %v2249
    %v2678 = vunpack.c.h.b16 %v2249
    %v2679 = vunpack.c.l.b16 %v2250
    %v2680 = vunpack.c.h.b16 %v2250
    %v2681 = vunpack.c.l.b16 %v2251
    %v2682 = vunpack.c.h.b16 %v2251
    %v2683 = vunpack.c.l.b16 %v2252
    %v2684 = vunpack.c.l.b16 %v2253
    %v2685 = vunpack.c.h.b16 %v2253
    %v2686 = vunpack.c.l.b16 %v2254
    %v2687 = vunpack.c.h.b16 %v2254
    %v2688 = vunpack.c.l.b16 %v2255
    %v2689 = vunpack.c.h.b16 %v2255
    %v2690 = vunpack.c.l.b16 %v2256
    %v2691 = vunpack.c.l.b16 %v2257
    %v2692 = vunpack.c.h.b16 %v2257
    %v2693 = vunpack.c.l.b16 %v2258
    %v2694 = vunpack.c.h.b16 %v2258
    %v2695 = vunpack.c.l.b16 %v2259
    %v2696 = vunpack.c.h.b16 %v2259
    %v2697 = vunpack.c.l.b16 %v2260
    %v2698 = vunpack.c.l.b16 %v2261
    %v2699 = vunpack.c.h.b16 %v2261
    %v2700 = vunpack.c.l.b16 %v2262
    %v2701 = vunpack.c.h.b16 %v2262
    %v2702 = vunpack.c.l.b16 %v2263
    %v2703 = vunpack.c.h.b16 %v2263
    %v2704 = vunpack.c.l.b16 %v2264
    %v2705 = vunpack.c.l.b16 %v2265
    %v2706 = vunpack.c.h.b16 %v2265
    %v2707 = vunpack.c.l.b16 %v2266
    %v2708 = vunpack.c.h.b16 %v2266
    %v2709 = vunpack.c.l.b16 %v2267
    %v2710 = vunpack.c.h.b16 %v2267
    %v2711 = vunpack.c.l.b16 %v2268
    %v2712 = vunpack.c.l.b16 %v2269
    %v2713 = vunpack.c.h.b16 %v2269
    %v2714 = vunpack.c.l.b16 %v2270
    %v2715 = vunpack.c.h.b16 %v2270
    %v2716 = vunpack.c.l.b16 %v2271
    %v2717 = vunpack.c.h.b16 %v2271
    %v2718 = vunpack.c.l.b16 %v2272
    %v2719 = vunpack.c.l.b16 %v2273
    %v2720 = vunpack.c.h.b16 %v2273
    %v2721 = vunpack.c.l.b16 %v2274
    %v2722 = vunpack.c.h.b16 %v2274
    %v2723 = vunpack.c.l.b16 %v2275
    %v2724 = vunpack.c.h.b16 %v2275
    %v2725 = vunpack.c.l.b16 %v2276
    %v2726 = vunpack.c.l.b16 %v2277
    %v2727 = vunpack.c.h.b16 %v2277
    %v2728 = vunpack.c.l.b16 %v2278
    %v2729 = vunpack.c.h.b16 %v2278
    %v2730 = vunpack.c.l.b16 %v2279
    %v2731 = vunpack.c.h.b16 %v2279
    %v2732 = vunpack.c.l.b16 %v2280
    %v2733 = vunpack.c.l.b16 %v2281
    %v2734 = vunpack.c.h.b16 %v2281
    %v2735 = vunpack.c.l.b16 %v2282
    %v2736 = vunpack.c.h.b16 %v2282
    %v2737 = vunpack.c.l.b16 %v2283
    %v2738 = vunpack.c.h.b16 %v2283
    %v2739 = vunpack.c.l.b16 %v2284
    %v2740 = vunpack.c.l.b16 %v2285
    %v2741 = vunpack.c.h.b16 %v2285
    %v2742 = vunpack.c.l.b16 %v2286
    %v2743 = vunpack.c.h.b16 %v2286
    %v2744 = vunpack.c.l.b16 %v2287
    %v2745 = vunpack.c.h.b16 %v2287
    %v2746 = vunpack.c.l.b16 %v2288
    %v2747 = vunpack.c.l.b16 %v2289
    %v2748 = vunpack.c.h.b16 %v2289
    %v2749 = vunpack.c.l.b16 %v2290
    %v2750 = vunpack.c.h.b16 %v2290
    %v2751 = vunpack.c.l.b16 %v2291
    %v2752 = vunpack.c.h.b16 %v2291
    %v2753 = vunpack.c.l.b16 %v2292
    %v2754 = vunpack.c.l.b16 %v2293
    %v2755 = vunpack.c.h.b16 %v2293
    %v2756 = vunpack.c.l.b16 %v2294
    %v2757 = vunpack.c.h.b16 %v2294
    %v2758 = vunpack.c.l.b16 %v2295
    %v2759 = vunpack.c.h.b16 %v2295
    %v2760 = vunpack.c.l.b16 %v2296
    %v2761 = vunpack.c.l.b16 %v2297
    %v2762 = vunpack.c.h.b16 %v2297
    %v2763 = vunpack.c.l.b16 %v2298
    %v2764 = vunpack.c.h.b16 %v2298
    %v2765 = vunpack.c.l.b16 %v2299
    %v2766 = vunpack.c.h.b16 %v2299
    %v2767 = vunpack.c.l.b16 %v2300
    %v2768 = vunpack.c.l.b16 %v2301
    %v2769 = vunpack.c.h.b16 %v2301
    %v2770 = vunpack.c.l.b16 %v2302
    %v2771 = vunpack.c.h.b16 %v2302
    %v2772 = vunpack.c.l.b16 %v2303
    %v2773 = vunpack.c.h.b16 %v2303
    %v2774 = vunpack.c.l.b16 %v2304
    %v2775 = vunpack.c.l.b16 %v2305
    %v2776 = vunpack.c.h.b16 %v2305
    %v2777 = vunpack.c.l.b16 %v2306
    %v2778 = vunpack.c.h.b16 %v2306
    %v2779 = vunpack.c.l.b16 %v2307
    %v2780 = vunpack.c.h.b16 %v2307
    %v2781 = vunpack.c.l.b16 %v2308
    %v2782 = vunpack.c.l.b16 %v2309
    %v2783 = vunpack.c.h.b16 %v2309
    %v2784 = vunpack.c.l.b16 %v2310
    %v2785 = vunpack.c.h.b16 %v2310
    %v2786 = vunpack.c.l.b16 %v2311
    %v2787 = vunpack.c.h.b16 %v2311
    %v2788 = vunpack.c.l.b16 %v2312
    %v2789 = vunpack.c.l.b16 %v2313
    %v2790 = vunpack.c.h.b16 %v2313
    %v2791 = vunpack.c.l.b16 %v2314
    %v2792 = vunpack.c.h.b16 %v2314
    %v2793 = vunpack.c.l.b16 %v2315
    %v2794 = vunpack.c.h.b16 %v2315
    %v2795 = vunpack.c.l.b16 %v2316
    %v2796 = vunpack.c.l.b16 %v2317
    %v2797 = vunpack.c.h.b16 %v2317
    %v2798 = vunpack.c.l.b16 %v2318
    %v2799 = vunpack.c.h.b16 %v2318
    %v2800 = vunpack.c.l.b16 %v2319
    %v2801 = vunpack.c.h.b16 %v2319
    %v2802 = vunpack.c.l.b16 %v2320
    %v2803 = vunpack.c.l.b16 %v2321
    %v2804 = vunpack.c.h.b16 %v2321
    %v2805 = vunpack.c.l.b16 %v2322
    %v2806 = vunpack.c.h.b16 %v2322
    %v2807 = vunpack.c.l.b16 %v2323
    %v2808 = vunpack.c.h.b16 %v2323
    %v2809 = vunpack.c.l.b16 %v2324
    %v2810 = vunpack.c.l.b16 %v2325
    %v2811 = vunpack.c.h.b16 %v2325
    %v2812 = vunpack.c.l.b16 %v2326
    %v2813 = vunpack.c.h.b16 %v2326
    %v2814 = vunpack.c.l.b16 %v2327
    %v2815 = vunpack.c.h.b16 %v2327
    %v2816 = vunpack.c.l.b16 %v2328
    %v2817 = vunpack.c.l.b16 %v2329
    %v2818 = vunpack.c.h.b16 %v2329
    %v2819 = vunpack.c.l.b16 %v2330
    %v2820 = vunpack.c.h.b16 %v2330
    %v2821 = vunpack.c.l.b16 %v2331
    %v2822 = vunpack.c.h.b16 %v2331
    %v2823 = vunpack.c.l.b16 %v2332
    %v2824 = vunpack.c.l.b16 %v2333
    %v2825 = vunpack.c.h.b16 %v2333
    %v2826 = vunpack.c.l.b16 %v2334
    %v2827 = vunpack.c.h.b16 %v2334
    %v2828 = vunpack.c.l.b16 %v2335
    %v2829 = vunpack.c.h.b16 %v2335
    %v2830 = vunpack.c.l.b16 %v2336
    %v2831 = vunpack.c.l.b16 %v2337
    %v2832 = vunpack.c.h.b16 %v2337
    %v2833 = vunpack.c.l.b16 %v2338
    %v2834 = vunpack.c.h.b16 %v2338
    %v2835 = vunpack.c.l.b16 %v2339
    %v2836 = vunpack.c.h.b16 %v2339
    %v2837 = vunpack.c.l.b16 %v2340
    %v2838 = vunpack.c.l.b16 %v2341
    %v2839 = vunpack.c.h.b16 %v2341
    %v2840 = vunpack.c.l.b16 %v2342
    %v2841 = vunpack.c.h.b16 %v2342
    %v2842 = vunpack.c.l.b16 %v2343
    %v2843 = vunpack.c.h.b16 %v2343
    %v2844 = vunpack.c.l.b16 %v2344
    %v2845 = vunpack.c.l.b16 %v2345
    %v2846 = vunpack.c.h.b16 %v2345
    %v2847 = vunpack.c.l.b16 %v2346
    %v2848 = vunpack.c.h.b16 %v2346
    %v2849 = vunpack.c.l.b16 %v2347
    %v2850 = vunpack.c.h.b16 %v2347
    %v2851 = vunpack.c.l.b16 %v2348
    %v2852 = vunpack.c.l.b16 %v2349
    %v2853 = vunpack.c.h.b16 %v2349
    %v2854 = vunpack.c.l.b16 %v2350
    %v2855 = vunpack.c.h.b16 %v2350
    %v2856 = vunpack.c.l.b16 %v2351
    %v2857 = vunpack.c.h.b16 %v2351
    %v2858 = vunpack.c.l.b16 %v2352
    %v2859 = vunpack.c.l.b16 %v2353
    %v2860 = vunpack.c.h.b16 %v2353
    %v2861 = vunpack.c.l.b16 %v2354
    %v2862 = vunpack.c.h.b16 %v2354
    %v2863 = vunpack.c.l.b16 %v2355
    %v2864 = vunpack.c.h.b16 %v2355
    %v2865 = vunpack.c.l.b16 %v2356
    %v2866 = vunpack.c.l.b16 %v2357
    %v2867 = vunpack.c.h.b16 %v2357
    %v2868 = vunpack.c.l.b16 %v2358
    %v2869 = vunpack.c.h.b16 %v2358
    %v2870 = vunpack.c.l.b16 %v2359
    %v2871 = vunpack.c.h.b16 %v2359
    %v2872 = vunpack.c.l.b16 %v2360
    %v2873 = vunpack.c.l.b16 %v2361
    %v2874 = vunpack.c.h.b16 %v2361
    %v2875 = vunpack.c.l.b16 %v2362
    %v2876 = vunpack.c.h.b16 %v2362
    %v2877 = vunpack.c.l.b16 %v2363
    %v2878 = vunpack.c.h.b16 %v2363
    %v2879 = vunpack.c.l.b16 %v2364
    %v2880 = vunpack.c.l.b16 %v2365
    %v2881 = vunpack.c.h.b16 %v2365
    %v2882 = vunpack.c.l.b16 %v2366
    %v2883 = vunpack.c.h.b16 %v2366
    %v2884 = vunpack.c.l.b16 %v2367
    %v2885 = vunpack.c.h.b16 %v2367
    %v2886 = vunpack.c.l.b16 %v2368
    %v2887 = vunpack.c.l.b16 %v2369
    %v2888 = vunpack.c.h.b16 %v2369
    %v2889 = vunpack.c.l.b16 %v2370
    %v2890 = vunpack.c.h.b16 %v2370
    %v2891 = vunpack.c.l.b16 %v2371
    %v2892 = vunpack.c.h.b16 %v2371
    %v2893 = vunpack.c.l.b16 %v2372
    %v2894 = vunpack.c.l.b16 %v2373
    %v2895 = vunpack.c.h.b16 %v2373
    %v2896 = vunpack.c.l.b16 %v2374
    %v2897 = vunpack.c.h.b16 %v2374
    %v2898 = vunpack.c.l.b16 %v2375
    %v2899 = vunpack.c.h.b16 %v2375
    %v2900 = vunpack.c.l.b16 %v2376
    %v2901 = vunpack.c.l.b16 %v2377
    %v2902 = vunpack.c.h.b16 %v2377
    %v2903 = vunpack.c.l.b16 %v2378
    %v2904 = vunpack.c.h.b16 %v2378
    %v2905 = vunpack.c.l.b16 %v2379
    %v2906 = vunpack.c.h.b16 %v2379
    %v2907 = vunpack.c.l.b16 %v2380
    %v2908 = vunpack.c.l.b16 %v2381
    %v2909 = vunpack.c.h.b16 %v2381
    %v2910 = vunpack.c.l.b16 %v2382
    %v2911 = vunpack.c.h.b16 %v2382
    %v2912 = vunpack.c.l.b16 %v2383
    %v2913 = vunpack.c.h.b16 %v2383
    %v2914 = vunpack.c.l.b16 %v2384
    %v2915 = vunpack.c.l.b16 %v2385
    %v2916 = vunpack.c.h.b16 %v2385
    %v2917 = vunpack.c.l.b16 %v2386
    %v2918 = vunpack.c.h.b16 %v2386
    %v2919 = vunpack.c.l.b16 %v2387
    %v2920 = vunpack.c.h.b16 %v2387
    %v2921 = vunpack.c.l.b16 %v2388
    %v2922 = vunpack.c.l.b16 %v2389
    %v2923 = vunpack.c.h.b16 %v2389
    %v2924 = vunpack.c.l.b16 %v2390
    %v2925 = vunpack.c.h.b16 %v2390
    %v2926 = vunpack.c.l.b16 %v2391
    %v2927 = vunpack.c.h.b16 %v2391
    %v2928 = vunpack.c.l.b16 %v2392
    %v2929 = vunpack.c.l.b16 %v2393
    %v2930 = vunpack.c.h.b16 %v2393
    %v2931 = vunpack.c.l.b16 %v2394
    %v2932 = vunpack.c.h.b16 %v2394
    %v2933 = vunpack.c.l.b16 %v2395
    %v2934 = vunpack.c.h.b16 %v2395
    %v2935 = vunpack.c.l.b16 %v2396
    %v2936 = vunpack.c.l.b16 %v2397
    %v2937 = vunpack.c.h.b16 %v2397
    %v2938 = vunpack.c.l.b16 %v2398
    %v2939 = vunpack.c.h.b16 %v2398
    %v2940 = vunpack.c.l.b16 %v2399
    %v2941 = vunpack.c.h.b16 %v2399
    %v2942 = vunpack.c.l.b16 %v2400
    %v2943 = vunpack.c.l.b16 %v2401
    %v2944 = vunpack.c.h.b16 %v2401
    %v2945 = vunpack.c.l.b16 %v2402
    %v2946 = vunpack.c.h.b16 %v2402
    %v2947 = vunpack.c.l.b16 %v2403
    %v2948 = vunpack.c.h.b16 %v2403
    %v2949 = vunpack.c.l.b16 %v2404
    %v2950 = vunpack.c.l.b16 %v2405
    %v2951 = vunpack.c.h.b16 %v2405
    %v2952 = vunpack.c.l.b16 %v2406
    %v2953 = vunpack.c.h.b16 %v2406
    %v2954 = vunpack.c.l.b16 %v2407
    %v2955 = vunpack.c.h.b16 %v2407
    %v2956 = vunpack.c.l.b16 %v2408
    %v2957 = vunpack.c.l.b16 %v2409
    %v2958 = vunpack.c.h.b16 %v2409
    %v2959 = vunpack.c.l.b16 %v2410
    %v2960 = vunpack.c.h.b16 %v2410
    %v2961 = vunpack.c.l.b16 %v2411
    %v2962 = vunpack.c.h.b16 %v2411
    %v2963 = vunpack.c.l.b16 %v2412
    %v2964 = vunpack.c.l.b16 %v2413
    %v2965 = vunpack.c.h.b16 %v2413
    %v2966 = vunpack.c.l.b16 %v2414
    %v2967 = vunpack.c.h.b16 %v2414
    %v2968 = vunpack.c.l.b16 %v2415
    %v2969 = vunpack.c.h.b16 %v2415
    %v2970 = vunpack.c.l.b16 %v2416
    %v2971 = vunpack.c.l.b16 %v2417
    %v2972 = vunpack.c.h.b16 %v2417
    %v2973 = vunpack.c.l.b16 %v2418
    %v2974 = vunpack.c.h.b16 %v2418
    %v2975 = vunpack.c.l.b16 %v2419
    %v2976 = vunpack.c.h.b16 %v2419
    %v2977 = vunpack.c.l.b16 %v2420
    %v2978 = vunpack.c.l.b16 %v2421
    %v2979 = vunpack.c.h.b16 %v2421
    %v2980 = vunpack.c.l.b16 %v2422
    %v2981 = vunpack.c.h.b16 %v2422
    %v2982 = vunpack.c.l.b16 %v2423
    %v2983 = vunpack.c.h.b16 %v2423
    %v2984 = vunpack.c.l.b16 %v2424
    %v2985 = vunpack.c.l.b16 %v2425
    %v2986 = vunpack.c.h.b16 %v2425
    %v2987 = vunpack.c.l.b16 %v2426
    %v2988 = vunpack.c.h.b16 %v2426
    %v2989 = vunpack.c.l.b16 %v2427
    %v2990 = vunpack.c.h.b16 %v2427
    %v2991 = vunpack.c.l.b16 %v2428
    %v2992 = vunpack.c.l.b16 %v2429
    %v2993 = vunpack.c.h.b16 %v2429
    %v2994 = vunpack.c.l.b16 %v2430
    %v2995 = vunpack.c.h.b16 %v2430
    %v2996 = vunpack.c.l.b16 %v2431
    %v2997 = vunpack.c.h.b16 %v2431
    %v2998 = vunpack.c.l.b16 %v2432
    %v2999 = vpack.c.b16 %v2656, %v2649
    %v3000 = vpack.c.b16 %v2657, %v2650
    %v3001 = vpack.c.b16 %v2658, %v2651
    %v3002 = vpack.c.b16 %v2659, %v2652
    %v3003 = vpack.c.b16 %v2660, %v2653
    %v3004 = vpack.c.b16 %v2661, %v2654
    %v3005 = vpack.c.b16 %v2662, %v2655
    %v3006 = vpack.c.b16 %v2670, %v2663
    %v3007 = vpack.c.b16 %v2671, %v2664
    %v3008 = vpack.c.b16 %v2672, %v2665
    %v3009 = vpack.c.b16 %v2673, %v2666
    %v3010 = vpack.c.b16 %v2674, %v2667
    %v3011 = vpack.c.b16 %v2675, %v2668
    %v3012 = vpack.c.b16 %v2676, %v2669
    %v3013 = vpack.c.b16 %v2684, %v2677
    %v3014 = vpack.c.b16 %v2685, %v2678
    %v3015 = vpack.c.b16 %v2686, %v2679
    %v3016 = vpack.c.b16 %v2687, %v2680
    %v3017 = vpack.c.b16 %v2688, %v2681
    %v3018 = vpack.c.b16 %v2689, %v2682
    %v3019 = vpack.c.b16 %v2690, %v2683
    %v3020 = vpack.c.b16 %v2698, %v2691
    %v3021 = vpack.c.b16 %v2699, %v2692
    %v3022 = vpack.c.b16 %v2700, %v2693
    %v3023 = vpack.c.b16 %v2701, %v2694
    %v3024 = vpack.c.b16 %v2702, %v2695
    %v3025 = vpack.c.b16 %v2703, %v2696
    %v3026 = vpack.c.b16 %v2704, %v2697
    %v3027 = vpack.c.b16 %v2712, %v2705
    %v3028 = vpack.c.b16 %v2713, %v2706
    %v3029 = vpack.c.b16 %v2714, %v2707
    %v3030 = vpack.c.b16 %v2715, %v2708
    %v3031 = vpack.c.b16 %v2716, %v2709
    %v3032 = vpack.c.b16 %v2717, %v2710
    %v3033 = vpack.c.b16 %v2718, %v2711
    %v3034 = vpack.c.b16 %v2726, %v2719
    %v3035 = vpack.c.b16 %v2727, %v2720
    %v3036 = vpack.c.b16 %v2728, %v2721
    %v3037 = vpack.c.b16 %v2729, %v2722
    %v3038 = vpack.c.b16 %v2730, %v2723
    %v3039 = vpack.c.b16 %v2731, %v2724
    %v3040 = vpack.c.b16 %v2732, %v2725
    %v3041 = vpack.c.b16 %v2740, %v2733
    %v3042 = vpack.c.b16 %v2741, %v2734
    %v3043 = vpack.c.b16 %v2742, %v2735
    %v3044 = vpack.c.b16 %v2743, %v2736
    %v3045 = vpack.c.b16 %v2744, %v2737
    %v3046 = vpack.c.b16 %v2745, %v2738
    %v3047 = vpack.c.b16 %v2746, %v2739
    %v3048 = vpack.c.b16 %v2754, %v2747
    %v3049 = vpack.c.b16 %v2755, %v2748
    %v3050 = vpack.c.b16 %v2756, %v2749
    %v3051 = vpack.c.b16 %v2757, %v2750
    %v3052 = vpack.c.b16 %v2758, %v2751
    %v3053 = vpack.c.b16 %v2759, %v2752
    %v3054 = vpack.c.b16 %v2760, %v2753
    %v3055 = vpack.c.b16 %v2768, %v2761
    %v3056 = vpack.c.b16 %v2769, %v2762
    %v3057 = vpack.c.b16 %v2770, %v2763
    %v3058 = vpack.c.b16 %v2771, %v2764
    %v3059 = vpack.c.b16 %v2772, %v2765
    %v3060 = vpack.c.b16 %v2773, %v2766
    %v3061 = vpack.c.b16 %v2774, %v2767
    %v3062 = vpack.c.b16 %v2782, %v2775
    %v3063 = vpack.c.b16 %v2783, %v2776
    %v3064 = vpack.c.b16 %v2784, %v2777
    %v3065 = vpack.c.b16 %v2785, %v2778
    %v3066 = vpack.c.b16 %v2786, %v2779
    %v3067 = vpack.c.b16 %v2787, %v2780
    %v3068 = vpack.c.b16 %v2788, %v2781
    %v3069 = vpack.c.b16 %v2796, %v2789
    %v3070 = vpack.c.b16 %v2797, %v2790
    %v3071 = vpack.c.b16 %v2798, %v2791
    %v3072 = vpack.c.b16 %v2799, %v2792
    %v3073 = vpack.c.b16 %v2800, %v2793
    %v3074 = vpack.c.b16 %v2801, %v2794
    %v3075 = vpack.c.b16 %v2802, %v2795
    %v3076 = vpack.c.b16 %v2810, %v2803
    %v3077 = vpack.c.b16 %v2811, %v2804
    %v3078 = vpack.c.b16 %v2812, %v2805
    %v3079 = vpack.c.b16 %v2813, %v2806
    %v3080 = vpack.c.b16 %v2814, %v2807
    %v3081 = vpack.c.b16 %v2815, %v2808
    %v3082 = vpack.c.b16 %v2816, %v2809
    %v3083 = vpack.c.b16 %v2824, %v2817
    %v3084 = vpack.c.b16 %v2825, %v2818
    %v3085 = vpack.c.b16 %v2826, %v2819
    %v3086 = vpack.c.b16 %v2827, %v2820
    %v3087 = vpack.c.b16 %v2828, %v2821
    %v3088 = vpack.c.b16 %v2829, %v2822
    %v3089 = vpack.c.b16 %v2830, %v2823
    %v3090 = vpack.c.b16 %v2838, %v2831
    %v3091 = vpack.c.b16 %v2839, %v2832
    %v3092 = vpack.c.b16 %v2840, %v2833
    %v3093 = vpack.c.b16 %v2841, %v2834
    %v3094 = vpack.c.b16 %v2842, %v2835
    %v3095 = vpack.c.b16 %v2843, %v2836
    %v3096 = vpack.c.b16 %v2844, %v2837
    %v3097 = vpack.c.b16 %v2852, %v2845
    %v3098 = vpack.c.b16 %v2853, %v2846
    %v3099 = vpack.c.b16 %v2854, %v2847
    %v3100 = vpack.c.b16 %v2855, %v2848
    %v3101 = vpack.c.b16 %v2856, %v2849
    %v3102 = vpack.c.b16 %v2857, %v2850
    %v3103 = vpack.c.b16 %v2858, %v2851
    %v3104 = vpack.c.b16 %v2866, %v2859
    %v3105 = vpack.c.b16 %v2867, %v2860
    %v3106 = vpack.c.b16 %v2868, %v2861
    %v3107 = vpack.c.b16 %v2869, %v2862
    %v3108 = vpack.c.b16 %v2870, %v2863
    %v3109 = vpack.c.b16 %v2871, %v2864
    %v3110 = vpack.c.b16 %v2872, %v2865
    %v3111 = vpack.c.b16 %v2880, %v2873
    %v3112 = vpack.c.b16 %v2881, %v2874
    %v3113 = vpack.c.b16 %v2882, %v2875
    %v3114 = vpack.c.b16 %v2883, %v2876
    %v3115 = vpack.c.b16 %v2884, %v2877
    %v3116 = vpack.c.b16 %v2885, %v2878
    %v3117 = vpack.c.b16 %v2886, %v2879
    %v3118 = vpack.c.b16 %v2894, %v2887
    %v3119 = vpack.c.b16 %v2895, %v2888
    %v3120 = vpack.c.b16 %v2896, %v2889
    %v3121 = vpack.c.b16 %v2897, %v2890
    %v3122 = vpack.c.b16 %v2898, %v2891
    %v3123 = vpack.c.b16 %v2899, %v2892
    %v3124 = vpack.c.b16 %v2900, %v2893
    %v3125 = vpack.c.b16 %v2908, %v2901
    %v3126 = vpack.c.b16 %v2909, %v2902
    %v3127 = vpack.c.b16 %v2910, %v2903
    %v3128 = vpack.c.b16 %v2911, %v2904
    %v3129 = vpack.c.b16 %v2912, %v2905
    %v3130 = vpack.c.b16 %v2913, %v2906
    %v3131 = vpack.c.b16 %v2914, %v2907
    %v3132 = vpack.c.b16 %v2922, %v2915
    %v3133 = vpack.c.b16 %v2923, %v2916
    %v3134 = vpack.c.b16 %v2924, %v2917
    %v3135 = vpack.c.b16 %v2925, %v2918
    %v3136 = vpack.c.b16 %v2926, %v2919
    %v3137 = vpack.c.b16 %v2927, %v2920
    %v3138 = vpack.c.b16 %v2928, %v2921
    %v3139 = vpack.c.b16 %v2936, %v2929
    %v3140 = vpack.c.b16 %v2937, %v2930
    %v3141 = vpack.c.b16 %v2938, %v2931
    %v3142 = vpack.c.b16 %v2939, %v2932
    %v3143 = vpack.c.b16 %v2940, %v2933
    %v3144 = vpack.c.b16 %v2941, %v2934
    %v3145 = vpack.c.b16 %v2942, %v2935
    %v3146 = vpack.c.b16 %v2950, %v2943
    %v3147 = vpack.c.b16 %v2951, %v2944
    %v3148 = vpack.c.b16 %v2952, %v2945
    %v3149 = vpack.c.b16 %v2953, %v2946
    %v3150 = vpack.c.b16 %v2954, %v2947
    %v3151 = vpack.c.b16 %v2955, %v2948
    %v3152 = vpack.c.b16 %v2956, %v2949
    %v3153 = vpack.c.b16 %v2964, %v2957
    %v3154 = vpack.c.b16 %v2965, %v2958
    %v3155 = vpack.c.b16 %v2966, %v2959
    %v3156 = vpack.c.b16 %v2967, %v2960
    %v3157 = vpack.c.b16 %v2968, %v2961
    %v3158 = vpack.c.b16 %v2969, %v2962
    %v3159 = vpack.c.b16 %v2970, %v2963
    %v3160 = vpack.c.b16 %v2978, %v2971
    %v3161 = vpack.c.b16 %v2979, %v2972
    %v3162 = vpack.c.b16 %v2980, %v2973
    %v3163 = vpack.c.b16 %v2981, %v2974
    %v3164 = vpack.c.b16 %v2982, %v2975
    %v3165 = vpack.c.b16 %v2983, %v2976
    %v3166 = vpack.c.b16 %v2984, %v2977
    %v3167 = vpack.c.b16 %v2992, %v2985
    %v3168 = vpack.c.b16 %v2993, %v2986
    %v3169 = vpack.c.b16 %v2994, %v2987
    %v3170 = vpack.c.b16 %v2995, %v2988
    %v3171 = vpack.c.b16 %v2996, %v2989
    %v3172 = vpack.c.b16 %v2997, %v2990
    %v3173 = vpack.c.b16 %v2998, %v2991
    %v3350 = vsel %vm1443, %v2232, 0
    %3352 = vmatpush.bf16.msra.mxu0 %v3048
    %3353 = vmatpush.bf16.msra.mxu0 %v3041
    %3354 = vmatpush.bf16.msra.mxu0 %v3034
    %3355 = vmatpush.bf16.msra.mxu0 %v3027
    %3356 = vmatpush.bf16.msra.mxu0 %v3020
    %3357 = vmatpush.bf16.msra.mxu0 %v3013
    %3358 = vmatpush.bf16.msra.mxu0 %v3006
    %3359 = vmatpush.bf16.msra.mxu0 %v2999
    %3360 = vmatmul.bf16.gmra.mxu0 %v2229
    %v3361 = vpop.f32.mrf.mxu0
    %v3362 = vadd.f32 %v2435, %v3361
    %v3363 = vpop.f32.mrf.mxu0
    %3364 = vdwg.mxu0
    %3365 = vmatpush.bf16.msra.mxu0 %v3104
    %3366 = vmatpush.bf16.msra.mxu0 %v3097
    %3367 = vmatpush.bf16.msra.mxu0 %v3090
    %3368 = vmatpush.bf16.msra.mxu0 %v3083
    %3369 = vmatpush.bf16.msra.mxu0 %v3076
    %3370 = vmatpush.bf16.msra.mxu0 %v3069
    %3371 = vmatpush.bf16.msra.mxu0 %v3062
    %3372 = vmatpush.bf16.msra.mxu0 %v3055
    %3373 = vmatmul.bf16.gmra.mxu0 %v2230
    %v3374 = vpop.f32.mrf.mxu0
    %v3375 = vadd.f32 %v3362, %v3374
    %v3376 = vpop.f32.mrf.mxu0
    %3377 = vdwg.mxu0
    %3378 = vmatpush.bf16.msra.mxu0 %v3160
    %3379 = vmatpush.bf16.msra.mxu0 %v3153
    %3380 = vmatpush.bf16.msra.mxu0 %v3146
    %3381 = vmatpush.bf16.msra.mxu0 %v3139
    %3382 = vmatpush.bf16.msra.mxu0 %v3132
    %3383 = vmatpush.bf16.msra.mxu0 %v3125
    %3384 = vmatpush.bf16.msra.mxu0 %v3118
    %3385 = vmatpush.bf16.msra.mxu0 %v3111
    %3386 = vmatmul.bf16.gmra.mxu0 %v2231
    %v3387 = vpop.f32.mrf.mxu0
    %v3388 = vadd.f32 %v3375, %v3387
    %v3389 = vpop.f32.mrf.mxu0
    %3390 = vdwg.mxu0
    %3391 = vmatpush.bf16.msra.mxu0 0
    %3392 = vmatpush.bf16.msra.mxu0 0
    %3393 = vmatpush.bf16.msra.mxu0 0
    %3394 = vmatpush.bf16.msra.mxu0 0
    %3395 = vmatpush.bf16.msra.mxu0 0
    %3396 = vmatpush.bf16.msra.mxu0 0
    %3397 = vmatpush.bf16.msra.mxu0 0
    %3398 = vmatpush.bf16.msra.mxu0 %v3167
    %3399 = vmatmul.bf16.gmra.mxu0 %v3350
    %v3400 = vpop.f32.mrf.mxu0
    %v3401 = vadd.f32 %v3388, %v3400
    %v3402 = vpop.f32.mrf.mxu0
    %3403 = vdwg.mxu0
    %3404 = vmatpush.bf16.msra.mxu0 %v3049
    %3405 = vmatpush.bf16.msra.mxu0 %v3042
    %3406 = vmatpush.bf16.msra.mxu0 %v3035
    %3407 = vmatpush.bf16.msra.mxu0 %v3028
    %3408 = vmatpush.bf16.msra.mxu0 %v3021
    %3409 = vmatpush.bf16.msra.mxu0 %v3014
    %3410 = vmatpush.bf16.msra.mxu0 %v3007
    %3411 = vmatpush.bf16.msra.mxu0 %v3000
    %3412 = vmatmul.bf16.gmra.mxu0 %v2229
    %v3413 = vpop.f32.mrf.mxu0
    %v3414 = vadd.f32 %v2436, %v3413
    %v3415 = vpop.f32.mrf.mxu0
    %3416 = vdwg.mxu0
    %3417 = vmatpush.bf16.msra.mxu0 %v3105
    %3418 = vmatpush.bf16.msra.mxu0 %v3098
    %3419 = vmatpush.bf16.msra.mxu0 %v3091
    %3420 = vmatpush.bf16.msra.mxu0 %v3084
    %3421 = vmatpush.bf16.msra.mxu0 %v3077
    %3422 = vmatpush.bf16.msra.mxu0 %v3070
    %3423 = vmatpush.bf16.msra.mxu0 %v3063
    %3424 = vmatpush.bf16.msra.mxu0 %v3056
    %3425 = vmatmul.bf16.gmra.mxu0 %v2230
    %v3426 = vpop.f32.mrf.mxu0
    %v3427 = vadd.f32 %v3414, %v3426
    %v3428 = vpop.f32.mrf.mxu0
    %3429 = vdwg.mxu0
    %3430 = vmatpush.bf16.msra.mxu0 %v3161
    %3431 = vmatpush.bf16.msra.mxu0 %v3154
    %3432 = vmatpush.bf16.msra.mxu0 %v3147
    %3433 = vmatpush.bf16.msra.mxu0 %v3140
    %3434 = vmatpush.bf16.msra.mxu0 %v3133
    %3435 = vmatpush.bf16.msra.mxu0 %v3126
    %3436 = vmatpush.bf16.msra.mxu0 %v3119
    %3437 = vmatpush.bf16.msra.mxu0 %v3112
    %3438 = vmatmul.bf16.gmra.mxu0 %v2231
    %v3439 = vpop.f32.mrf.mxu0
    %v3440 = vadd.f32 %v3427, %v3439
    %v3441 = vpop.f32.mrf.mxu0
    %3442 = vdwg.mxu0
    %3443 = vmatpush.bf16.msra.mxu0 0
    %3444 = vmatpush.bf16.msra.mxu0 0
    %3445 = vmatpush.bf16.msra.mxu0 0
    %3446 = vmatpush.bf16.msra.mxu0 0
    %3447 = vmatpush.bf16.msra.mxu0 0
    %3448 = vmatpush.bf16.msra.mxu0 0
    %3449 = vmatpush.bf16.msra.mxu0 0
    %3450 = vmatpush.bf16.msra.mxu0 %v3168
    %3451 = vmatmul.bf16.gmra.mxu0 %v3350
    %v3452 = vpop.f32.mrf.mxu0
    %v3453 = vadd.f32 %v3440, %v3452
    %v3454 = vpop.f32.mrf.mxu0
    %3455 = vdwg.mxu0
    %3456 = vmatpush.bf16.msra.mxu0 %v3050
    %3457 = vmatpush.bf16.msra.mxu0 %v3043
    %3458 = vmatpush.bf16.msra.mxu0 %v3036
    %3459 = vmatpush.bf16.msra.mxu0 %v3029
    %3460 = vmatpush.bf16.msra.mxu0 %v3022
    %3461 = vmatpush.bf16.msra.mxu0 %v3015
    %3462 = vmatpush.bf16.msra.mxu0 %v3008
    %3463 = vmatpush.bf16.msra.mxu0 %v3001
    %3464 = vmatmul.bf16.gmra.mxu0 %v2229
    %v3465 = vpop.f32.mrf.mxu0
    %v3466 = vadd.f32 %v2437, %v3465
    %v3467 = vpop.f32.mrf.mxu0
    %3468 = vdwg.mxu0
    %3469 = vmatpush.bf16.msra.mxu0 %v3106
    %3470 = vmatpush.bf16.msra.mxu0 %v3099
    %3471 = vmatpush.bf16.msra.mxu0 %v3092
    %3472 = vmatpush.bf16.msra.mxu0 %v3085
    %3473 = vmatpush.bf16.msra.mxu0 %v3078
    %3474 = vmatpush.bf16.msra.mxu0 %v3071
    %3475 = vmatpush.bf16.msra.mxu0 %v3064
    %3476 = vmatpush.bf16.msra.mxu0 %v3057
    %3477 = vmatmul.bf16.gmra.mxu0 %v2230
    %v3478 = vpop.f32.mrf.mxu0
    %v3479 = vadd.f32 %v3466, %v3478
    %v3480 = vpop.f32.mrf.mxu0
    %3481 = vdwg.mxu0
    %3482 = vmatpush.bf16.msra.mxu0 %v3162
    %3483 = vmatpush.bf16.msra.mxu0 %v3155
    %3484 = vmatpush.bf16.msra.mxu0 %v3148
    %3485 = vmatpush.bf16.msra.mxu0 %v3141
    %3486 = vmatpush.bf16.msra.mxu0 %v3134
    %3487 = vmatpush.bf16.msra.mxu0 %v3127
    %3488 = vmatpush.bf16.msra.mxu0 %v3120
    %3489 = vmatpush.bf16.msra.mxu0 %v3113
    %3490 = vmatmul.bf16.gmra.mxu0 %v2231
    %v3491 = vpop.f32.mrf.mxu0
    %v3492 = vadd.f32 %v3479, %v3491
    %v3493 = vpop.f32.mrf.mxu0
    %3494 = vdwg.mxu0
    %3495 = vmatpush.bf16.msra.mxu0 0
    %3496 = vmatpush.bf16.msra.mxu0 0
    %3497 = vmatpush.bf16.msra.mxu0 0
    %3498 = vmatpush.bf16.msra.mxu0 0
    %3499 = vmatpush.bf16.msra.mxu0 0
    %3500 = vmatpush.bf16.msra.mxu0 0
    %3501 = vmatpush.bf16.msra.mxu0 0
    %3502 = vmatpush.bf16.msra.mxu0 %v3169
    %3503 = vmatmul.bf16.gmra.mxu0 %v3350
    %v3504 = vpop.f32.mrf.mxu0
    %v3505 = vadd.f32 %v3492, %v3504
    %v3506 = vpop.f32.mrf.mxu0
    %3507 = vdwg.mxu0
    %3508 = vmatpush.bf16.msra.mxu0 %v3051
    %3509 = vmatpush.bf16.msra.mxu0 %v3044
    %3510 = vmatpush.bf16.msra.mxu0 %v3037
    %3511 = vmatpush.bf16.msra.mxu0 %v3030
    %3512 = vmatpush.bf16.msra.mxu0 %v3023
    %3513 = vmatpush.bf16.msra.mxu0 %v3016
    %3514 = vmatpush.bf16.msra.mxu0 %v3009
    %3515 = vmatpush.bf16.msra.mxu0 %v3002
    %3516 = vmatmul.bf16.gmra.mxu0 %v2229
    %v3517 = vpop.f32.mrf.mxu0
    %v3518 = vadd.f32 %v2438, %v3517
    %v3519 = vpop.f32.mrf.mxu0
    %3520 = vdwg.mxu0
    %3521 = vmatpush.bf16.msra.mxu0 %v3107
    %3522 = vmatpush.bf16.msra.mxu0 %v3100
    %3523 = vmatpush.bf16.msra.mxu0 %v3093
    %3524 = vmatpush.bf16.msra.mxu0 %v3086
    %3525 = vmatpush.bf16.msra.mxu0 %v3079
    %3526 = vmatpush.bf16.msra.mxu0 %v3072
    %3527 = vmatpush.bf16.msra.mxu0 %v3065
    %3528 = vmatpush.bf16.msra.mxu0 %v3058
    %3529 = vmatmul.bf16.gmra.mxu0 %v2230
    %v3530 = vpop.f32.mrf.mxu0
    %v3531 = vadd.f32 %v3518, %v3530
    %v3532 = vpop.f32.mrf.mxu0
    %3533 = vdwg.mxu0
    %3534 = vmatpush.bf16.msra.mxu0 %v3163
    %3535 = vmatpush.bf16.msra.mxu0 %v3156
    %3536 = vmatpush.bf16.msra.mxu0 %v3149
    %3537 = vmatpush.bf16.msra.mxu0 %v3142
    %3538 = vmatpush.bf16.msra.mxu0 %v3135
    %3539 = vmatpush.bf16.msra.mxu0 %v3128
    %3540 = vmatpush.bf16.msra.mxu0 %v3121
    %3541 = vmatpush.bf16.msra.mxu0 %v3114
    %3542 = vmatmul.bf16.gmra.mxu0 %v2231
    %v3543 = vpop.f32.mrf.mxu0
    %v3544 = vadd.f32 %v3531, %v3543
    %v3545 = vpop.f32.mrf.mxu0
    %3546 = vdwg.mxu0
    %3547 = vmatpush.bf16.msra.mxu0 0
    %3548 = vmatpush.bf16.msra.mxu0 0
    %3549 = vmatpush.bf16.msra.mxu0 0
    %3550 = vmatpush.bf16.msra.mxu0 0
    %3551 = vmatpush.bf16.msra.mxu0 0
    %3552 = vmatpush.bf16.msra.mxu0 0
    %3553 = vmatpush.bf16.msra.mxu0 0
    %3554 = vmatpush.bf16.msra.mxu0 %v3170
    %3555 = vmatmul.bf16.gmra.mxu0 %v3350
    %v3556 = vpop.f32.mrf.mxu0
    %v3557 = vadd.f32 %v3544, %v3556
    %v3558 = vpop.f32.mrf.mxu0
    %3559 = vdwg.mxu0
    %3560 = vmatpush.bf16.msra.mxu0 %v3052
    %3561 = vmatpush.bf16.msra.mxu0 %v3045
    %3562 = vmatpush.bf16.msra.mxu0 %v3038
    %3563 = vmatpush.bf16.msra.mxu0 %v3031
    %3564 = vmatpush.bf16.msra.mxu0 %v3024
    %3565 = vmatpush.bf16.msra.mxu0 %v3017
    %3566 = vmatpush.bf16.msra.mxu0 %v3010
    %3567 = vmatpush.bf16.msra.mxu0 %v3003
    %3568 = vmatmul.bf16.gmra.mxu0 %v2229
    %v3569 = vpop.f32.mrf.mxu0
    %v3570 = vadd.f32 %v2439, %v3569
    %v3571 = vpop.f32.mrf.mxu0
    %3572 = vdwg.mxu0
    %3573 = vmatpush.bf16.msra.mxu0 %v3108
    %3574 = vmatpush.bf16.msra.mxu0 %v3101
    %3575 = vmatpush.bf16.msra.mxu0 %v3094
    %3576 = vmatpush.bf16.msra.mxu0 %v3087
    %3577 = vmatpush.bf16.msra.mxu0 %v3080
    %3578 = vmatpush.bf16.msra.mxu0 %v3073
    %3579 = vmatpush.bf16.msra.mxu0 %v3066
    %3580 = vmatpush.bf16.msra.mxu0 %v3059
    %3581 = vmatmul.bf16.gmra.mxu0 %v2230
    %v3582 = vpop.f32.mrf.mxu0
    %v3583 = vadd.f32 %v3570, %v3582
    %v3584 = vpop.f32.mrf.mxu0
    %3585 = vdwg.mxu0
    %3586 = vmatpush.bf16.msra.mxu0 %v3164
    %3587 = vmatpush.bf16.msra.mxu0 %v3157
    %3588 = vmatpush.bf16.msra.mxu0 %v3150
    %3589 = vmatpush.bf16.msra.mxu0 %v3143
    %3590 = vmatpush.bf16.msra.mxu0 %v3136
    %3591 = vmatpush.bf16.msra.mxu0 %v3129
    %3592 = vmatpush.bf16.msra.mxu0 %v3122
    %3593 = vmatpush.bf16.msra.mxu0 %v3115
    %3594 = vmatmul.bf16.gmra.mxu0 %v2231
    %v3595 = vpop.f32.mrf.mxu0
    %v3596 = vadd.f32 %v3583, %v3595
    %v3597 = vpop.f32.mrf.mxu0
    %3598 = vdwg.mxu0
    %3599 = vmatpush.bf16.msra.mxu0 0
    %3600 = vmatpush.bf16.msra.mxu0 0
    %3601 = vmatpush.bf16.msra.mxu0 0
    %3602 = vmatpush.bf16.msra.mxu0 0
    %3603 = vmatpush.bf16.msra.mxu0 0
    %3604 = vmatpush.bf16.msra.mxu0 0
    %3605 = vmatpush.bf16.msra.mxu0 0
    %3606 = vmatpush.bf16.msra.mxu0 %v3171
    %3607 = vmatmul.bf16.gmra.mxu0 %v3350
    %v3608 = vpop.f32.mrf.mxu0
    %v3609 = vadd.f32 %v3596, %v3608
    %v3610 = vpop.f32.mrf.mxu0
    %3611 = vdwg.mxu0
    %3612 = vmatpush.bf16.msra.mxu0 %v3053
    %3613 = vmatpush.bf16.msra.mxu0 %v3046
    %3614 = vmatpush.bf16.msra.mxu0 %v3039
    %3615 = vmatpush.bf16.msra.mxu0 %v3032
    %3616 = vmatpush.bf16.msra.mxu0 %v3025
    %3617 = vmatpush.bf16.msra.mxu0 %v3018
    %3618 = vmatpush.bf16.msra.mxu0 %v3011
    %3619 = vmatpush.bf16.msra.mxu0 %v3004
    %3620 = vmatmul.bf16.gmra.mxu0 %v2229
    %v3621 = vpop.f32.mrf.mxu0
    %v3622 = vadd.f32 %v2440, %v3621
    %v3623 = vpop.f32.mrf.mxu0
    %3624 = vdwg.mxu0
    %3625 = vmatpush.bf16.msra.mxu0 %v3109
    %3626 = vmatpush.bf16.msra.mxu0 %v3102
    %3627 = vmatpush.bf16.msra.mxu0 %v3095
    %3628 = vmatpush.bf16.msra.mxu0 %v3088
    %3629 = vmatpush.bf16.msra.mxu0 %v3081
    %3630 = vmatpush.bf16.msra.mxu0 %v3074
    %3631 = vmatpush.bf16.msra.mxu0 %v3067
    %3632 = vmatpush.bf16.msra.mxu0 %v3060
    %3633 = vmatmul.bf16.gmra.mxu0 %v2230
    %v3634 = vpop.f32.mrf.mxu0
    %v3635 = vadd.f32 %v3622, %v3634
    %v3636 = vpop.f32.mrf.mxu0
    %3637 = vdwg.mxu0
    %3638 = vmatpush.bf16.msra.mxu0 %v3165
    %3639 = vmatpush.bf16.msra.mxu0 %v3158
    %3640 = vmatpush.bf16.msra.mxu0 %v3151
    %3641 = vmatpush.bf16.msra.mxu0 %v3144
    %3642 = vmatpush.bf16.msra.mxu0 %v3137
    %3643 = vmatpush.bf16.msra.mxu0 %v3130
    %3644 = vmatpush.bf16.msra.mxu0 %v3123
    %3645 = vmatpush.bf16.msra.mxu0 %v3116
    %3646 = vmatmul.bf16.gmra.mxu0 %v2231
    %v3647 = vpop.f32.mrf.mxu0
    %v3648 = vadd.f32 %v3635, %v3647
    %v3649 = vpop.f32.mrf.mxu0
    %3650 = vdwg.mxu0
    %3651 = vmatpush.bf16.msra.mxu0 0
    %3652 = vmatpush.bf16.msra.mxu0 0
    %3653 = vmatpush.bf16.msra.mxu0 0
    %3654 = vmatpush.bf16.msra.mxu0 0
    %3655 = vmatpush.bf16.msra.mxu0 0
    %3656 = vmatpush.bf16.msra.mxu0 0
    %3657 = vmatpush.bf16.msra.mxu0 0
    %3658 = vmatpush.bf16.msra.mxu0 %v3172
    %3659 = vmatmul.bf16.gmra.mxu0 %v3350
    %v3660 = vpop.f32.mrf.mxu0
    %v3661 = vadd.f32 %v3648, %v3660
    %v3662 = vpop.f32.mrf.mxu0
    %3663 = vdwg.mxu0
    %3664 = vmatpush.bf16.msra.mxu0 %v3054
    %3665 = vmatpush.bf16.msra.mxu0 %v3047
    %3666 = vmatpush.bf16.msra.mxu0 %v3040
    %3667 = vmatpush.bf16.msra.mxu0 %v3033
    %3668 = vmatpush.bf16.msra.mxu0 %v3026
    %3669 = vmatpush.bf16.msra.mxu0 %v3019
    %3670 = vmatpush.bf16.msra.mxu0 %v3012
    %3671 = vmatpush.bf16.msra.mxu0 %v3005
    %3672 = vmatmul.bf16.gmra.mxu0 %v2229
    %v3673 = vpop.f32.mrf.mxu0
    %v3674 = vadd.f32 %v2441, %v3673
    %v3675 = vpop.f32.mrf.mxu0
    %3676 = vdwg.mxu0
    %3677 = vmatpush.bf16.msra.mxu0 %v3110
    %3678 = vmatpush.bf16.msra.mxu0 %v3103
    %3679 = vmatpush.bf16.msra.mxu0 %v3096
    %3680 = vmatpush.bf16.msra.mxu0 %v3089
    %3681 = vmatpush.bf16.msra.mxu0 %v3082
    %3682 = vmatpush.bf16.msra.mxu0 %v3075
    %3683 = vmatpush.bf16.msra.mxu0 %v3068
    %3684 = vmatpush.bf16.msra.mxu0 %v3061
    %3685 = vmatmul.bf16.gmra.mxu0 %v2230
    %v3686 = vpop.f32.mrf.mxu0
    %v3687 = vadd.f32 %v3674, %v3686
    %v3688 = vpop.f32.mrf.mxu0
    %3689 = vdwg.mxu0
    %3690 = vmatpush.bf16.msra.mxu0 %v3166
    %3691 = vmatpush.bf16.msra.mxu0 %v3159
    %3692 = vmatpush.bf16.msra.mxu0 %v3152
    %3693 = vmatpush.bf16.msra.mxu0 %v3145
    %3694 = vmatpush.bf16.msra.mxu0 %v3138
    %3695 = vmatpush.bf16.msra.mxu0 %v3131
    %3696 = vmatpush.bf16.msra.mxu0 %v3124
    %3697 = vmatpush.bf16.msra.mxu0 %v3117
    %3698 = vmatmul.bf16.gmra.mxu0 %v2231
    %v3699 = vpop.f32.mrf.mxu0
    %v3700 = vadd.f32 %v3687, %v3699
    %v3701 = vpop.f32.mrf.mxu0
    %3702 = vdwg.mxu0
    %3703 = vmatpush.bf16.msra.mxu0 0
    %3704 = vmatpush.bf16.msra.mxu0 0
    %3705 = vmatpush.bf16.msra.mxu0 0
    %3706 = vmatpush.bf16.msra.mxu0 0
    %3707 = vmatpush.bf16.msra.mxu0 0
    %3708 = vmatpush.bf16.msra.mxu0 0
    %3709 = vmatpush.bf16.msra.mxu0 0
    %3710 = vmatpush.bf16.msra.mxu0 %v3173
    %3711 = vmatmul.bf16.gmra.mxu0 %v3350
    %v3712 = vpop.f32.mrf.mxu0
    %v3713 = vadd.f32 %v3700, %v3712
    %v3714 = vpop.f32.mrf.mxu0
    %3715 = vdwg.mxu0
    %v3716 = vsub.f32 0.0, %v3401
    %v3717 = vsub.f32 0.0, %v3453
    %v3718 = vsub.f32 0.0, %v3505
    %v3719 = vsub.f32 0.0, %v3557
    %v3720 = vsub.f32 0.0, %v3609
    %v3721 = vsub.f32 0.0, %v3661
    %v3722 = vsub.f32 0.0, %v3713
    %v3723 = vmul.f32 %v3716, 1.442695
    %v3724 = vpow.pop %v3723
    %v3725 = vmul.f32 %v3717, 1.442695
    %v3726 = vpow.pop %v3725
    %v3727 = vmul.f32 %v3718, 1.442695
    %v3728 = vpow.pop %v3727
    %v3729 = vmul.f32 %v3719, 1.442695
    %v3730 = vpow.pop %v3729
    %v3731 = vmul.f32 %v3720, 1.442695
    %v3732 = vpow.pop %v3731
    %v3733 = vmul.f32 %v3721, 1.442695
    %v3734 = vpow.pop %v3733
    %v3735 = vmul.f32 %v3722, 1.442695
    %v3736 = vpow.pop %v3735
    %v3737 = vadd.f32 %v3724, 1.0
    %v3738 = vadd.f32 %v3726, 1.0
    %v3739 = vadd.f32 %v3728, 1.0
    %v3740 = vadd.f32 %v3730, 1.0
    %v3741 = vadd.f32 %v3732, 1.0
    %v3742 = vadd.f32 %v3734, 1.0
    %v3743 = vadd.f32 %v3736, 1.0
    %v3744 = vrcp.pop %v3737
    %v3745 = vrcp.pop %v3738
    %v3746 = vrcp.pop %v3739
    %v3747 = vrcp.pop %v3740
    %v3748 = vrcp.pop %v3741
    %v3749 = vrcp.pop %v3742
    %v3750 = vrcp.pop %v3743
    %3751 = vst [vmem:[#allocation2] sm:$0xff] %v3744
    %3752 = vst [vmem:[#allocation2 + $0x8] sm:$0xff] %v3745
    %3753 = vst [vmem:[#allocation2 + $0x10] sm:$0xff] %v3746
    %3754 = vst [vmem:[#allocation2 + $0x18] sm:$0xff] %v3747
    %3755 = vst [vmem:[#allocation2 + $0x20] sm:$0xff] %v3748
    %3756 = vst [vmem:[#allocation2 + $0x28] sm:$0xff] %v3749
    %3757 = vst.msk [vmem:[#allocation2 + $0x30] sm:$0xff] %vm1443, %v3750
    // Predicated region
    $region50: #{tpu_custom_call.1} parent=1 // pred_check
      _
    $region51: #{tpu_custom_call.1} parent=1 // pred_check_branch
      %3759 = sbr.rel (0) target = $region53
    $region52: #{tpu_custom_call.1} parent=1 // pred_region
      %3761 = vsyncadd [#allocation3], 0
      %s3763 = sshll.u32 [#allocation2], 4
      %s3764 = int_to_ptr.vmem [resolvable:$true] %s3763
      %s3765 = sshll.u32 %s12, 4
      %s3766 = int_to_ptr.hbm [resolvable:$true] %s3765
      %3768 = dma.vmem_to_hbm [thread:$0]  %s3764, 896, %s3766, [#allocation3]
    $region53: #{tpu_custom_call.1} parent=1 // pred_fallthru
      _
    // Predicated region
    $region54: #{tpu_custom_call.1} parent=1 // pred_check
      _
    $region55: #{tpu_custom_call.1} parent=1 // pred_check_branch
      %3770 = sbr.rel (0) target = $region57
    $region56: #{tpu_custom_call.1} parent=1 // pred_region
      %3772 = vsyncadd [#allocation5], 0
      %s3774 = sshll.u32 [#allocation4], 4
      %s3775 = int_to_ptr.vmem [resolvable:$true] %s3774
      %s3776 = sshll.u32 %s13, 4
      %s3777 = int_to_ptr.hbm [resolvable:$true] %s3776
      %3779 = dma.vmem_to_hbm [thread:$0]  %s3775, 128, %s3777, [#allocation5]
    $region57: #{tpu_custom_call.1} parent=1 // pred_fallthru
      _
    // Predicated region
    $region58: #{tpu_custom_call.1} parent=1 // pred_check
      _
    $region59: #{tpu_custom_call.1} parent=1 // pred_check_branch
      %3781 = sbr.rel (0) target = $region61
    $region60: #{tpu_custom_call.1} parent=1 // pred_region
      %3783 = dma.done [#allocation3], 896
    $region61: #{tpu_custom_call.1} parent=1 // pred_fallthru
      _
    // Predicated region
    $region62: #{tpu_custom_call.1} parent=1 // pred_check
      _
    $region63: #{tpu_custom_call.1} parent=1 // pred_check_branch
      %3785 = sbr.rel (0) target = $region65
    $region64: #{tpu_custom_call.1} parent=1 // pred_region
      %3787 = dma.done [#allocation5], 128
    $region65: #{tpu_custom_call.1} parent=1 // pred_fallthru
      _
    %3788 = vsyncpa [#allocation3], 1
    %3789 = vsyncpa [#allocation5], 1

</llo_original>
